<compile_context>
chip_gen: v7x
topology: tpu7x:2x2x1
jax: 0.10.0
libtpu: 0.0.40
codegen_flags: <defaults>
</compile_context>

<pallas_src>
import functools

import jax
import jax.numpy as jnp
from jax.experimental import pallas as pl
from jax.experimental.pallas import tpu as pltpu


def _double_conv_kernel(x_ref, w1_ref, s1_ref, b1_ref, w2_ref, s2_ref, b2_ref,
                        out_ref, mid_ref, *, H, W, TH):
    # x_ref  : (1, TH+4, W+2, Cpin)  bf16 input window (2-row / 1-col halo)
    # w1_ref : (9*Cpin, Cpmid)       bf16 conv1 weights, (ky,kx,cin)-major rows
    # s1,b1  : (1, Cpmid)            f32 folded BN1 scale / bias
    # w2_ref : (9*Cpmid, Cpout)      bf16 conv2 weights
    # s2,b2  : (1, Cpout)            f32 folded BN2 scale / bias
    # out_ref: (1, TH, W, Cpout)     f32 output rows for this tile
    # mid_ref: (TH+2, W+2, Cpmid)    bf16 scratch: conv1 activation + W halo
    Cpin = x_ref.shape[-1]
    Cpmid = mid_ref.shape[-1]
    Cpout = out_ref.shape[-1]
    TH2 = TH + 2
    t = pl.program_id(1)

    xw = x_ref[0]                      # (TH+4, W+2, Cpin)

    # ---- conv1: single im2col matmul, K = 9*Cpin (bf16 x bf16 -> f32) ----
    taps1 = [xw[ky:ky + TH2, kx:kx + W, :]
             for ky in range(3) for kx in range(3)]
    patch1 = jnp.concatenate(taps1, axis=-1).reshape(TH2 * W, 9 * Cpin)
    acc1 = jnp.dot(patch1, w1_ref[...], preferred_element_type=jnp.float32)

    # ---- BN1 (folded) + ReLU ----
    y1 = jnp.maximum(acc1 * s1_ref[...] + b1_ref[...], 0.0)
    y1 = y1.reshape(TH2, W, Cpmid)

    # Zero the conv1 halo rows that fall outside the image: they are conv2's
    # zero padding along H (must NOT be conv1 evaluated on padded input).
    row = jax.lax.broadcasted_iota(jnp.int32, (TH2, 1, 1), 0)
    grow = t * TH - 1 + row            # global image row of each slab row
    y1 = jnp.where((grow >= 0) & (grow < H), y1, 0.0)

    # Store interior into the padded mid scratch; only the two W-halo columns
    # are (re)zeroed each step (the interior is always fully overwritten).
    mid_ref[:, 1:W + 1, :] = y1.astype(mid_ref.dtype)
    zcol = jnp.zeros((TH2, 1, Cpmid), mid_ref.dtype)
    mid_ref[:, 0:1, :] = zcol
    mid_ref[:, W + 1:W + 2, :] = zcol

    # ---- conv2: single im2col matmul, K = 9*Cpmid ----
    mid = mid_ref[...]
    taps2 = [mid[ky:ky + TH, kx:kx + W, :]
             for ky in range(3) for kx in range(3)]
    patch2 = jnp.concatenate(taps2, axis=-1).reshape(TH * W, 9 * Cpmid)
    acc2 = jnp.dot(patch2, w2_ref[...], preferred_element_type=jnp.float32)

    # ---- BN2 (folded) + ReLU ----
    y2 = jnp.maximum(acc2 * s2_ref[...] + b2_ref[...], 0.0)
    out_ref[0] = y2.reshape(TH, W, Cpout).astype(out_ref.dtype)


def _round_up(x, m):
    return (x + m - 1) // m * m


def _fold_bn(gamma, beta, mean, var, eps, cpad):
    scale = gamma / jnp.sqrt(var + eps)
    bias = beta - mean * scale
    c = gamma.shape[0]
    scale = jnp.pad(scale, (0, cpad - c)).reshape(1, cpad).astype(jnp.float32)
    bias = jnp.pad(bias, (0, cpad - c)).reshape(1, cpad).astype(jnp.float32)
    return scale, bias


def _prep_conv_w(w_oihw, cpin, cpout):
    cout, cin, kh, kw = w_oihw.shape
    w = jnp.transpose(w_oihw, (2, 3, 1, 0))               # (kh, kw, Cin, Cout)
    w = jnp.pad(w, ((0, 0), (0, 0), (0, cpin - cin), (0, cpout - cout)))
    return w.reshape(kh * kw * cpin, cpout).astype(jnp.bfloat16)


@functools.partial(jax.jit, static_argnames=("eps", "tile_h"))
def double_conv(x_nchw, w1, g1, be1, m1, v1, w2, g2, be2, m2, v2, *,
                eps=1e-5, tile_h=8):
    """DoubleConv forward (inference-mode BN). x_nchw: (N, Cin, H, W) f32."""
    N, Cin, H, W = x_nchw.shape
    Cmid = w1.shape[0]
    Cout = w2.shape[0]
    Cpin, Cpmid, Cpout = (_round_up(c, 128) for c in (Cin, Cmid, Cout))

    TH = tile_h if (H % tile_h == 0) else H     # row tile (fallback: full H)
    n_tiles = H // TH

    # NCHW -> NHWC, zero-pad channels to a lane-dense multiple of 128, pad H by
    # 2 / W by 1 (double-conv halo), cast to bf16 and gather the overlapping
    # (TH+4)-row windows; XLA fuses this into a single pass producing x_win.
    x = jnp.transpose(x_nchw, (0, 2, 3, 1))
    x = jnp.pad(x, ((0, 0), (2, 2), (1, 1), (0, Cpin - Cin))).astype(jnp.bfloat16)
    x_win = jnp.stack([x[:, t * TH:t * TH + TH + 4] for t in range(n_tiles)],
                      axis=1)
    x_win = x_win.reshape(N * n_tiles, TH + 4, W + 2, Cpin)

    w1k = _prep_conv_w(w1, Cpin, Cpmid)
    w2k = _prep_conv_w(w2, Cpmid, Cpout)
    s1, b1f = _fold_bn(g1, be1, m1, v1, eps, Cpmid)
    s2, b2f = _fold_bn(g2, be2, m2, v2, eps, Cpout)

    out = pl.pallas_call(
        functools.partial(_double_conv_kernel, H=H, W=W, TH=TH),
        out_shape=jax.ShapeDtypeStruct((N, H, W, Cpout), jnp.float32),
        grid_spec=pltpu.PrefetchScalarGridSpec(
            num_scalar_prefetch=0,
            grid=(N, n_tiles),
            in_specs=[
                pl.BlockSpec((1, TH + 4, W + 2, Cpin),
                             lambda b, t: (b * n_tiles + t, 0, 0, 0)),
                # Weights / BN params: constant index_map -> DMA'd once, resident.
                pl.BlockSpec((9 * Cpin, Cpmid), lambda b, t: (0, 0)),
                pl.BlockSpec((1, Cpmid), lambda b, t: (0, 0)),
                pl.BlockSpec((1, Cpmid), lambda b, t: (0, 0)),
                pl.BlockSpec((9 * Cpmid, Cpout), lambda b, t: (0, 0)),
                pl.BlockSpec((1, Cpout), lambda b, t: (0, 0)),
                pl.BlockSpec((1, Cpout), lambda b, t: (0, 0)),
            ],
            out_specs=pl.BlockSpec((1, TH, W, Cpout),
                                   lambda b, t: (b, t, 0, 0)),
            scratch_shapes=[pltpu.VMEM((TH + 2, W + 2, Cpmid), jnp.bfloat16)],
        ),
        compiler_params=pltpu.CompilerParams(
            dimension_semantics=("parallel", "parallel"),
            vmem_limit_bytes=48 * 1024 * 1024,
        ),
    )(x_win, w1k, s1, b1f, w2k, s2, b2f)

    # Drop channel padding, NHWC -> NCHW (PyTorch convention).
    return jnp.transpose(out[..., :Cout], (0, 3, 1, 2))


def _reference(x, w1, g1, be1, m1, v1, w2, g2, be2, m2, v2, eps=1e-5):
    """Pure-JAX f32 reference matching the PyTorch module (inference BN)."""
    def conv(z, w):
        return jax.lax.conv_general_dilated(
            z, w, window_strides=(1, 1), padding=((1, 1), (1, 1)),
            dimension_numbers=("NCHW", "OIHW", "NCHW"),
            precision=jax.lax.Precision.HIGHEST)

    def bn_relu(z, g, b, m, v):
        s = (g / jnp.sqrt(v + eps))[None, :, None, None]
        return jnp.maximum((z - m[None, :, None, None]) * s
                           + b[None, :, None, None], 0.0)

    y = bn_relu(conv(x, w1), g1, be1, m1, v1)
    return bn_relu(conv(y, w2), g2, be2, m2, v2)


if __name__ == "__main__":
    N, Cin, H, W = 2, 4, 16, 16
    Cmid = Cout = 8  # mid_channels defaults to out_channels

    key = jax.random.PRNGKey(0)
    ks = jax.random.split(key, 11)

    x = jax.random.normal(ks[0], (N, Cin, H, W), jnp.float32)
    # Conv weights in PyTorch OIHW layout, bias=False.
    w1 = jax.random.normal(ks[1], (Cmid, Cin, 3, 3), jnp.float32) * 0.1
    w2 = jax.random.normal(ks[2], (Cout, Cmid, 3, 3), jnp.float32) * 0.1

    # BatchNorm parameters (inference-mode running stats).
    g1 = 1.0 + 0.1 * jax.random.normal(ks[3], (Cmid,), jnp.float32)
    be1 = 0.1 * jax.random.normal(ks[4], (Cmid,), jnp.float32)
    m1 = 0.1 * jax.random.normal(ks[5], (Cmid,), jnp.float32)
    v1 = 1.0 + 0.1 * jnp.abs(jax.random.normal(ks[6], (Cmid,), jnp.float32))

    g2 = 1.0 + 0.1 * jax.random.normal(ks[7], (Cout,), jnp.float32)
    be2 = 0.1 * jax.random.normal(ks[8], (Cout,), jnp.float32)
    m2 = 0.1 * jax.random.normal(ks[9], (Cout,), jnp.float32)
    v2 = 1.0 + 0.1 * jnp.abs(jax.random.normal(ks[10], (Cout,), jnp.float32))

    y = double_conv(x, w1, g1, be1, m1, v1, w2, g2, be2, m2, v2)
    jax.block_until_ready(y)

    y_ref = _reference(x, w1, g1, be1, m1, v1, w2, g2, be2, m2, v2)
    err = float(jnp.max(jnp.abs(y - y_ref)))

    assert y.shape == (N, Cout, H, W), y.shape
    assert bool(jnp.all(y >= 0.0))                       # ReLU output
    assert err < 1e-1, f"max |kernel - f32 ref| = {err}"  # bf16-MXU tolerance
    print("KERNEL_OK")
</pallas_src>

<mosaic_0001>
module attributes {stable_mosaic.version = 11 : i64} {
  func.func @_double_conv_kernel(%arg0: i32, %arg1: i32, %arg2: memref<1x12x18x128xbf16, #tpu.memory_space<vmem>>, %arg3: memref<1152x128xbf16, #tpu.memory_space<vmem>>, %arg4: memref<1x128xf32, #tpu.memory_space<vmem>>, %arg5: memref<1x128xf32, #tpu.memory_space<vmem>>, %arg6: memref<1152x128xbf16, #tpu.memory_space<vmem>>, %arg7: memref<1x128xf32, #tpu.memory_space<vmem>>, %arg8: memref<1x128xf32, #tpu.memory_space<vmem>>, %arg9: memref<1x8x16x128xf32, #tpu.memory_space<vmem>>, %arg10: memref<10x18x128xbf16, #tpu.memory_space<vmem>>) attributes {dimension_semantics = [#tpu.dimension_semantics<parallel>, #tpu.dimension_semantics<parallel>], iteration_bounds = array<i64: 2, 2>, scalar_prefetch = 0 : i64, scratch_operands = 1 : i64, tpu.core_type = #tpu.core_type<tc>, window_params = [{transform_indices = @transform_0, window_bounds = array<i64: 1, 12, 18, 128>}, {pipeline_mode = #tpu.pipeline_mode<synchronous>, transform_indices = @transform_1, window_bounds = array<i64: 1152, 128>}, {pipeline_mode = #tpu.pipeline_mode<synchronous>, transform_indices = @transform_2, window_bounds = array<i64: 1, 128>}, {pipeline_mode = #tpu.pipeline_mode<synchronous>, transform_indices = @transform_3, window_bounds = array<i64: 1, 128>}, {pipeline_mode = #tpu.pipeline_mode<synchronous>, transform_indices = @transform_4, window_bounds = array<i64: 1152, 128>}, {pipeline_mode = #tpu.pipeline_mode<synchronous>, transform_indices = @transform_5, window_bounds = array<i64: 1, 128>}, {pipeline_mode = #tpu.pipeline_mode<synchronous>, transform_indices = @transform_6, window_bounds = array<i64: 1, 128>}, {transform_indices = @transform_7, window_bounds = array<i64: 1, 8, 16, 128>}]} {
    %c0 = arith.constant 0 : index
    %c0_0 = arith.constant 0 : index
    %c0_1 = arith.constant 0 : index
    %c0_2 = arith.constant 0 : index
    %0 = vector.load %arg2[%c0, %c0_0, %c0_1, %c0_2] : memref<1x12x18x128xbf16, #tpu.memory_space<vmem>>, vector<1x12x18x128xbf16>
    %1 = vector.shape_cast %0 : vector<1x12x18x128xbf16> to vector<12x18x128xbf16>
    %2 = vector.extract_strided_slice %1 {offsets = [0, 0, 0], sizes = [10, 16, 128], strides = [1, 1, 1]} : vector<12x18x128xbf16> to vector<10x16x128xbf16>
    %3 = vector.extract_strided_slice %1 {offsets = [0, 1, 0], sizes = [10, 16, 128], strides = [1, 1, 1]} : vector<12x18x128xbf16> to vector<10x16x128xbf16>
    %4 = vector.extract_strided_slice %1 {offsets = [0, 2, 0], sizes = [10, 16, 128], strides = [1, 1, 1]} : vector<12x18x128xbf16> to vector<10x16x128xbf16>
    %5 = vector.extract_strided_slice %1 {offsets = [1, 0, 0], sizes = [10, 16, 128], strides = [1, 1, 1]} : vector<12x18x128xbf16> to vector<10x16x128xbf16>
    %6 = vector.extract_strided_slice %1 {offsets = [1, 1, 0], sizes = [10, 16, 128], strides = [1, 1, 1]} : vector<12x18x128xbf16> to vector<10x16x128xbf16>
    %7 = vector.extract_strided_slice %1 {offsets = [1, 2, 0], sizes = [10, 16, 128], strides = [1, 1, 1]} : vector<12x18x128xbf16> to vector<10x16x128xbf16>
    %8 = vector.extract_strided_slice %1 {offsets = [2, 0, 0], sizes = [10, 16, 128], strides = [1, 1, 1]} : vector<12x18x128xbf16> to vector<10x16x128xbf16>
    %9 = vector.extract_strided_slice %1 {offsets = [2, 1, 0], sizes = [10, 16, 128], strides = [1, 1, 1]} : vector<12x18x128xbf16> to vector<10x16x128xbf16>
    %10 = vector.extract_strided_slice %1 {offsets = [2, 2, 0], sizes = [10, 16, 128], strides = [1, 1, 1]} : vector<12x18x128xbf16> to vector<10x16x128xbf16>
    %11 = tpu.concatenate %2, %3, %4, %5, %6, %7, %8, %9, %10 in 2 : vector<10x16x128xbf16>, vector<10x16x128xbf16>, vector<10x16x128xbf16>, vector<10x16x128xbf16>, vector<10x16x128xbf16>, vector<10x16x128xbf16>, vector<10x16x128xbf16>, vector<10x16x128xbf16>, vector<10x16x128xbf16> -> vector<10x16x1152xbf16>
    %12 = vector.shape_cast %11 : vector<10x16x1152xbf16> to vector<160x1152xbf16>
    %c0_3 = arith.constant 0 : index
    %c0_4 = arith.constant 0 : index
    %13 = vector.load %arg3[%c0_3, %c0_4] : memref<1152x128xbf16, #tpu.memory_space<vmem>>, vector<1152x128xbf16>
    %cst = arith.constant dense<0.000000e+00> : vector<160x128xf32>
    %14 = tpu.matmul %12, %13, %cst {dimension_numbers = #tpu.dot_dimension_numbers<[1], [0], [0], [1], [0, 0, 1, 1], [], []>} : vector<160x1152xbf16>, vector<1152x128xbf16>, vector<160x128xf32> -> vector<160x128xf32>
    %c0_5 = arith.constant 0 : index
    %c0_6 = arith.constant 0 : index
    %15 = vector.load %arg4[%c0_5, %c0_6] : memref<1x128xf32, #tpu.memory_space<vmem>>, vector<1x128xf32>
    %16 = vector.broadcast %15 : vector<1x128xf32> to vector<160x128xf32>
    %17 = arith.mulf %14, %16 : vector<160x128xf32>
    %c0_7 = arith.constant 0 : index
    %c0_8 = arith.constant 0 : index
    %18 = vector.load %arg5[%c0_7, %c0_8] : memref<1x128xf32, #tpu.memory_space<vmem>>, vector<1x128xf32>
    %19 = vector.broadcast %18 : vector<1x128xf32> to vector<160x128xf32>
    %20 = arith.addf %17, %19 : vector<160x128xf32>
    %cst_9 = arith.constant 0.000000e+00 : f32
    %21 = vector.broadcast %cst_9 : f32 to vector<160x128xf32>
    %22 = arith.maximumf %20, %21 : vector<160x128xf32>
    %23 = vector.shape_cast %22 : vector<160x128xf32> to vector<10x16x128xf32>
    %24 = tpu.iota {dimensions = array<i32: 0>} : vector<10x1x1xi32>
    %c8_i32 = arith.constant 8 : i32
    %25 = arith.muli %arg1, %c8_i32 : i32
    %c1_i32 = arith.constant 1 : i32
    %26 = arith.subi %25, %c1_i32 : i32
    %27 = vector.broadcast %26 : i32 to vector<10x1x1xi32>
    %28 = arith.addi %27, %24 : vector<10x1x1xi32>
    %c0_i32 = arith.constant 0 : i32
    %29 = vector.broadcast %c0_i32 : i32 to vector<10x1x1xi32>
    %30 = arith.cmpi sge, %28, %29 : vector<10x1x1xi32>
    %c16_i32 = arith.constant 16 : i32
    %31 = vector.broadcast %c16_i32 : i32 to vector<10x1x1xi32>
    %32 = arith.cmpi slt, %28, %31 : vector<10x1x1xi32>
    %33 = arith.andi %30, %32 : vector<10x1x1xi1>
    %cst_10 = arith.constant 0.000000e+00 : f32
    %34 = vector.shape_cast %33 : vector<10x1x1xi1> to vector<10x1x1xi1>
    %35 = vector.broadcast %34 : vector<10x1x1xi1> to vector<10x16x128xi1>
    %36 = vector.broadcast %cst_10 : f32 to vector<10x16x128xf32>
    %37 = arith.select %35, %23, %36 : vector<10x16x128xi1>, vector<10x16x128xf32>
    %38 = arith.truncf %37 : vector<10x16x128xf32> to vector<10x16x128xbf16>
    %c0_11 = arith.constant 0 : index
    %c1 = arith.constant 1 : index
    %c0_12 = arith.constant 0 : index
    %39 = vector.load %arg10[%c0_11, %c1, %c0_12] : memref<10x18x128xbf16, #tpu.memory_space<vmem>>, vector<10x16x128xbf16>
    tpu.vector_store %arg10[%c0_11, %c1, %c0_12], %38 {strides = array<i32>} : memref<10x18x128xbf16, #tpu.memory_space<vmem>>, vector<10x16x128xbf16>,
    %cst_13 = arith.constant 0.000000e+00 : bf16
    %40 = vector.broadcast %cst_13 : bf16 to vector<10x1x128xbf16>
    %c0_14 = arith.constant 0 : index
    %c0_15 = arith.constant 0 : index
    %c0_16 = arith.constant 0 : index
    %41 = vector.load %arg10[%c0_14, %c0_15, %c0_16] : memref<10x18x128xbf16, #tpu.memory_space<vmem>>, vector<10x1x128xbf16>
    tpu.vector_store %arg10[%c0_14, %c0_15, %c0_16], %40 {strides = array<i32>} : memref<10x18x128xbf16, #tpu.memory_space<vmem>>, vector<10x1x128xbf16>,
    %c0_17 = arith.constant 0 : index
    %c17 = arith.constant 17 : index
    %c0_18 = arith.constant 0 : index
    %42 = vector.load %arg10[%c0_17, %c17, %c0_18] : memref<10x18x128xbf16, #tpu.memory_space<vmem>>, vector<10x1x128xbf16>
    tpu.vector_store %arg10[%c0_17, %c17, %c0_18], %40 {strides = array<i32>} : memref<10x18x128xbf16, #tpu.memory_space<vmem>>, vector<10x1x128xbf16>,
    %c0_19 = arith.constant 0 : index
    %c0_20 = arith.constant 0 : index
    %c0_21 = arith.constant 0 : index
    %43 = vector.load %arg10[%c0_19, %c0_20, %c0_21] : memref<10x18x128xbf16, #tpu.memory_space<vmem>>, vector<10x18x128xbf16>
    %44 = vector.extract_strided_slice %43 {offsets = [0, 0, 0], sizes = [8, 16, 128], strides = [1, 1, 1]} : vector<10x18x128xbf16> to vector<8x16x128xbf16>
    %45 = vector.extract_strided_slice %43 {offsets = [0, 1, 0], sizes = [8, 16, 128], strides = [1, 1, 1]} : vector<10x18x128xbf16> to vector<8x16x128xbf16>
    %46 = vector.extract_strided_slice %43 {offsets = [0, 2, 0], sizes = [8, 16, 128], strides = [1, 1, 1]} : vector<10x18x128xbf16> to vector<8x16x128xbf16>
    %47 = vector.extract_strided_slice %43 {offsets = [1, 0, 0], sizes = [8, 16, 128], strides = [1, 1, 1]} : vector<10x18x128xbf16> to vector<8x16x128xbf16>
    %48 = vector.extract_strided_slice %43 {offsets = [1, 1, 0], sizes = [8, 16, 128], strides = [1, 1, 1]} : vector<10x18x128xbf16> to vector<8x16x128xbf16>
    %49 = vector.extract_strided_slice %43 {offsets = [1, 2, 0], sizes = [8, 16, 128], strides = [1, 1, 1]} : vector<10x18x128xbf16> to vector<8x16x128xbf16>
    %50 = vector.extract_strided_slice %43 {offsets = [2, 0, 0], sizes = [8, 16, 128], strides = [1, 1, 1]} : vector<10x18x128xbf16> to vector<8x16x128xbf16>
    %51 = vector.extract_strided_slice %43 {offsets = [2, 1, 0], sizes = [8, 16, 128], strides = [1, 1, 1]} : vector<10x18x128xbf16> to vector<8x16x128xbf16>
    %52 = vector.extract_strided_slice %43 {offsets = [2, 2, 0], sizes = [8, 16, 128], strides = [1, 1, 1]} : vector<10x18x128xbf16> to vector<8x16x128xbf16>
    %53 = tpu.concatenate %44, %45, %46, %47, %48, %49, %50, %51, %52 in 2 : vector<8x16x128xbf16>, vector<8x16x128xbf16>, vector<8x16x128xbf16>, vector<8x16x128xbf16>, vector<8x16x128xbf16>, vector<8x16x128xbf16>, vector<8x16x128xbf16>, vector<8x16x128xbf16>, vector<8x16x128xbf16> -> vector<8x16x1152xbf16>
    %54 = vector.shape_cast %53 : vector<8x16x1152xbf16> to vector<128x1152xbf16>
    %c0_22 = arith.constant 0 : index
    %c0_23 = arith.constant 0 : index
    %55 = vector.load %arg6[%c0_22, %c0_23] : memref<1152x128xbf16, #tpu.memory_space<vmem>>, vector<1152x128xbf16>
    %cst_24 = arith.constant dense<0.000000e+00> : vector<128x128xf32>
    %56 = tpu.matmul %54, %55, %cst_24 {dimension_numbers = #tpu.dot_dimension_numbers<[1], [0], [0], [1], [0, 0, 1, 1], [], []>} : vector<128x1152xbf16>, vector<1152x128xbf16>, vector<128x128xf32> -> vector<128x128xf32>
    %c0_25 = arith.constant 0 : index
    %c0_26 = arith.constant 0 : index
    %57 = vector.load %arg7[%c0_25, %c0_26] : memref<1x128xf32, #tpu.memory_space<vmem>>, vector<1x128xf32>
    %58 = vector.broadcast %57 : vector<1x128xf32> to vector<128x128xf32>
    %59 = arith.mulf %56, %58 : vector<128x128xf32>
    %c0_27 = arith.constant 0 : index
    %c0_28 = arith.constant 0 : index
    %60 = vector.load %arg8[%c0_27, %c0_28] : memref<1x128xf32, #tpu.memory_space<vmem>>, vector<1x128xf32>
    %61 = vector.broadcast %60 : vector<1x128xf32> to vector<128x128xf32>
    %62 = arith.addf %59, %61 : vector<128x128xf32>
    %cst_29 = arith.constant 0.000000e+00 : f32
    %63 = vector.broadcast %cst_29 : f32 to vector<128x128xf32>
    %64 = arith.maximumf %62, %63 : vector<128x128xf32>
    %65 = vector.shape_cast %64 : vector<128x128xf32> to vector<8x16x128xf32>
    %c0_30 = arith.constant 0 : index
    %c0_31 = arith.constant 0 : index
    %c0_32 = arith.constant 0 : index
    %c0_33 = arith.constant 0 : index
    %66 = vector.load %arg9[%c0_30, %c0_31, %c0_32, %c0_33] : memref<1x8x16x128xf32, #tpu.memory_space<vmem>>, vector<1x8x16x128xf32>
    %67 = vector.shape_cast %66 : vector<1x8x16x128xf32> to vector<8x16x128xf32>
    %68 = vector.shape_cast %65 : vector<8x16x128xf32> to vector<1x8x16x128xf32>
    tpu.vector_store %arg9[%c0_30, %c0_31, %c0_32, %c0_33], %68 {strides = array<i32>} : memref<1x8x16x128xf32, #tpu.memory_space<vmem>>, vector<1x8x16x128xf32>,
    return
  }
  func.func @transform_0(%arg0: i32, %arg1: i32) -> (i32, i32, i32, i32) {
    %c2_i32 = arith.constant 2 : i32
    %0 = arith.muli %arg0, %c2_i32 : i32
    %1 = arith.addi %0, %arg1 : i32
    %c0_i32 = arith.constant 0 : i32
    %c0_i32_0 = arith.constant 0 : i32
    %c0_i32_1 = arith.constant 0 : i32
    %c0_i32_2 = arith.constant 0 : i32
    return %1, %c0_i32, %c0_i32_0, %c0_i32_1 : i32, i32, i32, i32
  }
  func.func @transform_1(%arg0: i32, %arg1: i32) -> (i32, i32) {
    %c0_i32 = arith.constant 0 : i32
    %c0_i32_0 = arith.constant 0 : i32
    %c0_i32_1 = arith.constant 0 : i32
    return %c0_i32, %c0_i32_0 : i32, i32
  }
  func.func @transform_2(%arg0: i32, %arg1: i32) -> (i32, i32) {
    %c0_i32 = arith.constant 0 : i32
    %c0_i32_0 = arith.constant 0 : i32
    %c0_i32_1 = arith.constant 0 : i32
    return %c0_i32, %c0_i32_0 : i32, i32
  }
  func.func @transform_3(%arg0: i32, %arg1: i32) -> (i32, i32) {
    %c0_i32 = arith.constant 0 : i32
    %c0_i32_0 = arith.constant 0 : i32
    %c0_i32_1 = arith.constant 0 : i32
    return %c0_i32, %c0_i32_0 : i32, i32
  }
  func.func @transform_4(%arg0: i32, %arg1: i32) -> (i32, i32) {
    %c0_i32 = arith.constant 0 : i32
    %c0_i32_0 = arith.constant 0 : i32
    %c0_i32_1 = arith.constant 0 : i32
    return %c0_i32, %c0_i32_0 : i32, i32
  }
  func.func @transform_5(%arg0: i32, %arg1: i32) -> (i32, i32) {
    %c0_i32 = arith.constant 0 : i32
    %c0_i32_0 = arith.constant 0 : i32
    %c0_i32_1 = arith.constant 0 : i32
    return %c0_i32, %c0_i32_0 : i32, i32
  }
  func.func @transform_6(%arg0: i32, %arg1: i32) -> (i32, i32) {
    %c0_i32 = arith.constant 0 : i32
    %c0_i32_0 = arith.constant 0 : i32
    %c0_i32_1 = arith.constant 0 : i32
    return %c0_i32, %c0_i32_0 : i32, i32
  }
  func.func @transform_7(%arg0: i32, %arg1: i32) -> (i32, i32, i32, i32) {
    %c0_i32 = arith.constant 0 : i32
    %c0_i32_0 = arith.constant 0 : i32
    %c0_i32_1 = arith.constant 0 : i32
    return %arg0, %arg1, %c0_i32, %c0_i32_0 : i32, i32, i32, i32
  }
}

</mosaic_0001>

<llo_original>
// kernel: double_conv.1
$region0: #{double_conv.1}
  #allocation0 [shape = 'u32[]', space=smem, size = 0x4, offset = 0x4, fixed_abs, tag = 'smem constant byte address 0x4 - core index']
  #allocation1 [shape = 'u32[144,128]{1,0:T(1,128)}', space=vmem, size = 0x12000, scoped, tag = 'internal scratch']
  #allocation2 [shape = 'bf16[10,18,128]{2,1,0:T(8,128)(2,1)}', space=vmem, size = 0xf000, scoped, tag = 'scratch operand']
  %s0 = inlined_call_operand.vmem [shape: bf16[4,12,18,128], index: 0, kind: input, shape index: {}]
  %s1 = inlined_call_operand.vmem [shape: bf16[1152,128], index: 1, kind: input, shape index: {}]
  %s2 = inlined_call_operand.vmem [shape: f32[1,128], index: 2, kind: input, shape index: {}]
  %s3 = inlined_call_operand.vmem [shape: f32[1,128], index: 3, kind: input, shape index: {}]
  %s4 = inlined_call_operand.vmem [shape: bf16[1152,128], index: 4, kind: input, shape index: {}]
  %s5 = inlined_call_operand.vmem [shape: f32[1,128], index: 5, kind: input, shape index: {}]
  %s6 = inlined_call_operand.vmem [shape: f32[1,128], index: 6, kind: input, shape index: {}]
  %s7 = inlined_call_operand.vmem [shape: f32[2,16,16,128], index: 7, kind: output, shape index: {}]
  %s8 = sld [smem:[#allocation0]]
  $region61: #{double_conv.1} parent=0
    _
  %s10 = ssub.s32 1, %s8
  %s11 = scalar_select 0, %s10, %s8
  loop: start=0, step=1, limit=6
  $region2: #{double_conv.1} parent=0 // loop_pre_header
    _
  $region3: #{double_conv.1} parent=0 // loop_header
    %s13 = sphi 0, %s17
    %p14 = scmp.ge.s32.totalorder %s13, 6
    %s20 = sphi 0, %s32
    %s21 = sphi 0, %s28
    %s22 = sphi 0, %s20
    %s23 = sphi 0, %s21
    %s24 = sphi 0, %s22
    %s25 = sphi 0, %s23
    %s39 = sphi 0, %s41
    %s42 = sphi 0, %s39
    %s43 = sphi 0, %s42
    %s59 = sphi 0, %s43
    %s63 = sphi 0, %s63
    %s65 = sphi 0, %s63
    %s66 = sphi 0, %s65
    %s80 = sphi 0, %s66
    %s84 = sphi 0, %s84
    %s86 = sphi 0, %s84
    %s87 = sphi 0, %s86
    %s101 = sphi 0, %s87
    %s105 = sphi 0, %s105
    %s107 = sphi 0, %s105
    %s108 = sphi 0, %s107
    %s122 = sphi 0, %s108
    %s126 = sphi 0, %s126
    %s128 = sphi 0, %s126
    %s129 = sphi 0, %s128
    %s143 = sphi 0, %s129
    %s147 = sphi 0, %s147
    %s149 = sphi 0, %s147
    %s150 = sphi 0, %s149
    %s164 = sphi 0, %s150
    %s168 = sphi 0, %s168
    %s170 = sphi 0, %s168
    %s171 = sphi 0, %s170
    %s185 = sphi 0, %s171
    %s193 = sphi 0, %s195
    %s196 = sphi 0, %s193
    %s197 = sphi 0, %s196
    %s213 = sphi 0, %s197
  $region4: #{double_conv.1} parent=0 // loop_header_branch
    %16 = sbr.rel (%p14) target = $region8
  $region5: #{double_conv.1} parent=0 // loop_body
    %s18 = ssub.s32 %s13, 1
    %s19 = ssub.s32 %s13, 2
    %s26 = sadd.s32 1, %s21
    %p27 = scmp.ge.s32.totalorder %s26, 2
    %s28 = scalar_select %p27, 0, %s26
    %s29 = sadd.s32 1, %s20
    %s30 = scalar_select %p27, %s29, %s20
    %p31 = scmp.ge.s32.totalorder %s30, 2
    %s32 = scalar_select %p31, 0, %s30
    %s33 = smul.u32 %s20, 2
    %s34 = sadd.s32 %s33, %s21
    %s35 = smul.u32 %s32, 2
    %s36 = sadd.s32 %s35, %s28
    %s37 = ssub.s32 %s34, %s36
    %p38 = scmp.eq.s32.totalorder %s37, 0
    %s40 = sadd.s32 %s39, 1
    %s41 = scalar_select %p38, %s39, %s40
    %p44 = pneg %p38
    %p45 = scmp.eq.s32.totalorder %s13, 3
    %p46 = por %p44, %p45
    %p47 = scmp.ne.s32.totalorder %s39, %s42
    %p48 = scmp.eq.s32.totalorder %s13, 0
    %p49 = por %p47, %p48
    %p50 = scmp.ne.s32.totalorder %s39, %s42
    %p51 = scmp.eq.s32.totalorder %s18, 3
    %p52 = por %p50, %p51
    %p53 = scmp.ne.s32.totalorder %s42, %s43
    %p54 = scmp.eq.s32.totalorder %s18, 0
    %p55 = por %p53, %p54
    %p56 = scmp.ne.s32.totalorder %s42, %s43
    %p57 = scmp.eq.s32.totalorder %s19, 3
    %p58 = por %p56, %p57
    %p60 = scmp.ne.s32.totalorder %s43, %s59
    %p61 = scmp.eq.s32.totalorder %s19, 0
    %p62 = por %p60, %p61
    %s64 = sadd.s32 %s63, 1
    %p67 = scmp.eq.s32.totalorder %s13, 3
    %p68 = scmp.ne.s32.totalorder %s63, %s65
    %p69 = scmp.eq.s32.totalorder %s13, 0
    %p70 = por %p68, %p69
    %p71 = scmp.ne.s32.totalorder %s63, %s65
    %p72 = scmp.eq.s32.totalorder %s18, 3
    %p73 = por %p71, %p72
    %p74 = scmp.ne.s32.totalorder %s65, %s66
    %p75 = scmp.eq.s32.totalorder %s18, 0
    %p76 = por %p74, %p75
    %p77 = scmp.ne.s32.totalorder %s65, %s66
    %p78 = scmp.eq.s32.totalorder %s19, 3
    %p79 = por %p77, %p78
    %p81 = scmp.ne.s32.totalorder %s66, %s80
    %p82 = scmp.eq.s32.totalorder %s19, 0
    %p83 = por %p81, %p82
    %s85 = sadd.s32 %s84, 1
    %p88 = scmp.eq.s32.totalorder %s13, 3
    %p89 = scmp.ne.s32.totalorder %s84, %s86
    %p90 = scmp.eq.s32.totalorder %s13, 0
    %p91 = por %p89, %p90
    %p92 = scmp.ne.s32.totalorder %s84, %s86
    %p93 = scmp.eq.s32.totalorder %s18, 3
    %p94 = por %p92, %p93
    %p95 = scmp.ne.s32.totalorder %s86, %s87
    %p96 = scmp.eq.s32.totalorder %s18, 0
    %p97 = por %p95, %p96
    %p98 = scmp.ne.s32.totalorder %s86, %s87
    %p99 = scmp.eq.s32.totalorder %s19, 3
    %p100 = por %p98, %p99
    %p102 = scmp.ne.s32.totalorder %s87, %s101
    %p103 = scmp.eq.s32.totalorder %s19, 0
    %p104 = por %p102, %p103
    %s106 = sadd.s32 %s105, 1
    %p109 = scmp.eq.s32.totalorder %s13, 3
    %p110 = scmp.ne.s32.totalorder %s105, %s107
    %p111 = scmp.eq.s32.totalorder %s13, 0
    %p112 = por %p110, %p111
    %p113 = scmp.ne.s32.totalorder %s105, %s107
    %p114 = scmp.eq.s32.totalorder %s18, 3
    %p115 = por %p113, %p114
    %p116 = scmp.ne.s32.totalorder %s107, %s108
    %p117 = scmp.eq.s32.totalorder %s18, 0
    %p118 = por %p116, %p117
    %p119 = scmp.ne.s32.totalorder %s107, %s108
    %p120 = scmp.eq.s32.totalorder %s19, 3
    %p121 = por %p119, %p120
    %p123 = scmp.ne.s32.totalorder %s108, %s122
    %p124 = scmp.eq.s32.totalorder %s19, 0
    %p125 = por %p123, %p124
    %s127 = sadd.s32 %s126, 1
    %p130 = scmp.eq.s32.totalorder %s13, 3
    %p131 = scmp.ne.s32.totalorder %s126, %s128
    %p132 = scmp.eq.s32.totalorder %s13, 0
    %p133 = por %p131, %p132
    %p134 = scmp.ne.s32.totalorder %s126, %s128
    %p135 = scmp.eq.s32.totalorder %s18, 3
    %p136 = por %p134, %p135
    %p137 = scmp.ne.s32.totalorder %s128, %s129
    %p138 = scmp.eq.s32.totalorder %s18, 0
    %p139 = por %p137, %p138
    %p140 = scmp.ne.s32.totalorder %s128, %s129
    %p141 = scmp.eq.s32.totalorder %s19, 3
    %p142 = por %p140, %p141
    %p144 = scmp.ne.s32.totalorder %s129, %s143
    %p145 = scmp.eq.s32.totalorder %s19, 0
    %p146 = por %p144, %p145
    %s148 = sadd.s32 %s147, 1
    %p151 = scmp.eq.s32.totalorder %s13, 3
    %p152 = scmp.ne.s32.totalorder %s147, %s149
    %p153 = scmp.eq.s32.totalorder %s13, 0
    %p154 = por %p152, %p153
    %p155 = scmp.ne.s32.totalorder %s147, %s149
    %p156 = scmp.eq.s32.totalorder %s18, 3
    %p157 = por %p155, %p156
    %p158 = scmp.ne.s32.totalorder %s149, %s150
    %p159 = scmp.eq.s32.totalorder %s18, 0
    %p160 = por %p158, %p159
    %p161 = scmp.ne.s32.totalorder %s149, %s150
    %p162 = scmp.eq.s32.totalorder %s19, 3
    %p163 = por %p161, %p162
    %p165 = scmp.ne.s32.totalorder %s150, %s164
    %p166 = scmp.eq.s32.totalorder %s19, 0
    %p167 = por %p165, %p166
    %s169 = sadd.s32 %s168, 1
    %p172 = scmp.eq.s32.totalorder %s13, 3
    %p173 = scmp.ne.s32.totalorder %s168, %s170
    %p174 = scmp.eq.s32.totalorder %s13, 0
    %p175 = por %p173, %p174
    %p176 = scmp.ne.s32.totalorder %s168, %s170
    %p177 = scmp.eq.s32.totalorder %s18, 3
    %p178 = por %p176, %p177
    %p179 = scmp.ne.s32.totalorder %s170, %s171
    %p180 = scmp.eq.s32.totalorder %s18, 0
    %p181 = por %p179, %p180
    %p182 = scmp.ne.s32.totalorder %s170, %s171
    %p183 = scmp.eq.s32.totalorder %s19, 3
    %p184 = por %p182, %p183
    %p186 = scmp.ne.s32.totalorder %s171, %s185
    %p187 = scmp.eq.s32.totalorder %s19, 0
    %p188 = por %p186, %p187
    %s189 = ssub.s32 %s20, %s32
    %s190 = ssub.s32 %s21, %s28
    %s191 = sor.u32 %s189, %s190
    %p192 = scmp.eq.s32.totalorder %s191, 0
    %s194 = sadd.s32 %s193, 1
    %s195 = scalar_select %p192, %s193, %s194
    %p198 = pneg %p192
    %p199 = scmp.eq.s32.totalorder %s13, 3
    %p200 = por %p198, %p199
    %p201 = scmp.ne.s32.totalorder %s193, %s196
    %p202 = scmp.eq.s32.totalorder %s13, 0
    %p203 = por %p201, %p202
    %p204 = scmp.ne.s32.totalorder %s193, %s196
    %p205 = scmp.eq.s32.totalorder %s18, 3
    %p206 = por %p204, %p205
    %p207 = scmp.ne.s32.totalorder %s196, %s197
    %p208 = scmp.eq.s32.totalorder %s18, 0
    %p209 = por %p207, %p208
    %p210 = scmp.ne.s32.totalorder %s196, %s197
    %p211 = scmp.eq.s32.totalorder %s19, 3
    %p212 = por %p210, %p211
    %p214 = scmp.ne.s32.totalorder %s197, %s213
    %p215 = scmp.eq.s32.totalorder %s19, 0
    %p216 = por %p214, %p215
    %p217 = scmp.le.s32.totalorder 1, %s13
    %p218 = scmp.lt.s32.totalorder %s13, 5
    %p219 = pnand %p217, %p218
    %p220 = pneg %p219
    // Predicated region
    $region9: #{double_conv.1} parent=5 // pred_check
      _
    $region10: #{double_conv.1} parent=5 // pred_check_branch
      %222 = sbr.rel (%p219) target = $region12
    $region11: #{double_conv.1} parent=5 // pred_region
      %s223 = ssub.s32 %s13, 1
      // Predicated region
      $region13: #{double_conv.1} parent=11 // pred_check
        %p224 = pneg %p76
      $region14: #{double_conv.1} parent=11 // pred_check_branch
        %226 = sbr.rel (%p224) target = $region16
      $region15: #{double_conv.1} parent=11 // pred_region
        _
      $region16: #{double_conv.1} parent=11 // pred_fallthru
        _
      // Predicated region
      $region17: #{double_conv.1} parent=11 // pred_check
        %p227 = pneg %p97
      $region18: #{double_conv.1} parent=11 // pred_check_branch
        %229 = sbr.rel (%p227) target = $region20
      $region19: #{double_conv.1} parent=11 // pred_region
        _
      $region20: #{double_conv.1} parent=11 // pred_fallthru
        _
      // Predicated region
      $region21: #{double_conv.1} parent=11 // pred_check
        %p230 = pneg %p118
      $region22: #{double_conv.1} parent=11 // pred_check_branch
        %232 = sbr.rel (%p230) target = $region24
      $region23: #{double_conv.1} parent=11 // pred_region
        _
      $region24: #{double_conv.1} parent=11 // pred_fallthru
        _
      // Predicated region
      $region25: #{double_conv.1} parent=11 // pred_check
        %p233 = pneg %p139
      $region26: #{double_conv.1} parent=11 // pred_check_branch
        %235 = sbr.rel (%p233) target = $region28
      $region27: #{double_conv.1} parent=11 // pred_region
        _
      $region28: #{double_conv.1} parent=11 // pred_fallthru
        _
      // Predicated region
      $region29: #{double_conv.1} parent=11 // pred_check
        %p236 = pneg %p160
      $region30: #{double_conv.1} parent=11 // pred_check_branch
        %238 = sbr.rel (%p236) target = $region32
      $region31: #{double_conv.1} parent=11 // pred_region
        _
      $region32: #{double_conv.1} parent=11 // pred_fallthru
        _
      // Predicated region
      $region33: #{double_conv.1} parent=11 // pred_check
        %p239 = pneg %p181
      $region34: #{double_conv.1} parent=11 // pred_check_branch
        %241 = sbr.rel (%p239) target = $region36
      $region35: #{double_conv.1} parent=11 // pred_region
        _
      $region36: #{double_conv.1} parent=11 // pred_fallthru
        _
    $region12: #{double_conv.1} parent=5 // pred_fallthru
      _
    %p242 = scmp.lt.s32.totalorder %s13, 4
    // Predicated region
    $region37: #{double_conv.1} parent=5 // pred_check
      %p243 = pneg %p242
    $region38: #{double_conv.1} parent=5 // pred_check_branch
      %245 = sbr.rel (%p243) target = $region40
    $region39: #{double_conv.1} parent=5 // pred_region
      // Predicated region
      $region41: #{double_conv.1} parent=39 // pred_check
        %p246 = pneg %p49
      $region42: #{double_conv.1} parent=39 // pred_check_branch
        %248 = sbr.rel (%p246) target = $region44
      $region43: #{double_conv.1} parent=39 // pred_region
        %s249 = smul.u32 %s20, 2
        %s250 = sadd.s32 %s249, %s21
        %p251 = scmp.lt.s32.totalorder %s250, 3
        %s252 = scalar_select %p251, %s250, 3
        %s253 = smul.addr %s252, 36
        %s254 = smul.addr %s253, 4
        %s255 = scalar_lea.vmem %s0, %s254
        %s256 = smul.u32 %s20, 2
        %s257 = sadd.s32 %s256, %s21
      $region44: #{double_conv.1} parent=39 // pred_fallthru
        _
    $region40: #{double_conv.1} parent=5 // pred_fallthru
      _
    %p258 = scmp.le.s32.totalorder 1, %s13
    %p259 = scmp.lt.s32.totalorder %s13, 5
    %p260 = pnand %p258, %p259
    %p261 = pneg %p260
    // Predicated region
    $region45: #{double_conv.1} parent=5 // pred_check
      _
    $region46: #{double_conv.1} parent=5 // pred_check_branch
      %263 = sbr.rel (%p260) target = $region48
    $region47: #{double_conv.1} parent=5 // pred_region
      %s264 = ssub.s32 %s13, 1
      %s265 = smul.u32 %s22, 2
      %s266 = sadd.s32 %s265, %s23
      %p267 = scmp.lt.s32.totalorder %s266, 3
      %s268 = scalar_select %p267, %s266, 3
      %s269 = smul.addr %s268, 36
      %s270 = smul.addr %s269, 4
      %s271 = scalar_lea.vmem %s0, %s270
      %p272 = pneg %p55
      %p273 = pneg %p52
      %p274 = pneg %p76
      %p275 = pneg %p73
      %p276 = pneg %p97
      %p277 = pneg %p94
      %p278 = pneg %p118
      %p279 = pneg %p115
      %p280 = pneg %p139
      %p281 = pneg %p136
      %p282 = pneg %p160
      %p283 = pneg %p157
      %p284 = pneg %p181
      %p285 = pneg %p178
      %p286 = pneg %p209
      %p287 = pneg %p206
      %s288 = smul.u32 8, %s23
      %p289 = scmp.lt.s32.totalorder %s22, 1
      %s290 = scalar_select %p289, %s22, 1
      %p291 = scmp.lt.s32.totalorder %s288, 15
      %s292 = scalar_select %p291, %s288, 15
      %s293 = smul.addr %s292, 2
      %s294 = smul.addr %s290, 32
      %s295 = sadd.s32 %s293, %s294
      %s296 = smul.addr %s295, 8
      %s297 = scalar_lea.vmem %s7, %s296
      %s298 = smul.u32 %s22, 2
      %s299 = sadd.s32 %s298, %s23
      %p300 = scmp.lt.s32.totalorder %s299, 3
      %s301 = scalar_select %p300, %s299, 3
      %s302 = smul.addr %s301, 36
      %s303 = smul.addr %s302, 4
      %s304 = scalar_lea.vmem %s0, %s303
      %s305 = smul.u32 %s22, 2
      %s306 = sadd.s32 %s305, %s23
      %s307 = smul.u32 8, %s23
      %p308 = scmp.lt.s32.totalorder %s22, 1
      %s309 = scalar_select %p308, %s22, 1
      %p310 = scmp.lt.s32.totalorder %s307, 15
      %s311 = scalar_select %p310, %s307, 15
      %s312 = smul.addr %s311, 2
      %s313 = smul.addr %s309, 32
      %s314 = sadd.s32 %s312, %s313
      %s315 = smul.addr %s314, 8
      %s316 = scalar_lea.vmem %s7, %s315
      %s317 = smul.u32 8, %s23
      %v319 = vld [vmem:[%s304] sm:$0xf]
      %v320 = vld [vmem:[%s304 + $0x4] sm:$0xf]
      %v321 = vld [vmem:[%s304 + $0x8] sm:$0x1]
      %v322 = vld [vmem:[%s304 + $0xc] sm:$0xf]
      %v323 = vld [vmem:[%s304 + $0x10] sm:$0xf]
      %v324 = vld [vmem:[%s304 + $0x14] sm:$0x1]
      %v325 = vld [vmem:[%s304 + $0x18] sm:$0xf]
      %v326 = vld [vmem:[%s304 + $0x1c] sm:$0xf]
      %v327 = vld [vmem:[%s304 + $0x20] sm:$0x1]
      %v328 = vld [vmem:[%s304 + $0x24] sm:$0xf]
      %v329 = vld [vmem:[%s304 + $0x28] sm:$0xf]
      %v330 = vld [vmem:[%s304 + $0x2c] sm:$0x1]
      %v331 = vld [vmem:[%s304 + $0x30] sm:$0xf]
      %v332 = vld [vmem:[%s304 + $0x34] sm:$0xf]
      %v333 = vld [vmem:[%s304 + $0x38] sm:$0x1]
      %v334 = vld [vmem:[%s304 + $0x3c] sm:$0xf]
      %v335 = vld [vmem:[%s304 + $0x40] sm:$0xf]
      %v336 = vld [vmem:[%s304 + $0x44] sm:$0x1]
      %v337 = vld [vmem:[%s304 + $0x48] sm:$0xf]
      %v338 = vld [vmem:[%s304 + $0x4c] sm:$0xf]
      %v339 = vld [vmem:[%s304 + $0x50] sm:$0x1]
      %v340 = vld [vmem:[%s304 + $0x54] sm:$0xf]
      %v341 = vld [vmem:[%s304 + $0x58] sm:$0xf]
      %v342 = vld [vmem:[%s304 + $0x5c] sm:$0x1]
      %v343 = vld [vmem:[%s304 + $0x60] sm:$0xf]
      %v344 = vld [vmem:[%s304 + $0x64] sm:$0xf]
      %v345 = vld [vmem:[%s304 + $0x68] sm:$0x1]
      %v346 = vld [vmem:[%s304 + $0x6c] sm:$0xf]
      %v347 = vld [vmem:[%s304 + $0x70] sm:$0xf]
      %v348 = vld [vmem:[%s304 + $0x74] sm:$0x1]
      %v349 = vld [vmem:[%s304 + $0x78] sm:$0xf]
      %v350 = vld [vmem:[%s304 + $0x7c] sm:$0xf]
      %v351 = vld [vmem:[%s304 + $0x80] sm:$0x1]
      %v352 = vld [vmem:[%s304 + $0x84] sm:$0xf]
      %v353 = vld [vmem:[%s304 + $0x88] sm:$0xf]
      %v354 = vld [vmem:[%s304 + $0x8c] sm:$0x1]
      %v375 = vunpack.c.l.b16 %v319
      %v376 = vunpack.c.l.b16 %v320
      %v377 = vunpack.c.l.b16 %v322
      %v378 = vunpack.c.l.b16 %v323
      %v379 = vunpack.c.l.b16 %v325
      %v380 = vunpack.c.l.b16 %v326
      %v381 = vunpack.c.l.b16 %v328
      %v382 = vunpack.c.l.b16 %v329
      %v383 = vunpack.c.l.b16 %v331
      %v384 = vunpack.c.l.b16 %v332
      %v385 = vunpack.c.l.b16 %v334
      %v386 = vunpack.c.l.b16 %v335
      %v387 = vunpack.c.l.b16 %v337
      %v388 = vunpack.c.l.b16 %v338
      %v389 = vunpack.c.l.b16 %v340
      %v390 = vunpack.c.l.b16 %v341
      %v391 = vunpack.c.l.b16 %v343
      %v392 = vunpack.c.l.b16 %v344
      %v393 = vunpack.c.l.b16 %v346
      %v394 = vunpack.c.l.b16 %v347
      %v395 = vpack.c.b16 %v376, %v375
      %v396 = vpack.c.b16 %v378, %v377
      %v397 = vpack.c.b16 %v380, %v379
      %v398 = vpack.c.b16 %v382, %v381
      %v399 = vpack.c.b16 %v384, %v383
      %v400 = vpack.c.b16 %v386, %v385
      %v401 = vpack.c.b16 %v388, %v387
      %v402 = vpack.c.b16 %v390, %v389
      %v403 = vpack.c.b16 %v392, %v391
      %v404 = vpack.c.b16 %v394, %v393
      %v425 = vunpack.c.l.b16 %v321
      %v426 = vunpack.c.l.b16 %v324
      %v427 = vunpack.c.l.b16 %v327
      %v428 = vunpack.c.l.b16 %v330
      %v429 = vunpack.c.l.b16 %v333
      %v430 = vunpack.c.l.b16 %v336
      %v431 = vunpack.c.l.b16 %v339
      %v432 = vunpack.c.l.b16 %v342
      %v433 = vunpack.c.l.b16 %v345
      %v434 = vunpack.c.l.b16 %v348
      %v435 = vpack.c.b16 %v425, %v425
      %v436 = vpack.c.b16 %v426, %v426
      %v437 = vpack.c.b16 %v427, %v427
      %v438 = vpack.c.b16 %v428, %v428
      %v439 = vpack.c.b16 %v429, %v429
      %v440 = vpack.c.b16 %v430, %v430
      %v441 = vpack.c.b16 %v431, %v431
      %v442 = vpack.c.b16 %v432, %v432
      %v443 = vpack.c.b16 %v433, %v433
      %v444 = vpack.c.b16 %v434, %v434
      %vm445 = vsmask.f32 7424
      %v447 = vshrl.u32 %v395, 16
      %v449 = vshll.u32 %v395, 16
      %v451 = vrot.slane %v449, 1
      %v452 = vor.u32 %v447, %v451
      %v454 = vshll.u32 %v435, 16
      %v456 = vrot.slane %v454, 1
      %v457 = vsel %vm445, %v452, %v456
      %v459 = vshrl.u32 %v396, 16
      %v461 = vshll.u32 %v396, 16
      %v463 = vrot.slane %v461, 1
      %v464 = vor.u32 %v459, %v463
      %v466 = vshll.u32 %v436, 16
      %v468 = vrot.slane %v466, 1
      %v469 = vsel %vm445, %v464, %v468
      %v471 = vshrl.u32 %v397, 16
      %v473 = vshll.u32 %v397, 16
      %v475 = vrot.slane %v473, 1
      %v476 = vor.u32 %v471, %v475
      %v478 = vshll.u32 %v437, 16
      %v480 = vrot.slane %v478, 1
      %v481 = vsel %vm445, %v476, %v480
      %v483 = vshrl.u32 %v398, 16
      %v485 = vshll.u32 %v398, 16
      %v487 = vrot.slane %v485, 1
      %v488 = vor.u32 %v483, %v487
      %v490 = vshll.u32 %v438, 16
      %v492 = vrot.slane %v490, 1
      %v493 = vsel %vm445, %v488, %v492
      %v495 = vshrl.u32 %v399, 16
      %v497 = vshll.u32 %v399, 16
      %v499 = vrot.slane %v497, 1
      %v500 = vor.u32 %v495, %v499
      %v502 = vshll.u32 %v439, 16
      %v504 = vrot.slane %v502, 1
      %v505 = vsel %vm445, %v500, %v504
      %v507 = vshrl.u32 %v400, 16
      %v509 = vshll.u32 %v400, 16
      %v511 = vrot.slane %v509, 1
      %v512 = vor.u32 %v507, %v511
      %v514 = vshll.u32 %v440, 16
      %v516 = vrot.slane %v514, 1
      %v517 = vsel %vm445, %v512, %v516
      %v519 = vshrl.u32 %v401, 16
      %v521 = vshll.u32 %v401, 16
      %v523 = vrot.slane %v521, 1
      %v524 = vor.u32 %v519, %v523
      %v526 = vshll.u32 %v441, 16
      %v528 = vrot.slane %v526, 1
      %v529 = vsel %vm445, %v524, %v528
      %v531 = vshrl.u32 %v402, 16
      %v533 = vshll.u32 %v402, 16
      %v535 = vrot.slane %v533, 1
      %v536 = vor.u32 %v531, %v535
      %v538 = vshll.u32 %v442, 16
      %v540 = vrot.slane %v538, 1
      %v541 = vsel %vm445, %v536, %v540
      %v543 = vshrl.u32 %v403, 16
      %v545 = vshll.u32 %v403, 16
      %v547 = vrot.slane %v545, 1
      %v548 = vor.u32 %v543, %v547
      %v550 = vshll.u32 %v443, 16
      %v552 = vrot.slane %v550, 1
      %v553 = vsel %vm445, %v548, %v552
      %v555 = vshrl.u32 %v404, 16
      %v557 = vshll.u32 %v404, 16
      %v559 = vrot.slane %v557, 1
      %v560 = vor.u32 %v555, %v559
      %v562 = vshll.u32 %v444, 16
      %v564 = vrot.slane %v562, 1
      %v565 = vsel %vm445, %v560, %v564
      %vm576 = vcmask 1046528
      %v577 = vrot.slane %v395, 1
      %v578 = vrot.slane %v435, 1
      %v579 = vsel %vm576, %v577, %v578
      %v580 = vrot.slane %v396, 1
      %v581 = vrot.slane %v436, 1
      %v582 = vsel %vm576, %v580, %v581
      %v583 = vrot.slane %v397, 1
      %v584 = vrot.slane %v437, 1
      %v585 = vsel %vm576, %v583, %v584
      %v586 = vrot.slane %v398, 1
      %v587 = vrot.slane %v438, 1
      %v588 = vsel %vm576, %v586, %v587
      %v589 = vrot.slane %v399, 1
      %v590 = vrot.slane %v439, 1
      %v591 = vsel %vm576, %v589, %v590
      %v592 = vrot.slane %v400, 1
      %v593 = vrot.slane %v440, 1
      %v594 = vsel %vm576, %v592, %v593
      %v595 = vrot.slane %v401, 1
      %v596 = vrot.slane %v441, 1
      %v597 = vsel %vm576, %v595, %v596
      %v598 = vrot.slane %v402, 1
      %v599 = vrot.slane %v442, 1
      %v600 = vsel %vm576, %v598, %v599
      %v601 = vrot.slane %v403, 1
      %v602 = vrot.slane %v443, 1
      %v603 = vsel %vm576, %v601, %v602
      %v604 = vrot.slane %v404, 1
      %v605 = vrot.slane %v444, 1
      %v606 = vsel %vm576, %v604, %v605
      %v619 = vunpack.c.l.b16 %v349
      %v620 = vunpack.c.l.b16 %v350
      %v621 = vpack.c.b16 %v620, %v619
      %v624 = vunpack.c.l.b16 %v351
      %v625 = vpack.c.b16 %v624, %v624
      %v627 = vshrl.u32 %v621, 16
      %v629 = vshll.u32 %v621, 16
      %v631 = vrot.slane %v629, 1
      %v632 = vor.u32 %v627, %v631
      %v634 = vshll.u32 %v625, 16
      %v636 = vrot.slane %v634, 1
      %v637 = vsel %vm445, %v632, %v636
      %v639 = vrot.slane %v621, 1
      %v640 = vrot.slane %v625, 1
      %v641 = vsel %vm576, %v639, %v640
      %v645 = vunpack.c.l.b16 %v352
      %v646 = vunpack.c.l.b16 %v353
      %v647 = vpack.c.b16 %v646, %v645
      %v650 = vunpack.c.l.b16 %v354
      %v651 = vpack.c.b16 %v650, %v650
      %v653 = vshrl.u32 %v647, 16
      %v655 = vshll.u32 %v647, 16
      %v657 = vrot.slane %v655, 1
      %v658 = vor.u32 %v653, %v657
      %v660 = vshll.u32 %v651, 16
      %v662 = vrot.slane %v660, 1
      %v663 = vsel %vm445, %v658, %v662
      %v665 = vrot.slane %v647, 1
      %v666 = vrot.slane %v651, 1
      %v667 = vsel %vm576, %v665, %v666
      %v669 = vld [vmem:[%s1] sm:$0xf]
      %v670 = vld [vmem:[%s1 + $0x4] sm:$0xf]
      %v671 = vld [vmem:[%s1 + $0x8] sm:$0xf]
      %v672 = vld [vmem:[%s1 + $0xc] sm:$0xf]
      %v673 = vld [vmem:[%s1 + $0x10] sm:$0xf]
      %v674 = vld [vmem:[%s1 + $0x14] sm:$0xf]
      %v675 = vld [vmem:[%s1 + $0x18] sm:$0xf]
      %v676 = vld [vmem:[%s1 + $0x1c] sm:$0xf]
      %v677 = vld [vmem:[%s1 + $0x20] sm:$0xf]
      %v678 = vld [vmem:[%s1 + $0x24] sm:$0xf]
      %v679 = vld [vmem:[%s1 + $0x28] sm:$0xf]
      %v680 = vld [vmem:[%s1 + $0x2c] sm:$0xf]
      %v681 = vld [vmem:[%s1 + $0x30] sm:$0xf]
      %v682 = vld [vmem:[%s1 + $0x34] sm:$0xf]
      %v683 = vld [vmem:[%s1 + $0x38] sm:$0xf]
      %v684 = vld [vmem:[%s1 + $0x3c] sm:$0xf]
      %v685 = vld [vmem:[%s1 + $0x40] sm:$0xf]
      %v686 = vld [vmem:[%s1 + $0x44] sm:$0xf]
      %v687 = vld [vmem:[%s1 + $0x48] sm:$0xf]
      %v688 = vld [vmem:[%s1 + $0x4c] sm:$0xf]
      %v689 = vld [vmem:[%s1 + $0x50] sm:$0xf]
      %v690 = vld [vmem:[%s1 + $0x54] sm:$0xf]
      %v691 = vld [vmem:[%s1 + $0x58] sm:$0xf]
      %v692 = vld [vmem:[%s1 + $0x5c] sm:$0xf]
      %v693 = vld [vmem:[%s1 + $0x60] sm:$0xf]
      %v694 = vld [vmem:[%s1 + $0x64] sm:$0xf]
      %v695 = vld [vmem:[%s1 + $0x68] sm:$0xf]
      %v696 = vld [vmem:[%s1 + $0x6c] sm:$0xf]
      %v697 = vld [vmem:[%s1 + $0x70] sm:$0xf]
      %v698 = vld [vmem:[%s1 + $0x74] sm:$0xf]
      %v699 = vld [vmem:[%s1 + $0x78] sm:$0xf]
      %v700 = vld [vmem:[%s1 + $0x7c] sm:$0xf]
      %v701 = vld [vmem:[%s1 + $0x80] sm:$0xf]
      %v702 = vld [vmem:[%s1 + $0x84] sm:$0xf]
      %v703 = vld [vmem:[%s1 + $0x88] sm:$0xf]
      %v704 = vld [vmem:[%s1 + $0x8c] sm:$0xf]
      %v705 = vld [vmem:[%s1 + $0x90] sm:$0xf]
      %v706 = vld [vmem:[%s1 + $0x94] sm:$0xf]
      %v707 = vld [vmem:[%s1 + $0x98] sm:$0xf]
      %v708 = vld [vmem:[%s1 + $0x9c] sm:$0xf]
      %v709 = vld [vmem:[%s1 + $0xa0] sm:$0xf]
      %v710 = vld [vmem:[%s1 + $0xa4] sm:$0xf]
      %v711 = vld [vmem:[%s1 + $0xa8] sm:$0xf]
      %v712 = vld [vmem:[%s1 + $0xac] sm:$0xf]
      %v713 = vld [vmem:[%s1 + $0xb0] sm:$0xf]
      %v714 = vld [vmem:[%s1 + $0xb4] sm:$0xf]
      %v715 = vld [vmem:[%s1 + $0xb8] sm:$0xf]
      %v716 = vld [vmem:[%s1 + $0xbc] sm:$0xf]
      %v717 = vld [vmem:[%s1 + $0xc0] sm:$0xf]
      %v718 = vld [vmem:[%s1 + $0xc4] sm:$0xf]
      %v719 = vld [vmem:[%s1 + $0xc8] sm:$0xf]
      %v720 = vld [vmem:[%s1 + $0xcc] sm:$0xf]
      %v721 = vld [vmem:[%s1 + $0xd0] sm:$0xf]
      %v722 = vld [vmem:[%s1 + $0xd4] sm:$0xf]
      %v723 = vld [vmem:[%s1 + $0xd8] sm:$0xf]
      %v724 = vld [vmem:[%s1 + $0xdc] sm:$0xf]
      %v725 = vld [vmem:[%s1 + $0xe0] sm:$0xf]
      %v726 = vld [vmem:[%s1 + $0xe4] sm:$0xf]
      %v727 = vld [vmem:[%s1 + $0xe8] sm:$0xf]
      %v728 = vld [vmem:[%s1 + $0xec] sm:$0xf]
      %v729 = vld [vmem:[%s1 + $0xf0] sm:$0xf]
      %v730 = vld [vmem:[%s1 + $0xf4] sm:$0xf]
      %v731 = vld [vmem:[%s1 + $0xf8] sm:$0xf]
      %v732 = vld [vmem:[%s1 + $0xfc] sm:$0xf]
      %v733 = vld [vmem:[%s1 + $0x100] sm:$0xf]
      %v734 = vld [vmem:[%s1 + $0x104] sm:$0xf]
      %v735 = vld [vmem:[%s1 + $0x108] sm:$0xf]
      %v736 = vld [vmem:[%s1 + $0x10c] sm:$0xf]
      %v737 = vld [vmem:[%s1 + $0x110] sm:$0xf]
      %v738 = vld [vmem:[%s1 + $0x114] sm:$0xf]
      %v739 = vld [vmem:[%s1 + $0x118] sm:$0xf]
      %v740 = vld [vmem:[%s1 + $0x11c] sm:$0xf]
      %v741 = vld [vmem:[%s1 + $0x120] sm:$0xf]
      %v742 = vld [vmem:[%s1 + $0x124] sm:$0xf]
      %v743 = vld [vmem:[%s1 + $0x128] sm:$0xf]
      %v744 = vld [vmem:[%s1 + $0x12c] sm:$0xf]
      %v745 = vld [vmem:[%s1 + $0x130] sm:$0xf]
      %v746 = vld [vmem:[%s1 + $0x134] sm:$0xf]
      %v747 = vld [vmem:[%s1 + $0x138] sm:$0xf]
      %v748 = vld [vmem:[%s1 + $0x13c] sm:$0xf]
      %v749 = vld [vmem:[%s1 + $0x140] sm:$0xf]
      %v750 = vld [vmem:[%s1 + $0x144] sm:$0xf]
      %v751 = vld [vmem:[%s1 + $0x148] sm:$0xf]
      %v752 = vld [vmem:[%s1 + $0x14c] sm:$0xf]
      %v753 = vld [vmem:[%s1 + $0x150] sm:$0xf]
      %v754 = vld [vmem:[%s1 + $0x154] sm:$0xf]
      %v755 = vld [vmem:[%s1 + $0x158] sm:$0xf]
      %v756 = vld [vmem:[%s1 + $0x15c] sm:$0xf]
      %v757 = vld [vmem:[%s1 + $0x160] sm:$0xf]
      %v758 = vld [vmem:[%s1 + $0x164] sm:$0xf]
      %v759 = vld [vmem:[%s1 + $0x168] sm:$0xf]
      %v760 = vld [vmem:[%s1 + $0x16c] sm:$0xf]
      %v761 = vld [vmem:[%s1 + $0x170] sm:$0xf]
      %v762 = vld [vmem:[%s1 + $0x174] sm:$0xf]
      %v763 = vld [vmem:[%s1 + $0x178] sm:$0xf]
      %v764 = vld [vmem:[%s1 + $0x17c] sm:$0xf]
      %v765 = vld [vmem:[%s1 + $0x180] sm:$0xf]
      %v766 = vld [vmem:[%s1 + $0x184] sm:$0xf]
      %v767 = vld [vmem:[%s1 + $0x188] sm:$0xf]
      %v768 = vld [vmem:[%s1 + $0x18c] sm:$0xf]
      %v769 = vld [vmem:[%s1 + $0x190] sm:$0xf]
      %v770 = vld [vmem:[%s1 + $0x194] sm:$0xf]
      %v771 = vld [vmem:[%s1 + $0x198] sm:$0xf]
      %v772 = vld [vmem:[%s1 + $0x19c] sm:$0xf]
      %v773 = vld [vmem:[%s1 + $0x1a0] sm:$0xf]
      %v774 = vld [vmem:[%s1 + $0x1a4] sm:$0xf]
      %v775 = vld [vmem:[%s1 + $0x1a8] sm:$0xf]
      %v776 = vld [vmem:[%s1 + $0x1ac] sm:$0xf]
      %v777 = vld [vmem:[%s1 + $0x1b0] sm:$0xf]
      %v778 = vld [vmem:[%s1 + $0x1b4] sm:$0xf]
      %v779 = vld [vmem:[%s1 + $0x1b8] sm:$0xf]
      %v780 = vld [vmem:[%s1 + $0x1bc] sm:$0xf]
      %v781 = vld [vmem:[%s1 + $0x1c0] sm:$0xf]
      %v782 = vld [vmem:[%s1 + $0x1c4] sm:$0xf]
      %v783 = vld [vmem:[%s1 + $0x1c8] sm:$0xf]
      %v784 = vld [vmem:[%s1 + $0x1cc] sm:$0xf]
      %v785 = vld [vmem:[%s1 + $0x1d0] sm:$0xf]
      %v786 = vld [vmem:[%s1 + $0x1d4] sm:$0xf]
      %v787 = vld [vmem:[%s1 + $0x1d8] sm:$0xf]
      %v788 = vld [vmem:[%s1 + $0x1dc] sm:$0xf]
      %v789 = vld [vmem:[%s1 + $0x1e0] sm:$0xf]
      %v790 = vld [vmem:[%s1 + $0x1e4] sm:$0xf]
      %v791 = vld [vmem:[%s1 + $0x1e8] sm:$0xf]
      %v792 = vld [vmem:[%s1 + $0x1ec] sm:$0xf]
      %v793 = vld [vmem:[%s1 + $0x1f0] sm:$0xf]
      %v794 = vld [vmem:[%s1 + $0x1f4] sm:$0xf]
      %v795 = vld [vmem:[%s1 + $0x1f8] sm:$0xf]
      %v796 = vld [vmem:[%s1 + $0x1fc] sm:$0xf]
      %v797 = vld [vmem:[%s1 + $0x200] sm:$0xf]
      %v798 = vld [vmem:[%s1 + $0x204] sm:$0xf]
      %v799 = vld [vmem:[%s1 + $0x208] sm:$0xf]
      %v800 = vld [vmem:[%s1 + $0x20c] sm:$0xf]
      %v801 = vld [vmem:[%s1 + $0x210] sm:$0xf]
      %v802 = vld [vmem:[%s1 + $0x214] sm:$0xf]
      %v803 = vld [vmem:[%s1 + $0x218] sm:$0xf]
      %v804 = vld [vmem:[%s1 + $0x21c] sm:$0xf]
      %v805 = vld [vmem:[%s1 + $0x220] sm:$0xf]
      %v806 = vld [vmem:[%s1 + $0x224] sm:$0xf]
      %v807 = vld [vmem:[%s1 + $0x228] sm:$0xf]
      %v808 = vld [vmem:[%s1 + $0x22c] sm:$0xf]
      %v809 = vld [vmem:[%s1 + $0x230] sm:$0xf]
      %v810 = vld [vmem:[%s1 + $0x234] sm:$0xf]
      %v811 = vld [vmem:[%s1 + $0x238] sm:$0xf]
      %v812 = vld [vmem:[%s1 + $0x23c] sm:$0xf]
      %v957 = vunpack.c.l.b16 %v669
      %v958 = vunpack.c.l.b16 %v670
      %v959 = vunpack.c.l.b16 %v671
      %v960 = vunpack.c.l.b16 %v672
      %v961 = vunpack.c.l.b16 %v673
      %v962 = vunpack.c.l.b16 %v674
      %v963 = vunpack.c.l.b16 %v675
      %v964 = vunpack.c.l.b16 %v676
      %v965 = vunpack.c.l.b16 %v677
      %v966 = vunpack.c.l.b16 %v678
      %v967 = vunpack.c.l.b16 %v679
      %v968 = vunpack.c.l.b16 %v680
      %v969 = vunpack.c.l.b16 %v681
      %v970 = vunpack.c.l.b16 %v682
      %v971 = vunpack.c.l.b16 %v683
      %v972 = vunpack.c.l.b16 %v684
      %v973 = vunpack.c.l.b16 %v685
      %v974 = vunpack.c.l.b16 %v686
      %v975 = vunpack.c.l.b16 %v687
      %v976 = vunpack.c.l.b16 %v688
      %v977 = vunpack.c.l.b16 %v689
      %v978 = vunpack.c.l.b16 %v690
      %v979 = vunpack.c.l.b16 %v691
      %v980 = vunpack.c.l.b16 %v692
      %v981 = vunpack.c.l.b16 %v693
      %v982 = vunpack.c.l.b16 %v694
      %v983 = vunpack.c.l.b16 %v695
      %v984 = vunpack.c.l.b16 %v696
      %v985 = vunpack.c.l.b16 %v697
      %v986 = vunpack.c.l.b16 %v698
      %v987 = vunpack.c.l.b16 %v699
      %v988 = vunpack.c.l.b16 %v700
      %v989 = vunpack.c.l.b16 %v701
      %v990 = vunpack.c.l.b16 %v702
      %v991 = vunpack.c.l.b16 %v703
      %v992 = vunpack.c.l.b16 %v704
      %v993 = vunpack.c.l.b16 %v705
      %v994 = vunpack.c.l.b16 %v706
      %v995 = vunpack.c.l.b16 %v707
      %v996 = vunpack.c.l.b16 %v708
      %v997 = vunpack.c.l.b16 %v709
      %v998 = vunpack.c.l.b16 %v710
      %v999 = vunpack.c.l.b16 %v711
      %v1000 = vunpack.c.l.b16 %v712
      %v1001 = vunpack.c.l.b16 %v713
      %v1002 = vunpack.c.l.b16 %v714
      %v1003 = vunpack.c.l.b16 %v715
      %v1004 = vunpack.c.l.b16 %v716
      %v1005 = vunpack.c.l.b16 %v717
      %v1006 = vunpack.c.l.b16 %v718
      %v1007 = vunpack.c.l.b16 %v719
      %v1008 = vunpack.c.l.b16 %v720
      %v1009 = vunpack.c.l.b16 %v721
      %v1010 = vunpack.c.l.b16 %v722
      %v1011 = vunpack.c.l.b16 %v723
      %v1012 = vunpack.c.l.b16 %v724
      %v1013 = vunpack.c.l.b16 %v725
      %v1014 = vunpack.c.l.b16 %v726
      %v1015 = vunpack.c.l.b16 %v727
      %v1016 = vunpack.c.l.b16 %v728
      %v1017 = vunpack.c.l.b16 %v729
      %v1018 = vunpack.c.l.b16 %v730
      %v1019 = vunpack.c.l.b16 %v731
      %v1020 = vunpack.c.l.b16 %v732
      %v1021 = vunpack.c.l.b16 %v733
      %v1022 = vunpack.c.l.b16 %v734
      %v1023 = vunpack.c.l.b16 %v735
      %v1024 = vunpack.c.l.b16 %v736
      %v1025 = vunpack.c.l.b16 %v737
      %v1026 = vunpack.c.l.b16 %v738
      %v1027 = vunpack.c.l.b16 %v739
      %v1028 = vunpack.c.l.b16 %v740
      %v1029 = vunpack.c.l.b16 %v741
      %v1030 = vunpack.c.l.b16 %v742
      %v1031 = vunpack.c.l.b16 %v743
      %v1032 = vunpack.c.l.b16 %v744
      %v1033 = vunpack.c.l.b16 %v745
      %v1034 = vunpack.c.l.b16 %v746
      %v1035 = vunpack.c.l.b16 %v747
      %v1036 = vunpack.c.l.b16 %v748
      %v1037 = vunpack.c.l.b16 %v749
      %v1038 = vunpack.c.l.b16 %v750
      %v1039 = vunpack.c.l.b16 %v751
      %v1040 = vunpack.c.l.b16 %v752
      %v1041 = vunpack.c.l.b16 %v753
      %v1042 = vunpack.c.l.b16 %v754
      %v1043 = vunpack.c.l.b16 %v755
      %v1044 = vunpack.c.l.b16 %v756
      %v1045 = vunpack.c.l.b16 %v757
      %v1046 = vunpack.c.l.b16 %v758
      %v1047 = vunpack.c.l.b16 %v759
      %v1048 = vunpack.c.l.b16 %v760
      %v1049 = vunpack.c.l.b16 %v761
      %v1050 = vunpack.c.l.b16 %v762
      %v1051 = vunpack.c.l.b16 %v763
      %v1052 = vunpack.c.l.b16 %v764
      %v1053 = vunpack.c.l.b16 %v765
      %v1054 = vunpack.c.l.b16 %v766
      %v1055 = vunpack.c.l.b16 %v767
      %v1056 = vunpack.c.l.b16 %v768
      %v1057 = vunpack.c.l.b16 %v769
      %v1058 = vunpack.c.l.b16 %v770
      %v1059 = vunpack.c.l.b16 %v771
      %v1060 = vunpack.c.l.b16 %v772
      %v1061 = vunpack.c.l.b16 %v773
      %v1062 = vunpack.c.l.b16 %v774
      %v1063 = vunpack.c.l.b16 %v775
      %v1064 = vunpack.c.l.b16 %v776
      %v1065 = vunpack.c.l.b16 %v777
      %v1066 = vunpack.c.l.b16 %v778
      %v1067 = vunpack.c.l.b16 %v779
      %v1068 = vunpack.c.l.b16 %v780
      %v1069 = vunpack.c.l.b16 %v781
      %v1070 = vunpack.c.l.b16 %v782
      %v1071 = vunpack.c.l.b16 %v783
      %v1072 = vunpack.c.l.b16 %v784
      %v1073 = vunpack.c.l.b16 %v785
      %v1074 = vunpack.c.l.b16 %v786
      %v1075 = vunpack.c.l.b16 %v787
      %v1076 = vunpack.c.l.b16 %v788
      %v1077 = vunpack.c.l.b16 %v789
      %v1078 = vunpack.c.l.b16 %v790
      %v1079 = vunpack.c.l.b16 %v791
      %v1080 = vunpack.c.l.b16 %v792
      %v1081 = vunpack.c.l.b16 %v793
      %v1082 = vunpack.c.l.b16 %v794
      %v1083 = vunpack.c.l.b16 %v795
      %v1084 = vunpack.c.l.b16 %v796
      %v1085 = vunpack.c.l.b16 %v797
      %v1086 = vunpack.c.l.b16 %v798
      %v1087 = vunpack.c.l.b16 %v799
      %v1088 = vunpack.c.l.b16 %v800
      %v1089 = vunpack.c.l.b16 %v801
      %v1090 = vunpack.c.l.b16 %v802
      %v1091 = vunpack.c.l.b16 %v803
      %v1092 = vunpack.c.l.b16 %v804
      %v1093 = vunpack.c.l.b16 %v805
      %v1094 = vunpack.c.l.b16 %v806
      %v1095 = vunpack.c.l.b16 %v807
      %v1096 = vunpack.c.l.b16 %v808
      %v1097 = vunpack.c.l.b16 %v809
      %v1098 = vunpack.c.l.b16 %v810
      %v1099 = vunpack.c.l.b16 %v811
      %v1100 = vunpack.c.l.b16 %v812
      %v1101 = vpack.c.b16 %v958, %v957
      %v1102 = vpack.c.b16 %v960, %v959
      %v1103 = vpack.c.b16 %v962, %v961
      %v1104 = vpack.c.b16 %v964, %v963
      %v1105 = vpack.c.b16 %v966, %v965
      %v1106 = vpack.c.b16 %v968, %v967
      %v1107 = vpack.c.b16 %v970, %v969
      %v1108 = vpack.c.b16 %v972, %v971
      %v1109 = vpack.c.b16 %v974, %v973
      %v1110 = vpack.c.b16 %v976, %v975
      %v1111 = vpack.c.b16 %v978, %v977
      %v1112 = vpack.c.b16 %v980, %v979
      %v1113 = vpack.c.b16 %v982, %v981
      %v1114 = vpack.c.b16 %v984, %v983
      %v1115 = vpack.c.b16 %v986, %v985
      %v1116 = vpack.c.b16 %v988, %v987
      %v1117 = vpack.c.b16 %v990, %v989
      %v1118 = vpack.c.b16 %v992, %v991
      %v1119 = vpack.c.b16 %v994, %v993
      %v1120 = vpack.c.b16 %v996, %v995
      %v1121 = vpack.c.b16 %v998, %v997
      %v1122 = vpack.c.b16 %v1000, %v999
      %v1123 = vpack.c.b16 %v1002, %v1001
      %v1124 = vpack.c.b16 %v1004, %v1003
      %v1125 = vpack.c.b16 %v1006, %v1005
      %v1126 = vpack.c.b16 %v1008, %v1007
      %v1127 = vpack.c.b16 %v1010, %v1009
      %v1128 = vpack.c.b16 %v1012, %v1011
      %v1129 = vpack.c.b16 %v1014, %v1013
      %v1130 = vpack.c.b16 %v1016, %v1015
      %v1131 = vpack.c.b16 %v1018, %v1017
      %v1132 = vpack.c.b16 %v1020, %v1019
      %v1133 = vpack.c.b16 %v1022, %v1021
      %v1134 = vpack.c.b16 %v1024, %v1023
      %v1135 = vpack.c.b16 %v1026, %v1025
      %v1136 = vpack.c.b16 %v1028, %v1027
      %v1137 = vpack.c.b16 %v1030, %v1029
      %v1138 = vpack.c.b16 %v1032, %v1031
      %v1139 = vpack.c.b16 %v1034, %v1033
      %v1140 = vpack.c.b16 %v1036, %v1035
      %v1141 = vpack.c.b16 %v1038, %v1037
      %v1142 = vpack.c.b16 %v1040, %v1039
      %v1143 = vpack.c.b16 %v1042, %v1041
      %v1144 = vpack.c.b16 %v1044, %v1043
      %v1145 = vpack.c.b16 %v1046, %v1045
      %v1146 = vpack.c.b16 %v1048, %v1047
      %v1147 = vpack.c.b16 %v1050, %v1049
      %v1148 = vpack.c.b16 %v1052, %v1051
      %v1149 = vpack.c.b16 %v1054, %v1053
      %v1150 = vpack.c.b16 %v1056, %v1055
      %v1151 = vpack.c.b16 %v1058, %v1057
      %v1152 = vpack.c.b16 %v1060, %v1059
      %v1153 = vpack.c.b16 %v1062, %v1061
      %v1154 = vpack.c.b16 %v1064, %v1063
      %v1155 = vpack.c.b16 %v1066, %v1065
      %v1156 = vpack.c.b16 %v1068, %v1067
      %v1157 = vpack.c.b16 %v1070, %v1069
      %v1158 = vpack.c.b16 %v1072, %v1071
      %v1159 = vpack.c.b16 %v1074, %v1073
      %v1160 = vpack.c.b16 %v1076, %v1075
      %v1161 = vpack.c.b16 %v1078, %v1077
      %v1162 = vpack.c.b16 %v1080, %v1079
      %v1163 = vpack.c.b16 %v1082, %v1081
      %v1164 = vpack.c.b16 %v1084, %v1083
      %v1165 = vpack.c.b16 %v1086, %v1085
      %v1166 = vpack.c.b16 %v1088, %v1087
      %v1167 = vpack.c.b16 %v1090, %v1089
      %v1168 = vpack.c.b16 %v1092, %v1091
      %v1169 = vpack.c.b16 %v1094, %v1093
      %v1170 = vpack.c.b16 %v1096, %v1095
      %v1171 = vpack.c.b16 %v1098, %v1097
      %v1172 = vpack.c.b16 %v1100, %v1099
      %1245 = vmatprep.subr.bf16.mxu0 0
      %1246 = vmatpush1.bf16.msra.mxu0 %v1101
      %1247 = vmatprep.subr.bf16.mxu0 0
      %1248 = vmatpush1.bf16.msra.mxu0 %v1102
      %1249 = vmatprep.subr.bf16.mxu0 0
      %1250 = vmatpush1.bf16.msra.mxu0 %v1103
      %1251 = vmatprep.subr.bf16.mxu0 0
      %1252 = vmatpush1.bf16.msra.mxu0 %v1104
      %1253 = vmatprep.subr.bf16.mxu0 0
      %1254 = vmatpush1.bf16.msra.mxu0 %v1105
      %1255 = vmatprep.subr.bf16.mxu0 0
      %1256 = vmatpush1.bf16.msra.mxu0 %v1106
      %1257 = vmatprep.subr.bf16.mxu0 0
      %1258 = vmatpush1.bf16.msra.mxu0 %v1107
      %1259 = vmatprep.subr.bf16.mxu0 0
      %1260 = vmatpush1.bf16.msra.mxu0 %v1108
      %1261 = vmatprep.subr.bf16.mxu0 0
      %1262 = vmatpush1.bf16.msra.mxu0 %v1109
      %1263 = vmatprep.subr.bf16.mxu0 0
      %1264 = vmatpush1.bf16.msra.mxu0 %v1110
      %1265 = vmatprep.subr.bf16.mxu0 0
      %1266 = vmatpush1.bf16.msra.mxu0 %v1111
      %1267 = vmatprep.subr.bf16.mxu0 0
      %1268 = vmatpush1.bf16.msra.mxu0 %v1112
      %1269 = vmatprep.subr.bf16.mxu0 0
      %1270 = vmatpush1.bf16.msra.mxu0 %v1113
      %1271 = vmatprep.subr.bf16.mxu0 0
      %1272 = vmatpush1.bf16.msra.mxu0 %v1114
      %1273 = vmatprep.subr.bf16.mxu0 0
      %1274 = vmatpush1.bf16.msra.mxu0 %v1115
      %1275 = vmatprep.subr.bf16.mxu0 0
      %1276 = vmatpush1.bf16.msra.mxu0 %v1116
      %1277 = vmatprep.mubr.bf16.mxu0 %v457
      %1278 = vmatmul.mubr.bf16.gmra.mrb[0].mxu0 %v395
      %v1279 = vpop.f32.mrb[0].mxu0
      %v1280 = vadd.f32 0.0, %v1279
      %v1281 = vpop.f32.mrb[0].mxu0
      %v1282 = vpop.f32.mrb[0].mxu0
      %v1283 = vadd.f32 0.0, %v1282
      %v1284 = vpop.f32.mrb[0].mxu0
      %1285 = vmatprep.mubr.bf16.mxu0 %v469
      %1286 = vmatmul.mubr.bf16.gmra.mrb[0].mxu0 %v396
      %v1287 = vpop.f32.mrb[0].mxu0
      %v1288 = vadd.f32 0.0, %v1287
      %v1289 = vpop.f32.mrb[0].mxu0
      %v1290 = vpop.f32.mrb[0].mxu0
      %v1291 = vadd.f32 0.0, %v1290
      %v1292 = vpop.f32.mrb[0].mxu0
      %1293 = vmatprep.mubr.bf16.mxu0 %v481
      %1294 = vmatmul.mubr.bf16.gmra.mrb[0].mxu0 %v397
      %v1295 = vpop.f32.mrb[0].mxu0
      %v1296 = vadd.f32 0.0, %v1295
      %v1297 = vpop.f32.mrb[0].mxu0
      %v1298 = vpop.f32.mrb[0].mxu0
      %v1299 = vadd.f32 0.0, %v1298
      %v1300 = vpop.f32.mrb[0].mxu0
      %1301 = vmatprep.mubr.bf16.mxu0 %v493
      %1302 = vmatmul.mubr.bf16.gmra.mrb[0].mxu0 %v398
      %v1303 = vpop.f32.mrb[0].mxu0
      %v1304 = vadd.f32 0.0, %v1303
      %v1305 = vpop.f32.mrb[0].mxu0
      %v1306 = vpop.f32.mrb[0].mxu0
      %v1307 = vadd.f32 0.0, %v1306
      %v1308 = vpop.f32.mrb[0].mxu0
      %1309 = vmatprep.mubr.bf16.mxu0 %v505
      %1310 = vmatmul.mubr.bf16.gmra.mrb[0].mxu0 %v399
      %v1311 = vpop.f32.mrb[0].mxu0
      %v1312 = vadd.f32 0.0, %v1311
      %v1313 = vpop.f32.mrb[0].mxu0
      %v1314 = vpop.f32.mrb[0].mxu0
      %v1315 = vadd.f32 0.0, %v1314
      %v1316 = vpop.f32.mrb[0].mxu0
      %1317 = vmatprep.mubr.bf16.mxu0 %v517
      %1318 = vmatmul.mubr.bf16.gmra.mrb[0].mxu0 %v400
      %v1319 = vpop.f32.mrb[0].mxu0
      %v1320 = vadd.f32 0.0, %v1319
      %v1321 = vpop.f32.mrb[0].mxu0
      %v1322 = vpop.f32.mrb[0].mxu0
      %v1323 = vadd.f32 0.0, %v1322
      %v1324 = vpop.f32.mrb[0].mxu0
      %1325 = vmatprep.mubr.bf16.mxu0 %v529
      %1326 = vmatmul.mubr.bf16.gmra.mrb[0].mxu0 %v401
      %v1327 = vpop.f32.mrb[0].mxu0
      %v1328 = vadd.f32 0.0, %v1327
      %v1329 = vpop.f32.mrb[0].mxu0
      %v1330 = vpop.f32.mrb[0].mxu0
      %v1331 = vadd.f32 0.0, %v1330
      %v1332 = vpop.f32.mrb[0].mxu0
      %1333 = vmatprep.mubr.bf16.mxu0 %v541
      %1334 = vmatmul.mubr.bf16.gmra.mrb[0].mxu0 %v402
      %v1335 = vpop.f32.mrb[0].mxu0
      %v1336 = vadd.f32 0.0, %v1335
      %v1337 = vpop.f32.mrb[0].mxu0
      %v1338 = vpop.f32.mrb[0].mxu0
      %v1339 = vadd.f32 0.0, %v1338
      %v1340 = vpop.f32.mrb[0].mxu0
      %1341 = vmatprep.mubr.bf16.mxu0 %v553
      %1342 = vmatmul.mubr.bf16.gmra.mrb[0].mxu0 %v403
      %v1343 = vpop.f32.mrb[0].mxu0
      %v1344 = vadd.f32 0.0, %v1343
      %v1345 = vpop.f32.mrb[0].mxu0
      %v1346 = vpop.f32.mrb[0].mxu0
      %v1347 = vadd.f32 0.0, %v1346
      %v1348 = vpop.f32.mrb[0].mxu0
      %1349 = vmatprep.mubr.bf16.mxu0 %v565
      %1350 = vmatmul.mubr.bf16.gmra.mrb[0].mxu0 %v404
      %v1351 = vpop.f32.mrb[0].mxu0
      %v1352 = vadd.f32 0.0, %v1351
      %v1353 = vpop.f32.mrb[0].mxu0
      %v1354 = vpop.f32.mrb[0].mxu0
      %v1355 = vadd.f32 0.0, %v1354
      %v1356 = vpop.f32.mrb[0].mxu0
      %1357 = vdwg.mxu0
      %1358 = vmatprep.subr.bf16.mxu0 0
      %1359 = vmatpush1.bf16.msra.mxu0 %v1117
      %1360 = vmatprep.subr.bf16.mxu0 0
      %1361 = vmatpush1.bf16.msra.mxu0 %v1118
      %1362 = vmatprep.subr.bf16.mxu0 0
      %1363 = vmatpush1.bf16.msra.mxu0 %v1119
      %1364 = vmatprep.subr.bf16.mxu0 0
      %1365 = vmatpush1.bf16.msra.mxu0 %v1120
      %1366 = vmatprep.subr.bf16.mxu0 0
      %1367 = vmatpush1.bf16.msra.mxu0 %v1121
      %1368 = vmatprep.subr.bf16.mxu0 0
      %1369 = vmatpush1.bf16.msra.mxu0 %v1122
      %1370 = vmatprep.subr.bf16.mxu0 0
      %1371 = vmatpush1.bf16.msra.mxu0 %v1123
      %1372 = vmatprep.subr.bf16.mxu0 0
      %1373 = vmatpush1.bf16.msra.mxu0 %v1124
      %1374 = vmatprep.subr.bf16.mxu0 0
      %1375 = vmatpush1.bf16.msra.mxu0 %v1125
      %1376 = vmatprep.subr.bf16.mxu0 0
      %1377 = vmatpush1.bf16.msra.mxu0 %v1126
      %1378 = vmatprep.subr.bf16.mxu0 0
      %1379 = vmatpush1.bf16.msra.mxu0 %v1127
      %1380 = vmatprep.subr.bf16.mxu0 0
      %1381 = vmatpush1.bf16.msra.mxu0 %v1128
      %1382 = vmatprep.subr.bf16.mxu0 0
      %1383 = vmatpush1.bf16.msra.mxu0 %v1129
      %1384 = vmatprep.subr.bf16.mxu0 0
      %1385 = vmatpush1.bf16.msra.mxu0 %v1130
      %1386 = vmatprep.subr.bf16.mxu0 0
      %1387 = vmatpush1.bf16.msra.mxu0 %v1131
      %1388 = vmatprep.subr.bf16.mxu0 0
      %1389 = vmatpush1.bf16.msra.mxu0 %v1132
      %1390 = vmatprep.mubr.bf16.mxu0 %v396
      %1391 = vmatmul.mubr.bf16.gmra.mrb[0].mxu0 %v579
      %v1392 = vpop.f32.mrb[0].mxu0
      %v1393 = vadd.f32 %v1280, %v1392
      %v1394 = vpop.f32.mrb[0].mxu0
      %v1395 = vpop.f32.mrb[0].mxu0
      %v1396 = vadd.f32 %v1283, %v1395
      %v1397 = vpop.f32.mrb[0].mxu0
      %1398 = vmatprep.mubr.bf16.mxu0 %v397
      %1399 = vmatmul.mubr.bf16.gmra.mrb[0].mxu0 %v582
      %v1400 = vpop.f32.mrb[0].mxu0
      %v1401 = vadd.f32 %v1288, %v1400
      %v1402 = vpop.f32.mrb[0].mxu0
      %v1403 = vpop.f32.mrb[0].mxu0
      %v1404 = vadd.f32 %v1291, %v1403
      %v1405 = vpop.f32.mrb[0].mxu0
      %1406 = vmatprep.mubr.bf16.mxu0 %v398
      %1407 = vmatmul.mubr.bf16.gmra.mrb[0].mxu0 %v585
      %v1408 = vpop.f32.mrb[0].mxu0
      %v1409 = vadd.f32 %v1296, %v1408
      %v1410 = vpop.f32.mrb[0].mxu0
      %v1411 = vpop.f32.mrb[0].mxu0
      %v1412 = vadd.f32 %v1299, %v1411
      %v1413 = vpop.f32.mrb[0].mxu0
      %1414 = vmatprep.mubr.bf16.mxu0 %v399
      %1415 = vmatmul.mubr.bf16.gmra.mrb[0].mxu0 %v588
      %v1416 = vpop.f32.mrb[0].mxu0
      %v1417 = vadd.f32 %v1304, %v1416
      %v1418 = vpop.f32.mrb[0].mxu0
      %v1419 = vpop.f32.mrb[0].mxu0
      %v1420 = vadd.f32 %v1307, %v1419
      %v1421 = vpop.f32.mrb[0].mxu0
      %1422 = vmatprep.mubr.bf16.mxu0 %v400
      %1423 = vmatmul.mubr.bf16.gmra.mrb[0].mxu0 %v591
      %v1424 = vpop.f32.mrb[0].mxu0
      %v1425 = vadd.f32 %v1312, %v1424
      %v1426 = vpop.f32.mrb[0].mxu0
      %v1427 = vpop.f32.mrb[0].mxu0
      %v1428 = vadd.f32 %v1315, %v1427
      %v1429 = vpop.f32.mrb[0].mxu0
      %1430 = vmatprep.mubr.bf16.mxu0 %v401
      %1431 = vmatmul.mubr.bf16.gmra.mrb[0].mxu0 %v594
      %v1432 = vpop.f32.mrb[0].mxu0
      %v1433 = vadd.f32 %v1320, %v1432
      %v1434 = vpop.f32.mrb[0].mxu0
      %v1435 = vpop.f32.mrb[0].mxu0
      %v1436 = vadd.f32 %v1323, %v1435
      %v1437 = vpop.f32.mrb[0].mxu0
      %1438 = vmatprep.mubr.bf16.mxu0 %v402
      %1439 = vmatmul.mubr.bf16.gmra.mrb[0].mxu0 %v597
      %v1440 = vpop.f32.mrb[0].mxu0
      %v1441 = vadd.f32 %v1328, %v1440
      %v1442 = vpop.f32.mrb[0].mxu0
      %v1443 = vpop.f32.mrb[0].mxu0
      %v1444 = vadd.f32 %v1331, %v1443
      %v1445 = vpop.f32.mrb[0].mxu0
      %1446 = vmatprep.mubr.bf16.mxu0 %v403
      %1447 = vmatmul.mubr.bf16.gmra.mrb[0].mxu0 %v600
      %v1448 = vpop.f32.mrb[0].mxu0
      %v1449 = vadd.f32 %v1336, %v1448
      %v1450 = vpop.f32.mrb[0].mxu0
      %v1451 = vpop.f32.mrb[0].mxu0
      %v1452 = vadd.f32 %v1339, %v1451
      %v1453 = vpop.f32.mrb[0].mxu0
      %1454 = vmatprep.mubr.bf16.mxu0 %v404
      %1455 = vmatmul.mubr.bf16.gmra.mrb[0].mxu0 %v603
      %v1456 = vpop.f32.mrb[0].mxu0
      %v1457 = vadd.f32 %v1344, %v1456
      %v1458 = vpop.f32.mrb[0].mxu0
      %v1459 = vpop.f32.mrb[0].mxu0
      %v1460 = vadd.f32 %v1347, %v1459
      %v1461 = vpop.f32.mrb[0].mxu0
      %1462 = vmatprep.mubr.bf16.mxu0 %v621
      %1463 = vmatmul.mubr.bf16.gmra.mrb[0].mxu0 %v606
      %v1464 = vpop.f32.mrb[0].mxu0
      %v1465 = vadd.f32 %v1352, %v1464
      %v1466 = vpop.f32.mrb[0].mxu0
      %v1467 = vpop.f32.mrb[0].mxu0
      %v1468 = vadd.f32 %v1355, %v1467
      %v1469 = vpop.f32.mrb[0].mxu0
      %1470 = vdwg.mxu0
      %1471 = vmatprep.subr.bf16.mxu0 0
      %1472 = vmatpush1.bf16.msra.mxu0 %v1133
      %1473 = vmatprep.subr.bf16.mxu0 0
      %1474 = vmatpush1.bf16.msra.mxu0 %v1134
      %1475 = vmatprep.subr.bf16.mxu0 0
      %1476 = vmatpush1.bf16.msra.mxu0 %v1135
      %1477 = vmatprep.subr.bf16.mxu0 0
      %1478 = vmatpush1.bf16.msra.mxu0 %v1136
      %1479 = vmatprep.subr.bf16.mxu0 0
      %1480 = vmatpush1.bf16.msra.mxu0 %v1137
      %1481 = vmatprep.subr.bf16.mxu0 0
      %1482 = vmatpush1.bf16.msra.mxu0 %v1138
      %1483 = vmatprep.subr.bf16.mxu0 0
      %1484 = vmatpush1.bf16.msra.mxu0 %v1139
      %1485 = vmatprep.subr.bf16.mxu0 0
      %1486 = vmatpush1.bf16.msra.mxu0 %v1140
      %1487 = vmatprep.subr.bf16.mxu0 0
      %1488 = vmatpush1.bf16.msra.mxu0 %v1141
      %1489 = vmatprep.subr.bf16.mxu0 0
      %1490 = vmatpush1.bf16.msra.mxu0 %v1142
      %1491 = vmatprep.subr.bf16.mxu0 0
      %1492 = vmatpush1.bf16.msra.mxu0 %v1143
      %1493 = vmatprep.subr.bf16.mxu0 0
      %1494 = vmatpush1.bf16.msra.mxu0 %v1144
      %1495 = vmatprep.subr.bf16.mxu0 0
      %1496 = vmatpush1.bf16.msra.mxu0 %v1145
      %1497 = vmatprep.subr.bf16.mxu0 0
      %1498 = vmatpush1.bf16.msra.mxu0 %v1146
      %1499 = vmatprep.subr.bf16.mxu0 0
      %1500 = vmatpush1.bf16.msra.mxu0 %v1147
      %1501 = vmatprep.subr.bf16.mxu0 0
      %1502 = vmatpush1.bf16.msra.mxu0 %v1148
      %1503 = vmatprep.mubr.bf16.mxu0 %v582
      %1504 = vmatmul.mubr.bf16.gmra.mrb[0].mxu0 %v469
      %v1505 = vpop.f32.mrb[0].mxu0
      %v1506 = vadd.f32 %v1393, %v1505
      %v1507 = vpop.f32.mrb[0].mxu0
      %v1508 = vpop.f32.mrb[0].mxu0
      %v1509 = vadd.f32 %v1396, %v1508
      %v1510 = vpop.f32.mrb[0].mxu0
      %1511 = vmatprep.mubr.bf16.mxu0 %v585
      %1512 = vmatmul.mubr.bf16.gmra.mrb[0].mxu0 %v481
      %v1513 = vpop.f32.mrb[0].mxu0
      %v1514 = vadd.f32 %v1401, %v1513
      %v1515 = vpop.f32.mrb[0].mxu0
      %v1516 = vpop.f32.mrb[0].mxu0
      %v1517 = vadd.f32 %v1404, %v1516
      %v1518 = vpop.f32.mrb[0].mxu0
      %1519 = vmatprep.mubr.bf16.mxu0 %v588
      %1520 = vmatmul.mubr.bf16.gmra.mrb[0].mxu0 %v493
      %v1521 = vpop.f32.mrb[0].mxu0
      %v1522 = vadd.f32 %v1409, %v1521
      %v1523 = vpop.f32.mrb[0].mxu0
      %v1524 = vpop.f32.mrb[0].mxu0
      %v1525 = vadd.f32 %v1412, %v1524
      %v1526 = vpop.f32.mrb[0].mxu0
      %1527 = vmatprep.mubr.bf16.mxu0 %v591
      %1528 = vmatmul.mubr.bf16.gmra.mrb[0].mxu0 %v505
      %v1529 = vpop.f32.mrb[0].mxu0
      %v1530 = vadd.f32 %v1417, %v1529
      %v1531 = vpop.f32.mrb[0].mxu0
      %v1532 = vpop.f32.mrb[0].mxu0
      %v1533 = vadd.f32 %v1420, %v1532
      %v1534 = vpop.f32.mrb[0].mxu0
      %1535 = vmatprep.mubr.bf16.mxu0 %v594
      %1536 = vmatmul.mubr.bf16.gmra.mrb[0].mxu0 %v517
      %v1537 = vpop.f32.mrb[0].mxu0
      %v1538 = vadd.f32 %v1425, %v1537
      %v1539 = vpop.f32.mrb[0].mxu0
      %v1540 = vpop.f32.mrb[0].mxu0
      %v1541 = vadd.f32 %v1428, %v1540
      %v1542 = vpop.f32.mrb[0].mxu0
      %1543 = vmatprep.mubr.bf16.mxu0 %v597
      %1544 = vmatmul.mubr.bf16.gmra.mrb[0].mxu0 %v529
      %v1545 = vpop.f32.mrb[0].mxu0
      %v1546 = vadd.f32 %v1433, %v1545
      %v1547 = vpop.f32.mrb[0].mxu0
      %v1548 = vpop.f32.mrb[0].mxu0
      %v1549 = vadd.f32 %v1436, %v1548
      %v1550 = vpop.f32.mrb[0].mxu0
      %1551 = vmatprep.mubr.bf16.mxu0 %v600
      %1552 = vmatmul.mubr.bf16.gmra.mrb[0].mxu0 %v541
      %v1553 = vpop.f32.mrb[0].mxu0
      %v1554 = vadd.f32 %v1441, %v1553
      %v1555 = vpop.f32.mrb[0].mxu0
      %v1556 = vpop.f32.mrb[0].mxu0
      %v1557 = vadd.f32 %v1444, %v1556
      %v1558 = vpop.f32.mrb[0].mxu0
      %1559 = vmatprep.mubr.bf16.mxu0 %v603
      %1560 = vmatmul.mubr.bf16.gmra.mrb[0].mxu0 %v553
      %v1561 = vpop.f32.mrb[0].mxu0
      %v1562 = vadd.f32 %v1449, %v1561
      %v1563 = vpop.f32.mrb[0].mxu0
      %v1564 = vpop.f32.mrb[0].mxu0
      %v1565 = vadd.f32 %v1452, %v1564
      %v1566 = vpop.f32.mrb[0].mxu0
      %1567 = vmatprep.mubr.bf16.mxu0 %v606
      %1568 = vmatmul.mubr.bf16.gmra.mrb[0].mxu0 %v565
      %v1569 = vpop.f32.mrb[0].mxu0
      %v1570 = vadd.f32 %v1457, %v1569
      %v1571 = vpop.f32.mrb[0].mxu0
      %v1572 = vpop.f32.mrb[0].mxu0
      %v1573 = vadd.f32 %v1460, %v1572
      %v1574 = vpop.f32.mrb[0].mxu0
      %1575 = vmatprep.mubr.bf16.mxu0 %v641
      %1576 = vmatmul.mubr.bf16.gmra.mrb[0].mxu0 %v637
      %v1577 = vpop.f32.mrb[0].mxu0
      %v1578 = vadd.f32 %v1465, %v1577
      %v1579 = vpop.f32.mrb[0].mxu0
      %v1580 = vpop.f32.mrb[0].mxu0
      %v1581 = vadd.f32 %v1468, %v1580
      %v1582 = vpop.f32.mrb[0].mxu0
      %1583 = vdwg.mxu0
      %1584 = vmatprep.subr.bf16.mxu0 0
      %1585 = vmatpush1.bf16.msra.mxu0 %v1149
      %1586 = vmatprep.subr.bf16.mxu0 0
      %1587 = vmatpush1.bf16.msra.mxu0 %v1150
      %1588 = vmatprep.subr.bf16.mxu0 0
      %1589 = vmatpush1.bf16.msra.mxu0 %v1151
      %1590 = vmatprep.subr.bf16.mxu0 0
      %1591 = vmatpush1.bf16.msra.mxu0 %v1152
      %1592 = vmatprep.subr.bf16.mxu0 0
      %1593 = vmatpush1.bf16.msra.mxu0 %v1153
      %1594 = vmatprep.subr.bf16.mxu0 0
      %1595 = vmatpush1.bf16.msra.mxu0 %v1154
      %1596 = vmatprep.subr.bf16.mxu0 0
      %1597 = vmatpush1.bf16.msra.mxu0 %v1155
      %1598 = vmatprep.subr.bf16.mxu0 0
      %1599 = vmatpush1.bf16.msra.mxu0 %v1156
      %1600 = vmatprep.subr.bf16.mxu0 0
      %1601 = vmatpush1.bf16.msra.mxu0 %v1157
      %1602 = vmatprep.subr.bf16.mxu0 0
      %1603 = vmatpush1.bf16.msra.mxu0 %v1158
      %1604 = vmatprep.subr.bf16.mxu0 0
      %1605 = vmatpush1.bf16.msra.mxu0 %v1159
      %1606 = vmatprep.subr.bf16.mxu0 0
      %1607 = vmatpush1.bf16.msra.mxu0 %v1160
      %1608 = vmatprep.subr.bf16.mxu0 0
      %1609 = vmatpush1.bf16.msra.mxu0 %v1161
      %1610 = vmatprep.subr.bf16.mxu0 0
      %1611 = vmatpush1.bf16.msra.mxu0 %v1162
      %1612 = vmatprep.subr.bf16.mxu0 0
      %1613 = vmatpush1.bf16.msra.mxu0 %v1163
      %1614 = vmatprep.subr.bf16.mxu0 0
      %1615 = vmatpush1.bf16.msra.mxu0 %v1164
      %1616 = vmatprep.mubr.bf16.mxu0 %v481
      %1617 = vmatmul.mubr.bf16.gmra.mrb[0].mxu0 %v397
      %v1618 = vpop.f32.mrb[0].mxu0
      %v1619 = vadd.f32 %v1506, %v1618
      %v1620 = vpop.f32.mrb[0].mxu0
      %v1621 = vpop.f32.mrb[0].mxu0
      %v1622 = vadd.f32 %v1509, %v1621
      %v1623 = vpop.f32.mrb[0].mxu0
      %1624 = vmatprep.mubr.bf16.mxu0 %v493
      %1625 = vmatmul.mubr.bf16.gmra.mrb[0].mxu0 %v398
      %v1626 = vpop.f32.mrb[0].mxu0
      %v1627 = vadd.f32 %v1514, %v1626
      %v1628 = vpop.f32.mrb[0].mxu0
      %v1629 = vpop.f32.mrb[0].mxu0
      %v1630 = vadd.f32 %v1517, %v1629
      %v1631 = vpop.f32.mrb[0].mxu0
      %1632 = vmatprep.mubr.bf16.mxu0 %v505
      %1633 = vmatmul.mubr.bf16.gmra.mrb[0].mxu0 %v399
      %v1634 = vpop.f32.mrb[0].mxu0
      %v1635 = vadd.f32 %v1522, %v1634
      %v1636 = vpop.f32.mrb[0].mxu0
      %v1637 = vpop.f32.mrb[0].mxu0
      %v1638 = vadd.f32 %v1525, %v1637
      %v1639 = vpop.f32.mrb[0].mxu0
      %1640 = vmatprep.mubr.bf16.mxu0 %v517
      %1641 = vmatmul.mubr.bf16.gmra.mrb[0].mxu0 %v400
      %v1642 = vpop.f32.mrb[0].mxu0
      %v1643 = vadd.f32 %v1530, %v1642
      %v1644 = vpop.f32.mrb[0].mxu0
      %v1645 = vpop.f32.mrb[0].mxu0
      %v1646 = vadd.f32 %v1533, %v1645
      %v1647 = vpop.f32.mrb[0].mxu0
      %1648 = vmatprep.mubr.bf16.mxu0 %v529
      %1649 = vmatmul.mubr.bf16.gmra.mrb[0].mxu0 %v401
      %v1650 = vpop.f32.mrb[0].mxu0
      %v1651 = vadd.f32 %v1538, %v1650
      %v1652 = vpop.f32.mrb[0].mxu0
      %v1653 = vpop.f32.mrb[0].mxu0
      %v1654 = vadd.f32 %v1541, %v1653
      %v1655 = vpop.f32.mrb[0].mxu0
      %1656 = vmatprep.mubr.bf16.mxu0 %v541
      %1657 = vmatmul.mubr.bf16.gmra.mrb[0].mxu0 %v402
      %v1658 = vpop.f32.mrb[0].mxu0
      %v1659 = vadd.f32 %v1546, %v1658
      %v1660 = vpop.f32.mrb[0].mxu0
      %v1661 = vpop.f32.mrb[0].mxu0
      %v1662 = vadd.f32 %v1549, %v1661
      %v1663 = vpop.f32.mrb[0].mxu0
      %1664 = vmatprep.mubr.bf16.mxu0 %v553
      %1665 = vmatmul.mubr.bf16.gmra.mrb[0].mxu0 %v403
      %v1666 = vpop.f32.mrb[0].mxu0
      %v1667 = vadd.f32 %v1554, %v1666
      %v1668 = vpop.f32.mrb[0].mxu0
      %v1669 = vpop.f32.mrb[0].mxu0
      %v1670 = vadd.f32 %v1557, %v1669
      %v1671 = vpop.f32.mrb[0].mxu0
      %1672 = vmatprep.mubr.bf16.mxu0 %v565
      %1673 = vmatmul.mubr.bf16.gmra.mrb[0].mxu0 %v404
      %v1674 = vpop.f32.mrb[0].mxu0
      %v1675 = vadd.f32 %v1562, %v1674
      %v1676 = vpop.f32.mrb[0].mxu0
      %v1677 = vpop.f32.mrb[0].mxu0
      %v1678 = vadd.f32 %v1565, %v1677
      %v1679 = vpop.f32.mrb[0].mxu0
      %1680 = vmatprep.mubr.bf16.mxu0 %v637
      %1681 = vmatmul.mubr.bf16.gmra.mrb[0].mxu0 %v621
      %v1682 = vpop.f32.mrb[0].mxu0
      %v1683 = vadd.f32 %v1570, %v1682
      %v1684 = vpop.f32.mrb[0].mxu0
      %v1685 = vpop.f32.mrb[0].mxu0
      %v1686 = vadd.f32 %v1573, %v1685
      %v1687 = vpop.f32.mrb[0].mxu0
      %1688 = vmatprep.mubr.bf16.mxu0 %v663
      %1689 = vmatmul.mubr.bf16.gmra.mrb[0].mxu0 %v647
      %v1690 = vpop.f32.mrb[0].mxu0
      %v1691 = vadd.f32 %v1578, %v1690
      %v1692 = vpop.f32.mrb[0].mxu0
      %v1693 = vpop.f32.mrb[0].mxu0
      %v1694 = vadd.f32 %v1581, %v1693
      %v1695 = vpop.f32.mrb[0].mxu0
      %1696 = vdwg.mxu0
      %1697 = vmatprep.subr.bf16.mxu0 0
      %1698 = vmatpush1.bf16.msra.mxu0 %v1165
      %1699 = vmatprep.subr.bf16.mxu0 0
      %1700 = vmatpush1.bf16.msra.mxu0 %v1166
      %1701 = vmatprep.subr.bf16.mxu0 0
      %1702 = vmatpush1.bf16.msra.mxu0 %v1167
      %1703 = vmatprep.subr.bf16.mxu0 0
      %1704 = vmatpush1.bf16.msra.mxu0 %v1168
      %1705 = vmatprep.subr.bf16.mxu0 0
      %1706 = vmatpush1.bf16.msra.mxu0 %v1169
      %1707 = vmatprep.subr.bf16.mxu0 0
      %1708 = vmatpush1.bf16.msra.mxu0 %v1170
      %1709 = vmatprep.subr.bf16.mxu0 0
      %1710 = vmatpush1.bf16.msra.mxu0 %v1171
      %1711 = vmatprep.subr.bf16.mxu0 0
      %1712 = vmatpush1.bf16.msra.mxu0 %v1172
      %1713 = vmatprep.subr.bf16.mxu0 0
      %1714 = vmatpush1.bf16.msra.mxu0 0
      %1715 = vmatprep.subr.bf16.mxu0 0
      %1716 = vmatpush1.bf16.msra.mxu0 0
      %1717 = vmatprep.subr.bf16.mxu0 0
      %1718 = vmatpush1.bf16.msra.mxu0 0
      %1719 = vmatprep.subr.bf16.mxu0 0
      %1720 = vmatpush1.bf16.msra.mxu0 0
      %1721 = vmatprep.subr.bf16.mxu0 0
      %1722 = vmatpush1.bf16.msra.mxu0 0
      %1723 = vmatprep.subr.bf16.mxu0 0
      %1724 = vmatpush1.bf16.msra.mxu0 0
      %1725 = vmatprep.subr.bf16.mxu0 0
      %1726 = vmatpush1.bf16.msra.mxu0 0
      %1727 = vmatprep.subr.bf16.mxu0 0
      %1728 = vmatpush1.bf16.msra.mxu0 0
      %1729 = vmatprep.mubr.bf16.mxu0 0
      %1730 = vmatmul.mubr.bf16.gmra.mrb[0].mxu0 %v585
      %v1731 = vpop.f32.mrb[0].mxu0
      %v1732 = vadd.f32 %v1619, %v1731
      %v1733 = vpop.f32.mrb[0].mxu0
      %v1734 = vpop.f32.mrb[0].mxu0
      %v1735 = vadd.f32 %v1622, %v1734
      %v1736 = vpop.f32.mrb[0].mxu0
      %1737 = vmatprep.mubr.bf16.mxu0 0
      %1738 = vmatmul.mubr.bf16.gmra.mrb[0].mxu0 %v588
      %v1739 = vpop.f32.mrb[0].mxu0
      %v1740 = vadd.f32 %v1627, %v1739
      %v1741 = vpop.f32.mrb[0].mxu0
      %v1742 = vpop.f32.mrb[0].mxu0
      %v1743 = vadd.f32 %v1630, %v1742
      %v1744 = vpop.f32.mrb[0].mxu0
      %1745 = vmatprep.mubr.bf16.mxu0 0
      %1746 = vmatmul.mubr.bf16.gmra.mrb[0].mxu0 %v591
      %v1747 = vpop.f32.mrb[0].mxu0
      %v1748 = vadd.f32 %v1635, %v1747
      %v1749 = vpop.f32.mrb[0].mxu0
      %v1750 = vpop.f32.mrb[0].mxu0
      %v1751 = vadd.f32 %v1638, %v1750
      %v1752 = vpop.f32.mrb[0].mxu0
      %1753 = vmatprep.mubr.bf16.mxu0 0
      %1754 = vmatmul.mubr.bf16.gmra.mrb[0].mxu0 %v594
      %v1755 = vpop.f32.mrb[0].mxu0
      %v1756 = vadd.f32 %v1643, %v1755
      %v1757 = vpop.f32.mrb[0].mxu0
      %v1758 = vpop.f32.mrb[0].mxu0
      %v1759 = vadd.f32 %v1646, %v1758
      %v1760 = vpop.f32.mrb[0].mxu0
      %1761 = vmatprep.mubr.bf16.mxu0 0
      %1762 = vmatmul.mubr.bf16.gmra.mrb[0].mxu0 %v597
      %v1763 = vpop.f32.mrb[0].mxu0
      %v1764 = vadd.f32 %v1651, %v1763
      %v1765 = vpop.f32.mrb[0].mxu0
      %v1766 = vpop.f32.mrb[0].mxu0
      %v1767 = vadd.f32 %v1654, %v1766
      %v1768 = vpop.f32.mrb[0].mxu0
      %1769 = vmatprep.mubr.bf16.mxu0 0
      %1770 = vmatmul.mubr.bf16.gmra.mrb[0].mxu0 %v600
      %v1771 = vpop.f32.mrb[0].mxu0
      %v1772 = vadd.f32 %v1659, %v1771
      %v1773 = vpop.f32.mrb[0].mxu0
      %v1774 = vpop.f32.mrb[0].mxu0
      %v1775 = vadd.f32 %v1662, %v1774
      %v1776 = vpop.f32.mrb[0].mxu0
      %1777 = vmatprep.mubr.bf16.mxu0 0
      %1778 = vmatmul.mubr.bf16.gmra.mrb[0].mxu0 %v603
      %v1779 = vpop.f32.mrb[0].mxu0
      %v1780 = vadd.f32 %v1667, %v1779
      %v1781 = vpop.f32.mrb[0].mxu0
      %v1782 = vpop.f32.mrb[0].mxu0
      %v1783 = vadd.f32 %v1670, %v1782
      %v1784 = vpop.f32.mrb[0].mxu0
      %1785 = vmatprep.mubr.bf16.mxu0 0
      %1786 = vmatmul.mubr.bf16.gmra.mrb[0].mxu0 %v606
      %v1787 = vpop.f32.mrb[0].mxu0
      %v1788 = vadd.f32 %v1675, %v1787
      %v1789 = vpop.f32.mrb[0].mxu0
      %v1790 = vpop.f32.mrb[0].mxu0
      %v1791 = vadd.f32 %v1678, %v1790
      %v1792 = vpop.f32.mrb[0].mxu0
      %1793 = vmatprep.mubr.bf16.mxu0 0
      %1794 = vmatmul.mubr.bf16.gmra.mrb[0].mxu0 %v641
      %v1795 = vpop.f32.mrb[0].mxu0
      %v1796 = vadd.f32 %v1683, %v1795
      %v1797 = vpop.f32.mrb[0].mxu0
      %v1798 = vpop.f32.mrb[0].mxu0
      %v1799 = vadd.f32 %v1686, %v1798
      %v1800 = vpop.f32.mrb[0].mxu0
      %1801 = vmatprep.mubr.bf16.mxu0 0
      %1802 = vmatmul.mubr.bf16.gmra.mrb[0].mxu0 %v667
      %v1803 = vpop.f32.mrb[0].mxu0
      %v1804 = vadd.f32 %v1691, %v1803
      %v1805 = vpop.f32.mrb[0].mxu0
      %v1806 = vpop.f32.mrb[0].mxu0
      %v1807 = vadd.f32 %v1694, %v1806
      %v1808 = vpop.f32.mrb[0].mxu0
      %1809 = vdwg.mxu0
      %v1810 = vld [vmem:[%s2] sm:$0x1]
      %v1812 = vlaneseq
      %v1813 = vshrl.u32 %v1812, 7
      %v1814 = vsub.s32 0, %v1813
      %v1815 = vrot.slane %v1810, %v1814
      %v1817 = vmul.f32 %v1732, %v1815
      %v1818 = vmul.f32 %v1735, %v1815
      %v1819 = vmul.f32 %v1740, %v1815
      %v1820 = vmul.f32 %v1743, %v1815
      %v1821 = vmul.f32 %v1748, %v1815
      %v1822 = vmul.f32 %v1751, %v1815
      %v1823 = vmul.f32 %v1756, %v1815
      %v1824 = vmul.f32 %v1759, %v1815
      %v1825 = vmul.f32 %v1764, %v1815
      %v1826 = vmul.f32 %v1767, %v1815
      %v1827 = vmul.f32 %v1772, %v1815
      %v1828 = vmul.f32 %v1775, %v1815
      %v1829 = vmul.f32 %v1780, %v1815
      %v1830 = vmul.f32 %v1783, %v1815
      %v1831 = vmul.f32 %v1788, %v1815
      %v1832 = vmul.f32 %v1791, %v1815
      %v1833 = vmul.f32 %v1796, %v1815
      %v1834 = vmul.f32 %v1799, %v1815
      %v1835 = vmul.f32 %v1804, %v1815
      %v1836 = vmul.f32 %v1807, %v1815
      %v1837 = vld [vmem:[%s3] sm:$0x1]
      %v1839 = vlaneseq
      %v1840 = vshrl.u32 %v1839, 7
      %v1841 = vsub.s32 0, %v1840
      %v1842 = vrot.slane %v1837, %v1841
      %v1844 = vadd.f32 %v1817, %v1842
      %v1845 = vadd.f32 %v1818, %v1842
      %v1846 = vadd.f32 %v1819, %v1842
      %v1847 = vadd.f32 %v1820, %v1842
      %v1848 = vadd.f32 %v1821, %v1842
      %v1849 = vadd.f32 %v1822, %v1842
      %v1850 = vadd.f32 %v1823, %v1842
      %v1851 = vadd.f32 %v1824, %v1842
      %v1852 = vadd.f32 %v1825, %v1842
      %v1853 = vadd.f32 %v1826, %v1842
      %v1854 = vadd.f32 %v1827, %v1842
      %v1855 = vadd.f32 %v1828, %v1842
      %v1856 = vadd.f32 %v1829, %v1842
      %v1857 = vadd.f32 %v1830, %v1842
      %v1858 = vadd.f32 %v1831, %v1842
      %v1859 = vadd.f32 %v1832, %v1842
      %v1860 = vadd.f32 %v1833, %v1842
      %v1861 = vadd.f32 %v1834, %v1842
      %v1862 = vadd.f32 %v1835, %v1842
      %v1863 = vadd.f32 %v1836, %v1842
      %v1864 = vmax.f32 %v1844, 0.0
      %v1865 = vmax.f32 %v1845, 0.0
      %v1866 = vmax.f32 %v1846, 0.0
      %v1867 = vmax.f32 %v1847, 0.0
      %v1868 = vmax.f32 %v1848, 0.0
      %v1869 = vmax.f32 %v1849, 0.0
      %v1870 = vmax.f32 %v1850, 0.0
      %v1871 = vmax.f32 %v1851, 0.0
      %v1872 = vmax.f32 %v1852, 0.0
      %v1873 = vmax.f32 %v1853, 0.0
      %v1874 = vmax.f32 %v1854, 0.0
      %v1875 = vmax.f32 %v1855, 0.0
      %v1876 = vmax.f32 %v1856, 0.0
      %v1877 = vmax.f32 %v1857, 0.0
      %v1878 = vmax.f32 %v1858, 0.0
      %v1879 = vmax.f32 %v1859, 0.0
      %v1880 = vmax.f32 %v1860, 0.0
      %v1881 = vmax.f32 %v1861, 0.0
      %v1882 = vmax.f32 %v1862, 0.0
      %v1883 = vmax.f32 %v1863, 0.0
      %s1884 = smul.u32 %s23, 8
      %s1885 = ssub.s32 %s1884, 1
      %v1886 = vstv %s1885
      %v1887 = vadd.s32 %v1886, 1
      %v1888 = vadd.s32 %v1886, 2
      %v1889 = vadd.s32 %v1886, 3
      %v1890 = vadd.s32 %v1886, 4
      %v1891 = vadd.s32 %v1886, 5
      %v1892 = vadd.s32 %v1886, 6
      %v1893 = vadd.s32 %v1886, 7
      %v1894 = vadd.s32 %v1886, 8
      %v1895 = vadd.s32 %v1886, 9
      %vm1896 = vcmp.ge.s32.totalorder %v1886, 0
      %vm1897 = vcmp.ge.s32.totalorder %v1887, 0
      %vm1898 = vcmp.ge.s32.totalorder %v1888, 0
      %vm1899 = vcmp.ge.s32.totalorder %v1889, 0
      %vm1900 = vcmp.ge.s32.totalorder %v1890, 0
      %vm1901 = vcmp.ge.s32.totalorder %v1891, 0
      %vm1902 = vcmp.ge.s32.totalorder %v1892, 0
      %vm1903 = vcmp.ge.s32.totalorder %v1893, 0
      %vm1904 = vcmp.ge.s32.totalorder %v1894, 0
      %vm1905 = vcmp.ge.s32.totalorder %v1895, 0
      %vm1906 = vcmp.lt.s32.totalorder %v1886, 16
      %vm1907 = vcmp.lt.s32.totalorder %v1887, 16
      %vm1908 = vcmp.lt.s32.totalorder %v1888, 16
      %vm1909 = vcmp.lt.s32.totalorder %v1889, 16
      %vm1910 = vcmp.lt.s32.totalorder %v1890, 16
      %vm1911 = vcmp.lt.s32.totalorder %v1891, 16
      %vm1912 = vcmp.lt.s32.totalorder %v1892, 16
      %vm1913 = vcmp.lt.s32.totalorder %v1893, 16
      %vm1914 = vcmp.lt.s32.totalorder %v1894, 16
      %vm1915 = vcmp.lt.s32.totalorder %v1895, 16
      %vm1916 = vmand %vm1896, %vm1906
      %vm1917 = vmand %vm1897, %vm1907
      %vm1918 = vmand %vm1898, %vm1908
      %vm1919 = vmand %vm1899, %vm1909
      %vm1920 = vmand %vm1900, %vm1910
      %vm1921 = vmand %vm1901, %vm1911
      %vm1922 = vmand %vm1902, %vm1912
      %vm1923 = vmand %vm1903, %vm1913
      %vm1924 = vmand %vm1904, %vm1914
      %vm1925 = vmand %vm1905, %vm1915
      %v1926 = vsel %vm1916, 1, 0
      %v1927 = vsel %vm1917, 1, 0
      %v1928 = vsel %vm1918, 1, 0
      %v1929 = vsel %vm1919, 1, 0
      %v1930 = vsel %vm1920, 1, 0
      %v1931 = vsel %vm1921, 1, 0
      %v1932 = vsel %vm1922, 1, 0
      %v1933 = vsel %vm1923, 1, 0
      %v1934 = vsel %vm1924, 1, 0
      %v1935 = vsel %vm1925, 1, 0
      %vm1936 = vcmp.eq.s32.totalorder %v1926, 1
      %vm1937 = vcmp.eq.s32.totalorder %v1927, 1
      %vm1938 = vcmp.eq.s32.totalorder %v1928, 1
      %vm1939 = vcmp.eq.s32.totalorder %v1929, 1
      %vm1940 = vcmp.eq.s32.totalorder %v1930, 1
      %vm1941 = vcmp.eq.s32.totalorder %v1931, 1
      %vm1942 = vcmp.eq.s32.totalorder %v1932, 1
      %vm1943 = vcmp.eq.s32.totalorder %v1933, 1
      %vm1944 = vcmp.eq.s32.totalorder %v1934, 1
      %vm1945 = vcmp.eq.s32.totalorder %v1935, 1
      %v1946 = vsel %vm1936, %v1864, 0.0
      %v1947 = vsel %vm1936, %v1865, 0.0
      %v1948 = vsel %vm1937, %v1866, 0.0
      %v1949 = vsel %vm1937, %v1867, 0.0
      %v1950 = vsel %vm1938, %v1868, 0.0
      %v1951 = vsel %vm1938, %v1869, 0.0
      %v1952 = vsel %vm1939, %v1870, 0.0
      %v1953 = vsel %vm1939, %v1871, 0.0
      %v1954 = vsel %vm1940, %v1872, 0.0
      %v1955 = vsel %vm1940, %v1873, 0.0
      %v1956 = vsel %vm1941, %v1874, 0.0
      %v1957 = vsel %vm1941, %v1875, 0.0
      %v1958 = vsel %vm1942, %v1876, 0.0
      %v1959 = vsel %vm1942, %v1877, 0.0
      %v1960 = vsel %vm1943, %v1878, 0.0
      %v1961 = vsel %vm1943, %v1879, 0.0
      %v1962 = vsel %vm1944, %v1880, 0.0
      %v1963 = vsel %vm1944, %v1881, 0.0
      %v1964 = vsel %vm1945, %v1882, 0.0
      %v1965 = vsel %vm1945, %v1883, 0.0
      %v1966 = vpack.c.bf16 %v1947, %v1946
      %v1967 = vpack.c.bf16 %v1949, %v1948
      %v1968 = vpack.c.bf16 %v1951, %v1950
      %v1969 = vpack.c.bf16 %v1953, %v1952
      %v1970 = vpack.c.bf16 %v1955, %v1954
      %v1971 = vpack.c.bf16 %v1957, %v1956
      %v1972 = vpack.c.bf16 %v1959, %v1958
      %v1973 = vpack.c.bf16 %v1961, %v1960
      %v1974 = vpack.c.bf16 %v1963, %v1962
      %v1975 = vpack.c.bf16 %v1965, %v1964
      %v1986 = vunpack.c.l.b16 %v1966
      %v1987 = vunpack.c.h.b16 %v1966
      %v1988 = vunpack.c.l.b16 %v1967
      %v1989 = vunpack.c.h.b16 %v1967
      %v1990 = vunpack.c.l.b16 %v1968
      %v1991 = vunpack.c.h.b16 %v1968
      %v1992 = vunpack.c.l.b16 %v1969
      %v1993 = vunpack.c.h.b16 %v1969
      %v1994 = vunpack.c.l.b16 %v1970
      %v1995 = vunpack.c.h.b16 %v1970
      %v1996 = vunpack.c.l.b16 %v1971
      %v1997 = vunpack.c.h.b16 %v1971
      %v1998 = vunpack.c.l.b16 %v1972
      %v1999 = vunpack.c.h.b16 %v1972
      %v2000 = vunpack.c.l.b16 %v1973
      %v2001 = vunpack.c.h.b16 %v1973
      %v2002 = vunpack.c.l.b16 %v1974
      %v2003 = vunpack.c.h.b16 %v1974
      %v2004 = vunpack.c.l.b16 %v1975
      %v2005 = vunpack.c.h.b16 %v1975
      %v2006 = vpack.c.b16 %v1986, %v1986
      %v2007 = vpack.c.b16 %v1987, %v1987
      %v2008 = vpack.c.b16 %v1988, %v1988
      %v2009 = vpack.c.b16 %v1989, %v1989
      %v2010 = vpack.c.b16 %v1990, %v1990
      %v2011 = vpack.c.b16 %v1991, %v1991
      %v2012 = vpack.c.b16 %v1992, %v1992
      %v2013 = vpack.c.b16 %v1993, %v1993
      %v2014 = vpack.c.b16 %v1994, %v1994
      %v2015 = vpack.c.b16 %v1995, %v1995
      %v2016 = vpack.c.b16 %v1996, %v1996
      %v2017 = vpack.c.b16 %v1997, %v1997
      %v2018 = vpack.c.b16 %v1998, %v1998
      %v2019 = vpack.c.b16 %v1999, %v1999
      %v2020 = vpack.c.b16 %v2000, %v2000
      %v2021 = vpack.c.b16 %v2001, %v2001
      %v2022 = vpack.c.b16 %v2002, %v2002
      %v2023 = vpack.c.b16 %v2003, %v2003
      %v2024 = vpack.c.b16 %v2004, %v2004
      %v2025 = vpack.c.b16 %v2005, %v2005
      %vm2026 = vsmask.f32 256
      %vm2027 = vsmask.f32 4368
      %vm2028 = vmor %vm2026, %vm2027
      %v2030 = vshrl.u32 %v2006, 16
      %v2032 = vrot.slane %v2030, 7
      %v2033 = vshll.u32 %v2006, 16
      %v2035 = vor.u32 %v2032, %v2033
      %v2036 = vrot.slane %v2032, 4
      %v2038 = vshrl.u32 %v2007, 16
      %v2040 = vrot.slane %v2038, 7
      %v2041 = vshll.u32 %v2007, 16
      %v2043 = vor.u32 %v2040, %v2041
      %v2044 = vsel %vm2028, %v2036, %v2043
      %v2045 = vrot.slane %v2040, 4
      %v2047 = vshrl.u32 %v2008, 16
      %v2049 = vrot.slane %v2047, 7
      %v2050 = vshll.u32 %v2008, 16
      %v2052 = vor.u32 %v2049, %v2050
      %v2053 = vrot.slane %v2049, 4
      %v2055 = vshrl.u32 %v2009, 16
      %v2057 = vrot.slane %v2055, 7
      %v2058 = vshll.u32 %v2009, 16
      %v2060 = vor.u32 %v2057, %v2058
      %v2061 = vsel %vm2028, %v2053, %v2060
      %v2062 = vrot.slane %v2057, 4
      %v2064 = vshrl.u32 %v2010, 16
      %v2066 = vrot.slane %v2064, 7
      %v2067 = vshll.u32 %v2010, 16
      %v2069 = vor.u32 %v2066, %v2067
      %v2070 = vrot.slane %v2066, 4
      %v2072 = vshrl.u32 %v2011, 16
      %v2074 = vrot.slane %v2072, 7
      %v2075 = vshll.u32 %v2011, 16
      %v2077 = vor.u32 %v2074, %v2075
      %v2078 = vsel %vm2028, %v2070, %v2077
      %v2079 = vrot.slane %v2074, 4
      %v2081 = vshrl.u32 %v2012, 16
      %v2083 = vrot.slane %v2081, 7
      %v2084 = vshll.u32 %v2012, 16
      %v2086 = vor.u32 %v2083, %v2084
      %v2087 = vrot.slane %v2083, 4
      %v2089 = vshrl.u32 %v2013, 16
      %v2091 = vrot.slane %v2089, 7
      %v2092 = vshll.u32 %v2013, 16
      %v2094 = vor.u32 %v2091, %v2092
      %v2095 = vsel %vm2028, %v2087, %v2094
      %v2096 = vrot.slane %v2091, 4
      %v2098 = vshrl.u32 %v2014, 16
      %v2100 = vrot.slane %v2098, 7
      %v2101 = vshll.u32 %v2014, 16
      %v2103 = vor.u32 %v2100, %v2101
      %v2104 = vrot.slane %v2100, 4
      %v2106 = vshrl.u32 %v2015, 16
      %v2108 = vrot.slane %v2106, 7
      %v2109 = vshll.u32 %v2015, 16
      %v2111 = vor.u32 %v2108, %v2109
      %v2112 = vsel %vm2028, %v2104, %v2111
      %v2113 = vrot.slane %v2108, 4
      %v2115 = vshrl.u32 %v2016, 16
      %v2117 = vrot.slane %v2115, 7
      %v2118 = vshll.u32 %v2016, 16
      %v2120 = vor.u32 %v2117, %v2118
      %v2121 = vrot.slane %v2117, 4
      %v2123 = vshrl.u32 %v2017, 16
      %v2125 = vrot.slane %v2123, 7
      %v2126 = vshll.u32 %v2017, 16
      %v2128 = vor.u32 %v2125, %v2126
      %v2129 = vsel %vm2028, %v2121, %v2128
      %v2130 = vrot.slane %v2125, 4
      %v2132 = vshrl.u32 %v2018, 16
      %v2134 = vrot.slane %v2132, 7
      %v2135 = vshll.u32 %v2018, 16
      %v2137 = vor.u32 %v2134, %v2135
      %v2138 = vrot.slane %v2134, 4
      %v2140 = vshrl.u32 %v2019, 16
      %v2142 = vrot.slane %v2140, 7
      %v2143 = vshll.u32 %v2019, 16
      %v2145 = vor.u32 %v2142, %v2143
      %v2146 = vsel %vm2028, %v2138, %v2145
      %v2147 = vrot.slane %v2142, 4
      %v2149 = vshrl.u32 %v2020, 16
      %v2151 = vrot.slane %v2149, 7
      %v2152 = vshll.u32 %v2020, 16
      %v2154 = vor.u32 %v2151, %v2152
      %v2155 = vrot.slane %v2151, 4
      %v2157 = vshrl.u32 %v2021, 16
      %v2159 = vrot.slane %v2157, 7
      %v2160 = vshll.u32 %v2021, 16
      %v2162 = vor.u32 %v2159, %v2160
      %v2163 = vsel %vm2028, %v2155, %v2162
      %v2164 = vrot.slane %v2159, 4
      %v2166 = vshrl.u32 %v2022, 16
      %v2168 = vrot.slane %v2166, 7
      %v2169 = vshll.u32 %v2022, 16
      %v2171 = vor.u32 %v2168, %v2169
      %v2172 = vrot.slane %v2168, 4
      %v2174 = vshrl.u32 %v2023, 16
      %v2176 = vrot.slane %v2174, 7
      %v2177 = vshll.u32 %v2023, 16
      %v2179 = vor.u32 %v2176, %v2177
      %v2180 = vsel %vm2028, %v2172, %v2179
      %v2181 = vrot.slane %v2176, 4
      %v2183 = vshrl.u32 %v2024, 16
      %v2185 = vrot.slane %v2183, 7
      %v2186 = vshll.u32 %v2024, 16
      %v2188 = vor.u32 %v2185, %v2186
      %v2189 = vrot.slane %v2185, 4
      %v2191 = vshrl.u32 %v2025, 16
      %v2193 = vrot.slane %v2191, 7
      %v2194 = vshll.u32 %v2025, 16
      %v2196 = vor.u32 %v2193, %v2194
      %v2197 = vsel %vm2028, %v2189, %v2196
      %v2198 = vrot.slane %v2193, 4
      %vm2229 = vcmask 1043456
      %vm2230 = vsmask.f32 7938
      %vm2231 = vmand %vm2229, %vm2230
      %v2232 = vld [vmem:[#allocation2] sm:$0xf]
      %v2233 = vsel %vm2231, %v2035, %v2232
      %2234 = vst [vmem:[#allocation2] sm:$0xf] %v2233
      %2235 = vst [vmem:[#allocation2 + $0x4] sm:$0xf] %v2044
      %vm2236 = vcmask 1040384
      %vm2237 = vmand %vm2236, %vm2026
      %v2238 = vld [vmem:[#allocation2 + $0x8] sm:$0x1]
      %v2239 = vsel %vm2237, %v2045, %v2238
      %2240 = vst [vmem:[#allocation2 + $0x8] sm:$0x1] %v2239
      %v2241 = vld [vmem:[#allocation2 + $0xc] sm:$0xf]
      %v2242 = vsel %vm2231, %v2052, %v2241
      %2243 = vst [vmem:[#allocation2 + $0xc] sm:$0xf] %v2242
      %2244 = vst [vmem:[#allocation2 + $0x10] sm:$0xf] %v2061
      %v2245 = vld [vmem:[#allocation2 + $0x14] sm:$0x1]
      %v2246 = vsel %vm2237, %v2062, %v2245
      %2247 = vst [vmem:[#allocation2 + $0x14] sm:$0x1] %v2246
      %v2248 = vld [vmem:[#allocation2 + $0x18] sm:$0xf]
      %v2249 = vsel %vm2231, %v2069, %v2248
      %2250 = vst [vmem:[#allocation2 + $0x18] sm:$0xf] %v2249
      %2251 = vst [vmem:[#allocation2 + $0x1c] sm:$0xf] %v2078
      %v2252 = vld [vmem:[#allocation2 + $0x20] sm:$0x1]
      %v2253 = vsel %vm2237, %v2079, %v2252
      %2254 = vst [vmem:[#allocation2 + $0x20] sm:$0x1] %v2253
      %v2255 = vld [vmem:[#allocation2 + $0x24] sm:$0xf]
      %v2256 = vsel %vm2231, %v2086, %v2255
      %2257 = vst [vmem:[#allocation2 + $0x24] sm:$0xf] %v2256
      %2258 = vst [vmem:[#allocation2 + $0x28] sm:$0xf] %v2095
      %v2259 = vld [vmem:[#allocation2 + $0x2c] sm:$0x1]
      %v2260 = vsel %vm2237, %v2096, %v2259
      %2261 = vst [vmem:[#allocation2 + $0x2c] sm:$0x1] %v2260
      %v2262 = vld [vmem:[#allocation2 + $0x30] sm:$0xf]
      %v2263 = vsel %vm2231, %v2103, %v2262
      %2264 = vst [vmem:[#allocation2 + $0x30] sm:$0xf] %v2263
      %2265 = vst [vmem:[#allocation2 + $0x34] sm:$0xf] %v2112
      %v2266 = vld [vmem:[#allocation2 + $0x38] sm:$0x1]
      %v2267 = vsel %vm2237, %v2113, %v2266
      %2268 = vst [vmem:[#allocation2 + $0x38] sm:$0x1] %v2267
      %v2269 = vld [vmem:[#allocation2 + $0x3c] sm:$0xf]
      %v2270 = vsel %vm2231, %v2120, %v2269
      %2271 = vst [vmem:[#allocation2 + $0x3c] sm:$0xf] %v2270
      %2272 = vst [vmem:[#allocation2 + $0x40] sm:$0xf] %v2129
      %v2273 = vld [vmem:[#allocation2 + $0x44] sm:$0x1]
      %v2274 = vsel %vm2237, %v2130, %v2273
      %2275 = vst [vmem:[#allocation2 + $0x44] sm:$0x1] %v2274
      %v2276 = vld [vmem:[#allocation2 + $0x48] sm:$0xf]
      %v2277 = vsel %vm2231, %v2137, %v2276
      %2278 = vst [vmem:[#allocation2 + $0x48] sm:$0xf] %v2277
      %2279 = vst [vmem:[#allocation2 + $0x4c] sm:$0xf] %v2146
      %v2280 = vld [vmem:[#allocation2 + $0x50] sm:$0x1]
      %v2281 = vsel %vm2237, %v2147, %v2280
      %2282 = vst [vmem:[#allocation2 + $0x50] sm:$0x1] %v2281
      %v2283 = vld [vmem:[#allocation2 + $0x54] sm:$0xf]
      %v2284 = vsel %vm2231, %v2154, %v2283
      %2285 = vst [vmem:[#allocation2 + $0x54] sm:$0xf] %v2284
      %2286 = vst [vmem:[#allocation2 + $0x58] sm:$0xf] %v2163
      %v2287 = vld [vmem:[#allocation2 + $0x5c] sm:$0x1]
      %v2288 = vsel %vm2237, %v2164, %v2287
      %2289 = vst [vmem:[#allocation2 + $0x5c] sm:$0x1] %v2288
      %v2290 = vld [vmem:[#allocation2 + $0x60] sm:$0xf]
      %v2291 = vsel %vm2231, %v2171, %v2290
      %2292 = vst [vmem:[#allocation2 + $0x60] sm:$0xf] %v2291
      %2293 = vst [vmem:[#allocation2 + $0x64] sm:$0xf] %v2180
      %v2294 = vld [vmem:[#allocation2 + $0x68] sm:$0x1]
      %v2295 = vsel %vm2237, %v2181, %v2294
      %2296 = vst [vmem:[#allocation2 + $0x68] sm:$0x1] %v2295
      %v2297 = vld [vmem:[#allocation2 + $0x6c] sm:$0xf]
      %v2298 = vsel %vm2231, %v2188, %v2297
      %2299 = vst [vmem:[#allocation2 + $0x6c] sm:$0xf] %v2298
      %2300 = vst [vmem:[#allocation2 + $0x70] sm:$0xf] %v2197
      %v2301 = vld [vmem:[#allocation2 + $0x74] sm:$0x1]
      %v2302 = vsel %vm2237, %v2198, %v2301
      %2303 = vst [vmem:[#allocation2 + $0x74] sm:$0x1] %v2302
      %v2304 = vld [vmem:[#allocation2] sm:$0x1]
      %v2305 = vsel %vm2237, 0, %v2304
      %2306 = vst [vmem:[#allocation2] sm:$0x1] %v2305
      %v2307 = vld [vmem:[#allocation2 + $0xc] sm:$0x1]
      %v2308 = vsel %vm2237, 0, %v2307
      %2309 = vst [vmem:[#allocation2 + $0xc] sm:$0x1] %v2308
      %v2310 = vld [vmem:[#allocation2 + $0x18] sm:$0x1]
      %v2311 = vsel %vm2237, 0, %v2310
      %2312 = vst [vmem:[#allocation2 + $0x18] sm:$0x1] %v2311
      %v2313 = vld [vmem:[#allocation2 + $0x24] sm:$0x1]
      %v2314 = vsel %vm2237, 0, %v2313
      %2315 = vst [vmem:[#allocation2 + $0x24] sm:$0x1] %v2314
      %v2316 = vld [vmem:[#allocation2 + $0x30] sm:$0x1]
      %v2317 = vsel %vm2237, 0, %v2316
      %2318 = vst [vmem:[#allocation2 + $0x30] sm:$0x1] %v2317
      %v2319 = vld [vmem:[#allocation2 + $0x3c] sm:$0x1]
      %v2320 = vsel %vm2237, 0, %v2319
      %2321 = vst [vmem:[#allocation2 + $0x3c] sm:$0x1] %v2320
      %v2322 = vld [vmem:[#allocation2 + $0x48] sm:$0x1]
      %v2323 = vsel %vm2237, 0, %v2322
      %2324 = vst [vmem:[#allocation2 + $0x48] sm:$0x1] %v2323
      %v2325 = vld [vmem:[#allocation2 + $0x54] sm:$0x1]
      %v2326 = vsel %vm2237, 0, %v2325
      %2327 = vst [vmem:[#allocation2 + $0x54] sm:$0x1] %v2326
      %v2328 = vld [vmem:[#allocation2 + $0x60] sm:$0x1]
      %v2329 = vsel %vm2237, 0, %v2328
      %2330 = vst [vmem:[#allocation2 + $0x60] sm:$0x1] %v2329
      %v2331 = vld [vmem:[#allocation2 + $0x6c] sm:$0x1]
      %v2332 = vsel %vm2237, 0, %v2331
      %2333 = vst [vmem:[#allocation2 + $0x6c] sm:$0x1] %v2332
      %vm2334 = vmand %vm2236, %vm2230
      %v2335 = vld [vmem:[#allocation2 + $0x8] sm:$0x1]
      %v2336 = vsel %vm2334, 0, %v2335
      %2337 = vst [vmem:[#allocation2 + $0x8] sm:$0x1] %v2336
      %v2338 = vld [vmem:[#allocation2 + $0x14] sm:$0x1]
      %v2339 = vsel %vm2334, 0, %v2338
      %2340 = vst [vmem:[#allocation2 + $0x14] sm:$0x1] %v2339
      %v2341 = vld [vmem:[#allocation2 + $0x20] sm:$0x1]
      %v2342 = vsel %vm2334, 0, %v2341
      %2343 = vst [vmem:[#allocation2 + $0x20] sm:$0x1] %v2342
      %v2344 = vld [vmem:[#allocation2 + $0x2c] sm:$0x1]
      %v2345 = vsel %vm2334, 0, %v2344
      %2346 = vst [vmem:[#allocation2 + $0x2c] sm:$0x1] %v2345
      %v2347 = vld [vmem:[#allocation2 + $0x38] sm:$0x1]
      %v2348 = vsel %vm2334, 0, %v2347
      %2349 = vst [vmem:[#allocation2 + $0x38] sm:$0x1] %v2348
      %v2350 = vld [vmem:[#allocation2 + $0x44] sm:$0x1]
      %v2351 = vsel %vm2334, 0, %v2350
      %2352 = vst [vmem:[#allocation2 + $0x44] sm:$0x1] %v2351
      %v2353 = vld [vmem:[#allocation2 + $0x50] sm:$0x1]
      %v2354 = vsel %vm2334, 0, %v2353
      %2355 = vst [vmem:[#allocation2 + $0x50] sm:$0x1] %v2354
      %v2356 = vld [vmem:[#allocation2 + $0x5c] sm:$0x1]
      %v2357 = vsel %vm2334, 0, %v2356
      %2358 = vst [vmem:[#allocation2 + $0x5c] sm:$0x1] %v2357
      %v2359 = vld [vmem:[#allocation2 + $0x68] sm:$0x1]
      %v2360 = vsel %vm2334, 0, %v2359
      %2361 = vst [vmem:[#allocation2 + $0x68] sm:$0x1] %v2360
      %v2362 = vld [vmem:[#allocation2 + $0x74] sm:$0x1]
      %v2363 = vsel %vm2334, 0, %v2362
      %2364 = vst [vmem:[#allocation2 + $0x74] sm:$0x1] %v2363
      %v2365 = vld [vmem:[#allocation2] sm:$0xf]
      %v2366 = vld [vmem:[#allocation2 + $0x4] sm:$0xf]
      %v2367 = vld [vmem:[#allocation2 + $0x8] sm:$0x1]
      %v2368 = vld [vmem:[#allocation2 + $0xc] sm:$0xf]
      %v2369 = vld [vmem:[#allocation2 + $0x10] sm:$0xf]
      %v2370 = vld [vmem:[#allocation2 + $0x14] sm:$0x1]
      %v2371 = vld [vmem:[#allocation2 + $0x18] sm:$0xf]
      %v2372 = vld [vmem:[#allocation2 + $0x1c] sm:$0xf]
      %v2373 = vld [vmem:[#allocation2 + $0x20] sm:$0x1]
      %v2374 = vld [vmem:[#allocation2 + $0x24] sm:$0xf]
      %v2375 = vld [vmem:[#allocation2 + $0x28] sm:$0xf]
      %v2376 = vld [vmem:[#allocation2 + $0x2c] sm:$0x1]
      %v2377 = vld [vmem:[#allocation2 + $0x30] sm:$0xf]
      %v2378 = vld [vmem:[#allocation2 + $0x34] sm:$0xf]
      %v2379 = vld [vmem:[#allocation2 + $0x38] sm:$0x1]
      %v2380 = vld [vmem:[#allocation2 + $0x3c] sm:$0xf]
      %v2381 = vld [vmem:[#allocation2 + $0x40] sm:$0xf]
      %v2382 = vld [vmem:[#allocation2 + $0x44] sm:$0x1]
      %v2383 = vld [vmem:[#allocation2 + $0x48] sm:$0xf]
      %v2384 = vld [vmem:[#allocation2 + $0x4c] sm:$0xf]
      %v2385 = vld [vmem:[#allocation2 + $0x50] sm:$0x1]
      %v2386 = vld [vmem:[#allocation2 + $0x54] sm:$0xf]
      %v2387 = vld [vmem:[#allocation2 + $0x58] sm:$0xf]
      %v2388 = vld [vmem:[#allocation2 + $0x5c] sm:$0x1]
      %v2389 = vld [vmem:[#allocation2 + $0x60] sm:$0xf]
      %v2390 = vld [vmem:[#allocation2 + $0x64] sm:$0xf]
      %v2391 = vld [vmem:[#allocation2 + $0x68] sm:$0x1]
      %v2392 = vld [vmem:[#allocation2 + $0x6c] sm:$0xf]
      %v2393 = vld [vmem:[#allocation2 + $0x70] sm:$0xf]
      %v2394 = vld [vmem:[#allocation2 + $0x74] sm:$0x1]
      %v2411 = vunpack.c.l.b16 %v2365
      %v2412 = vunpack.c.l.b16 %v2366
      %v2413 = vunpack.c.l.b16 %v2368
      %v2414 = vunpack.c.l.b16 %v2369
      %v2415 = vunpack.c.l.b16 %v2371
      %v2416 = vunpack.c.l.b16 %v2372
      %v2417 = vunpack.c.l.b16 %v2374
      %v2418 = vunpack.c.l.b16 %v2375
      %v2419 = vunpack.c.l.b16 %v2377
      %v2420 = vunpack.c.l.b16 %v2378
      %v2421 = vunpack.c.l.b16 %v2380
      %v2422 = vunpack.c.l.b16 %v2381
      %v2423 = vunpack.c.l.b16 %v2383
      %v2424 = vunpack.c.l.b16 %v2384
      %v2425 = vunpack.c.l.b16 %v2386
      %v2426 = vunpack.c.l.b16 %v2387
      %v2427 = vpack.c.b16 %v2412, %v2411
      %v2428 = vpack.c.b16 %v2414, %v2413
      %v2429 = vpack.c.b16 %v2416, %v2415
      %v2430 = vpack.c.b16 %v2418, %v2417
      %v2431 = vpack.c.b16 %v2420, %v2419
      %v2432 = vpack.c.b16 %v2422, %v2421
      %v2433 = vpack.c.b16 %v2424, %v2423
      %v2434 = vpack.c.b16 %v2426, %v2425
      %v2451 = vunpack.c.l.b16 %v2367
      %v2452 = vunpack.c.l.b16 %v2370
      %v2453 = vunpack.c.l.b16 %v2373
      %v2454 = vunpack.c.l.b16 %v2376
      %v2455 = vunpack.c.l.b16 %v2379
      %v2456 = vunpack.c.l.b16 %v2382
      %v2457 = vunpack.c.l.b16 %v2385
      %v2458 = vunpack.c.l.b16 %v2388
      %v2459 = vpack.c.b16 %v2451, %v2451
      %v2460 = vpack.c.b16 %v2452, %v2452
      %v2461 = vpack.c.b16 %v2453, %v2453
      %v2462 = vpack.c.b16 %v2454, %v2454
      %v2463 = vpack.c.b16 %v2455, %v2455
      %v2464 = vpack.c.b16 %v2456, %v2456
      %v2465 = vpack.c.b16 %v2457, %v2457
      %v2466 = vpack.c.b16 %v2458, %v2458
      %v2468 = vshrl.u32 %v2427, 16
      %v2470 = vshll.u32 %v2427, 16
      %v2472 = vrot.slane %v2470, 1
      %v2473 = vor.u32 %v2468, %v2472
      %v2475 = vshll.u32 %v2459, 16
      %v2477 = vrot.slane %v2475, 1
      %v2478 = vsel %vm445, %v2473, %v2477
      %v2480 = vshrl.u32 %v2428, 16
      %v2482 = vshll.u32 %v2428, 16
      %v2484 = vrot.slane %v2482, 1
      %v2485 = vor.u32 %v2480, %v2484
      %v2487 = vshll.u32 %v2460, 16
      %v2489 = vrot.slane %v2487, 1
      %v2490 = vsel %vm445, %v2485, %v2489
      %v2492 = vshrl.u32 %v2429, 16
      %v2494 = vshll.u32 %v2429, 16
      %v2496 = vrot.slane %v2494, 1
      %v2497 = vor.u32 %v2492, %v2496
      %v2499 = vshll.u32 %v2461, 16
      %v2501 = vrot.slane %v2499, 1
      %v2502 = vsel %vm445, %v2497, %v2501
      %v2504 = vshrl.u32 %v2430, 16
      %v2506 = vshll.u32 %v2430, 16
      %v2508 = vrot.slane %v2506, 1
      %v2509 = vor.u32 %v2504, %v2508
      %v2511 = vshll.u32 %v2462, 16
      %v2513 = vrot.slane %v2511, 1
      %v2514 = vsel %vm445, %v2509, %v2513
      %v2516 = vshrl.u32 %v2431, 16
      %v2518 = vshll.u32 %v2431, 16
      %v2520 = vrot.slane %v2518, 1
      %v2521 = vor.u32 %v2516, %v2520
      %v2523 = vshll.u32 %v2463, 16
      %v2525 = vrot.slane %v2523, 1
      %v2526 = vsel %vm445, %v2521, %v2525
      %v2528 = vshrl.u32 %v2432, 16
      %v2530 = vshll.u32 %v2432, 16
      %v2532 = vrot.slane %v2530, 1
      %v2533 = vor.u32 %v2528, %v2532
      %v2535 = vshll.u32 %v2464, 16
      %v2537 = vrot.slane %v2535, 1
      %v2538 = vsel %vm445, %v2533, %v2537
      %v2540 = vshrl.u32 %v2433, 16
      %v2542 = vshll.u32 %v2433, 16
      %v2544 = vrot.slane %v2542, 1
      %v2545 = vor.u32 %v2540, %v2544
      %v2547 = vshll.u32 %v2465, 16
      %v2549 = vrot.slane %v2547, 1
      %v2550 = vsel %vm445, %v2545, %v2549
      %v2552 = vshrl.u32 %v2434, 16
      %v2554 = vshll.u32 %v2434, 16
      %v2556 = vrot.slane %v2554, 1
      %v2557 = vor.u32 %v2552, %v2556
      %v2559 = vshll.u32 %v2466, 16
      %v2561 = vrot.slane %v2559, 1
      %v2562 = vsel %vm445, %v2557, %v2561
      %v2571 = vrot.slane %v2427, 1
      %v2572 = vrot.slane %v2459, 1
      %v2573 = vsel %vm576, %v2571, %v2572
      %v2574 = vrot.slane %v2428, 1
      %v2575 = vrot.slane %v2460, 1
      %v2576 = vsel %vm576, %v2574, %v2575
      %v2577 = vrot.slane %v2429, 1
      %v2578 = vrot.slane %v2461, 1
      %v2579 = vsel %vm576, %v2577, %v2578
      %v2580 = vrot.slane %v2430, 1
      %v2581 = vrot.slane %v2462, 1
      %v2582 = vsel %vm576, %v2580, %v2581
      %v2583 = vrot.slane %v2431, 1
      %v2584 = vrot.slane %v2463, 1
      %v2585 = vsel %vm576, %v2583, %v2584
      %v2586 = vrot.slane %v2432, 1
      %v2587 = vrot.slane %v2464, 1
      %v2588 = vsel %vm576, %v2586, %v2587
      %v2589 = vrot.slane %v2433, 1
      %v2590 = vrot.slane %v2465, 1
      %v2591 = vsel %vm576, %v2589, %v2590
      %v2592 = vrot.slane %v2434, 1
      %v2593 = vrot.slane %v2466, 1
      %v2594 = vsel %vm576, %v2592, %v2593
      %v2605 = vunpack.c.l.b16 %v2389
      %v2606 = vunpack.c.l.b16 %v2390
      %v2607 = vpack.c.b16 %v2606, %v2605
      %v2610 = vunpack.c.l.b16 %v2391
      %v2611 = vpack.c.b16 %v2610, %v2610
      %v2613 = vshrl.u32 %v2607, 16
      %v2615 = vshll.u32 %v2607, 16
      %v2617 = vrot.slane %v2615, 1
      %v2618 = vor.u32 %v2613, %v2617
      %v2620 = vshll.u32 %v2611, 16
      %v2622 = vrot.slane %v2620, 1
      %v2623 = vsel %vm445, %v2618, %v2622
      %v2625 = vrot.slane %v2607, 1
      %v2626 = vrot.slane %v2611, 1
      %v2627 = vsel %vm576, %v2625, %v2626
      %v2631 = vunpack.c.l.b16 %v2392
      %v2632 = vunpack.c.l.b16 %v2393
      %v2633 = vpack.c.b16 %v2632, %v2631
      %v2636 = vunpack.c.l.b16 %v2394
      %v2637 = vpack.c.b16 %v2636, %v2636
      %v2639 = vshrl.u32 %v2633, 16
      %v2641 = vshll.u32 %v2633, 16
      %v2643 = vrot.slane %v2641, 1
      %v2644 = vor.u32 %v2639, %v2643
      %v2646 = vshll.u32 %v2637, 16
      %v2648 = vrot.slane %v2646, 1
      %v2649 = vsel %vm445, %v2644, %v2648
      %v2651 = vrot.slane %v2633, 1
      %v2652 = vrot.slane %v2637, 1
      %v2653 = vsel %vm576, %v2651, %v2652
      %v2655 = vld [vmem:[%s4] sm:$0xf]
      %v2656 = vld [vmem:[%s4 + $0x4] sm:$0xf]
      %v2657 = vld [vmem:[%s4 + $0x8] sm:$0xf]
      %v2658 = vld [vmem:[%s4 + $0xc] sm:$0xf]
      %v2659 = vld [vmem:[%s4 + $0x10] sm:$0xf]
      %v2660 = vld [vmem:[%s4 + $0x14] sm:$0xf]
      %v2661 = vld [vmem:[%s4 + $0x18] sm:$0xf]
      %v2662 = vld [vmem:[%s4 + $0x1c] sm:$0xf]
      %v2663 = vld [vmem:[%s4 + $0x20] sm:$0xf]
      %v2664 = vld [vmem:[%s4 + $0x24] sm:$0xf]
      %v2665 = vld [vmem:[%s4 + $0x28] sm:$0xf]
      %v2666 = vld [vmem:[%s4 + $0x2c] sm:$0xf]
      %v2667 = vld [vmem:[%s4 + $0x30] sm:$0xf]
      %v2668 = vld [vmem:[%s4 + $0x34] sm:$0xf]
      %v2669 = vld [vmem:[%s4 + $0x38] sm:$0xf]
      %v2670 = vld [vmem:[%s4 + $0x3c] sm:$0xf]
      %v2671 = vld [vmem:[%s4 + $0x40] sm:$0xf]
      %v2672 = vld [vmem:[%s4 + $0x44] sm:$0xf]
      %v2673 = vld [vmem:[%s4 + $0x48] sm:$0xf]
      %v2674 = vld [vmem:[%s4 + $0x4c] sm:$0xf]
      %v2675 = vld [vmem:[%s4 + $0x50] sm:$0xf]
      %v2676 = vld [vmem:[%s4 + $0x54] sm:$0xf]
      %v2677 = vld [vmem:[%s4 + $0x58] sm:$0xf]
      %v2678 = vld [vmem:[%s4 + $0x5c] sm:$0xf]
      %v2679 = vld [vmem:[%s4 + $0x60] sm:$0xf]
      %v2680 = vld [vmem:[%s4 + $0x64] sm:$0xf]
      %v2681 = vld [vmem:[%s4 + $0x68] sm:$0xf]
      %v2682 = vld [vmem:[%s4 + $0x6c] sm:$0xf]
      %v2683 = vld [vmem:[%s4 + $0x70] sm:$0xf]
      %v2684 = vld [vmem:[%s4 + $0x74] sm:$0xf]
      %v2685 = vld [vmem:[%s4 + $0x78] sm:$0xf]
      %v2686 = vld [vmem:[%s4 + $0x7c] sm:$0xf]
      %v2687 = vld [vmem:[%s4 + $0x80] sm:$0xf]
      %v2688 = vld [vmem:[%s4 + $0x84] sm:$0xf]
      %v2689 = vld [vmem:[%s4 + $0x88] sm:$0xf]
      %v2690 = vld [vmem:[%s4 + $0x8c] sm:$0xf]
      %v2691 = vld [vmem:[%s4 + $0x90] sm:$0xf]
      %v2692 = vld [vmem:[%s4 + $0x94] sm:$0xf]
      %v2693 = vld [vmem:[%s4 + $0x98] sm:$0xf]
      %v2694 = vld [vmem:[%s4 + $0x9c] sm:$0xf]
      %v2695 = vld [vmem:[%s4 + $0xa0] sm:$0xf]
      %v2696 = vld [vmem:[%s4 + $0xa4] sm:$0xf]
      %v2697 = vld [vmem:[%s4 + $0xa8] sm:$0xf]
      %v2698 = vld [vmem:[%s4 + $0xac] sm:$0xf]
      %v2699 = vld [vmem:[%s4 + $0xb0] sm:$0xf]
      %v2700 = vld [vmem:[%s4 + $0xb4] sm:$0xf]
      %v2701 = vld [vmem:[%s4 + $0xb8] sm:$0xf]
      %v2702 = vld [vmem:[%s4 + $0xbc] sm:$0xf]
      %v2703 = vld [vmem:[%s4 + $0xc0] sm:$0xf]
      %v2704 = vld [vmem:[%s4 + $0xc4] sm:$0xf]
      %v2705 = vld [vmem:[%s4 + $0xc8] sm:$0xf]
      %v2706 = vld [vmem:[%s4 + $0xcc] sm:$0xf]
      %v2707 = vld [vmem:[%s4 + $0xd0] sm:$0xf]
      %v2708 = vld [vmem:[%s4 + $0xd4] sm:$0xf]
      %v2709 = vld [vmem:[%s4 + $0xd8] sm:$0xf]
      %v2710 = vld [vmem:[%s4 + $0xdc] sm:$0xf]
      %v2711 = vld [vmem:[%s4 + $0xe0] sm:$0xf]
      %v2712 = vld [vmem:[%s4 + $0xe4] sm:$0xf]
      %v2713 = vld [vmem:[%s4 + $0xe8] sm:$0xf]
      %v2714 = vld [vmem:[%s4 + $0xec] sm:$0xf]
      %v2715 = vld [vmem:[%s4 + $0xf0] sm:$0xf]
      %v2716 = vld [vmem:[%s4 + $0xf4] sm:$0xf]
      %v2717 = vld [vmem:[%s4 + $0xf8] sm:$0xf]
      %v2718 = vld [vmem:[%s4 + $0xfc] sm:$0xf]
      %v2719 = vld [vmem:[%s4 + $0x100] sm:$0xf]
      %v2720 = vld [vmem:[%s4 + $0x104] sm:$0xf]
      %v2721 = vld [vmem:[%s4 + $0x108] sm:$0xf]
      %v2722 = vld [vmem:[%s4 + $0x10c] sm:$0xf]
      %v2723 = vld [vmem:[%s4 + $0x110] sm:$0xf]
      %v2724 = vld [vmem:[%s4 + $0x114] sm:$0xf]
      %v2725 = vld [vmem:[%s4 + $0x118] sm:$0xf]
      %v2726 = vld [vmem:[%s4 + $0x11c] sm:$0xf]
      %v2727 = vld [vmem:[%s4 + $0x120] sm:$0xf]
      %v2728 = vld [vmem:[%s4 + $0x124] sm:$0xf]
      %v2729 = vld [vmem:[%s4 + $0x128] sm:$0xf]
      %v2730 = vld [vmem:[%s4 + $0x12c] sm:$0xf]
      %v2731 = vld [vmem:[%s4 + $0x130] sm:$0xf]
      %v2732 = vld [vmem:[%s4 + $0x134] sm:$0xf]
      %v2733 = vld [vmem:[%s4 + $0x138] sm:$0xf]
      %v2734 = vld [vmem:[%s4 + $0x13c] sm:$0xf]
      %v2735 = vld [vmem:[%s4 + $0x140] sm:$0xf]
      %v2736 = vld [vmem:[%s4 + $0x144] sm:$0xf]
      %v2737 = vld [vmem:[%s4 + $0x148] sm:$0xf]
      %v2738 = vld [vmem:[%s4 + $0x14c] sm:$0xf]
      %v2739 = vld [vmem:[%s4 + $0x150] sm:$0xf]
      %v2740 = vld [vmem:[%s4 + $0x154] sm:$0xf]
      %v2741 = vld [vmem:[%s4 + $0x158] sm:$0xf]
      %v2742 = vld [vmem:[%s4 + $0x15c] sm:$0xf]
      %v2743 = vld [vmem:[%s4 + $0x160] sm:$0xf]
      %v2744 = vld [vmem:[%s4 + $0x164] sm:$0xf]
      %v2745 = vld [vmem:[%s4 + $0x168] sm:$0xf]
      %v2746 = vld [vmem:[%s4 + $0x16c] sm:$0xf]
      %v2747 = vld [vmem:[%s4 + $0x170] sm:$0xf]
      %v2748 = vld [vmem:[%s4 + $0x174] sm:$0xf]
      %v2749 = vld [vmem:[%s4 + $0x178] sm:$0xf]
      %v2750 = vld [vmem:[%s4 + $0x17c] sm:$0xf]
      %v2751 = vld [vmem:[%s4 + $0x180] sm:$0xf]
      %v2752 = vld [vmem:[%s4 + $0x184] sm:$0xf]
      %v2753 = vld [vmem:[%s4 + $0x188] sm:$0xf]
      %v2754 = vld [vmem:[%s4 + $0x18c] sm:$0xf]
      %v2755 = vld [vmem:[%s4 + $0x190] sm:$0xf]
      %v2756 = vld [vmem:[%s4 + $0x194] sm:$0xf]
      %v2757 = vld [vmem:[%s4 + $0x198] sm:$0xf]
      %v2758 = vld [vmem:[%s4 + $0x19c] sm:$0xf]
      %v2759 = vld [vmem:[%s4 + $0x1a0] sm:$0xf]
      %v2760 = vld [vmem:[%s4 + $0x1a4] sm:$0xf]
      %v2761 = vld [vmem:[%s4 + $0x1a8] sm:$0xf]
      %v2762 = vld [vmem:[%s4 + $0x1ac] sm:$0xf]
      %v2763 = vld [vmem:[%s4 + $0x1b0] sm:$0xf]
      %v2764 = vld [vmem:[%s4 + $0x1b4] sm:$0xf]
      %v2765 = vld [vmem:[%s4 + $0x1b8] sm:$0xf]
      %v2766 = vld [vmem:[%s4 + $0x1bc] sm:$0xf]
      %v2767 = vld [vmem:[%s4 + $0x1c0] sm:$0xf]
      %v2768 = vld [vmem:[%s4 + $0x1c4] sm:$0xf]
      %v2769 = vld [vmem:[%s4 + $0x1c8] sm:$0xf]
      %v2770 = vld [vmem:[%s4 + $0x1cc] sm:$0xf]
      %v2771 = vld [vmem:[%s4 + $0x1d0] sm:$0xf]
      %v2772 = vld [vmem:[%s4 + $0x1d4] sm:$0xf]
      %v2773 = vld [vmem:[%s4 + $0x1d8] sm:$0xf]
      %v2774 = vld [vmem:[%s4 + $0x1dc] sm:$0xf]
      %v2775 = vld [vmem:[%s4 + $0x1e0] sm:$0xf]
      %v2776 = vld [vmem:[%s4 + $0x1e4] sm:$0xf]
      %v2777 = vld [vmem:[%s4 + $0x1e8] sm:$0xf]
      %v2778 = vld [vmem:[%s4 + $0x1ec] sm:$0xf]
      %v2779 = vld [vmem:[%s4 + $0x1f0] sm:$0xf]
      %v2780 = vld [vmem:[%s4 + $0x1f4] sm:$0xf]
      %v2781 = vld [vmem:[%s4 + $0x1f8] sm:$0xf]
      %v2782 = vld [vmem:[%s4 + $0x1fc] sm:$0xf]
      %v2783 = vld [vmem:[%s4 + $0x200] sm:$0xf]
      %v2784 = vld [vmem:[%s4 + $0x204] sm:$0xf]
      %v2785 = vld [vmem:[%s4 + $0x208] sm:$0xf]
      %v2786 = vld [vmem:[%s4 + $0x20c] sm:$0xf]
      %v2787 = vld [vmem:[%s4 + $0x210] sm:$0xf]
      %v2788 = vld [vmem:[%s4 + $0x214] sm:$0xf]
      %v2789 = vld [vmem:[%s4 + $0x218] sm:$0xf]
      %v2790 = vld [vmem:[%s4 + $0x21c] sm:$0xf]
      %v2791 = vld [vmem:[%s4 + $0x220] sm:$0xf]
      %v2792 = vld [vmem:[%s4 + $0x224] sm:$0xf]
      %v2793 = vld [vmem:[%s4 + $0x228] sm:$0xf]
      %v2794 = vld [vmem:[%s4 + $0x22c] sm:$0xf]
      %v2795 = vld [vmem:[%s4 + $0x230] sm:$0xf]
      %v2796 = vld [vmem:[%s4 + $0x234] sm:$0xf]
      %v2797 = vld [vmem:[%s4 + $0x238] sm:$0xf]
      %v2798 = vld [vmem:[%s4 + $0x23c] sm:$0xf]
      %v2943 = vunpack.c.l.b16 %v2655
      %v2944 = vunpack.c.l.b16 %v2656
      %v2945 = vunpack.c.l.b16 %v2657
      %v2946 = vunpack.c.l.b16 %v2658
      %v2947 = vunpack.c.l.b16 %v2659
      %v2948 = vunpack.c.l.b16 %v2660
      %v2949 = vunpack.c.l.b16 %v2661
      %v2950 = vunpack.c.l.b16 %v2662
      %v2951 = vunpack.c.l.b16 %v2663
      %v2952 = vunpack.c.l.b16 %v2664
      %v2953 = vunpack.c.l.b16 %v2665
      %v2954 = vunpack.c.l.b16 %v2666
      %v2955 = vunpack.c.l.b16 %v2667
      %v2956 = vunpack.c.l.b16 %v2668
      %v2957 = vunpack.c.l.b16 %v2669
      %v2958 = vunpack.c.l.b16 %v2670
      %v2959 = vunpack.c.l.b16 %v2671
      %v2960 = vunpack.c.l.b16 %v2672
      %v2961 = vunpack.c.l.b16 %v2673
      %v2962 = vunpack.c.l.b16 %v2674
      %v2963 = vunpack.c.l.b16 %v2675
      %v2964 = vunpack.c.l.b16 %v2676
      %v2965 = vunpack.c.l.b16 %v2677
      %v2966 = vunpack.c.l.b16 %v2678
      %v2967 = vunpack.c.l.b16 %v2679
      %v2968 = vunpack.c.l.b16 %v2680
      %v2969 = vunpack.c.l.b16 %v2681
      %v2970 = vunpack.c.l.b16 %v2682
      %v2971 = vunpack.c.l.b16 %v2683
      %v2972 = vunpack.c.l.b16 %v2684
      %v2973 = vunpack.c.l.b16 %v2685
      %v2974 = vunpack.c.l.b16 %v2686
      %v2975 = vunpack.c.l.b16 %v2687
      %v2976 = vunpack.c.l.b16 %v2688
      %v2977 = vunpack.c.l.b16 %v2689
      %v2978 = vunpack.c.l.b16 %v2690
      %v2979 = vunpack.c.l.b16 %v2691
      %v2980 = vunpack.c.l.b16 %v2692
      %v2981 = vunpack.c.l.b16 %v2693
      %v2982 = vunpack.c.l.b16 %v2694
      %v2983 = vunpack.c.l.b16 %v2695
      %v2984 = vunpack.c.l.b16 %v2696
      %v2985 = vunpack.c.l.b16 %v2697
      %v2986 = vunpack.c.l.b16 %v2698
      %v2987 = vunpack.c.l.b16 %v2699
      %v2988 = vunpack.c.l.b16 %v2700
      %v2989 = vunpack.c.l.b16 %v2701
      %v2990 = vunpack.c.l.b16 %v2702
      %v2991 = vunpack.c.l.b16 %v2703
      %v2992 = vunpack.c.l.b16 %v2704
      %v2993 = vunpack.c.l.b16 %v2705
      %v2994 = vunpack.c.l.b16 %v2706
      %v2995 = vunpack.c.l.b16 %v2707
      %v2996 = vunpack.c.l.b16 %v2708
      %v2997 = vunpack.c.l.b16 %v2709
      %v2998 = vunpack.c.l.b16 %v2710
      %v2999 = vunpack.c.l.b16 %v2711
      %v3000 = vunpack.c.l.b16 %v2712
      %v3001 = vunpack.c.l.b16 %v2713
      %v3002 = vunpack.c.l.b16 %v2714
      %v3003 = vunpack.c.l.b16 %v2715
      %v3004 = vunpack.c.l.b16 %v2716
      %v3005 = vunpack.c.l.b16 %v2717
      %v3006 = vunpack.c.l.b16 %v2718
      %v3007 = vunpack.c.l.b16 %v2719
      %v3008 = vunpack.c.l.b16 %v2720
      %v3009 = vunpack.c.l.b16 %v2721
      %v3010 = vunpack.c.l.b16 %v2722
      %v3011 = vunpack.c.l.b16 %v2723
      %v3012 = vunpack.c.l.b16 %v2724
      %v3013 = vunpack.c.l.b16 %v2725
      %v3014 = vunpack.c.l.b16 %v2726
      %v3015 = vunpack.c.l.b16 %v2727
      %v3016 = vunpack.c.l.b16 %v2728
      %v3017 = vunpack.c.l.b16 %v2729
      %v3018 = vunpack.c.l.b16 %v2730
      %v3019 = vunpack.c.l.b16 %v2731
      %v3020 = vunpack.c.l.b16 %v2732
      %v3021 = vunpack.c.l.b16 %v2733
      %v3022 = vunpack.c.l.b16 %v2734
      %v3023 = vunpack.c.l.b16 %v2735
      %v3024 = vunpack.c.l.b16 %v2736
      %v3025 = vunpack.c.l.b16 %v2737
      %v3026 = vunpack.c.l.b16 %v2738
      %v3027 = vunpack.c.l.b16 %v2739
      %v3028 = vunpack.c.l.b16 %v2740
      %v3029 = vunpack.c.l.b16 %v2741
      %v3030 = vunpack.c.l.b16 %v2742
      %v3031 = vunpack.c.l.b16 %v2743
      %v3032 = vunpack.c.l.b16 %v2744
      %v3033 = vunpack.c.l.b16 %v2745
      %v3034 = vunpack.c.l.b16 %v2746
      %v3035 = vunpack.c.l.b16 %v2747
      %v3036 = vunpack.c.l.b16 %v2748
      %v3037 = vunpack.c.l.b16 %v2749
      %v3038 = vunpack.c.l.b16 %v2750
      %v3039 = vunpack.c.l.b16 %v2751
      %v3040 = vunpack.c.l.b16 %v2752
      %v3041 = vunpack.c.l.b16 %v2753
      %v3042 = vunpack.c.l.b16 %v2754
      %v3043 = vunpack.c.l.b16 %v2755
      %v3044 = vunpack.c.l.b16 %v2756
      %v3045 = vunpack.c.l.b16 %v2757
      %v3046 = vunpack.c.l.b16 %v2758
      %v3047 = vunpack.c.l.b16 %v2759
      %v3048 = vunpack.c.l.b16 %v2760
      %v3049 = vunpack.c.l.b16 %v2761
      %v3050 = vunpack.c.l.b16 %v2762
      %v3051 = vunpack.c.l.b16 %v2763
      %v3052 = vunpack.c.l.b16 %v2764
      %v3053 = vunpack.c.l.b16 %v2765
      %v3054 = vunpack.c.l.b16 %v2766
      %v3055 = vunpack.c.l.b16 %v2767
      %v3056 = vunpack.c.l.b16 %v2768
      %v3057 = vunpack.c.l.b16 %v2769
      %v3058 = vunpack.c.l.b16 %v2770
      %v3059 = vunpack.c.l.b16 %v2771
      %v3060 = vunpack.c.l.b16 %v2772
      %v3061 = vunpack.c.l.b16 %v2773
      %v3062 = vunpack.c.l.b16 %v2774
      %v3063 = vunpack.c.l.b16 %v2775
      %v3064 = vunpack.c.l.b16 %v2776
      %v3065 = vunpack.c.l.b16 %v2777
      %v3066 = vunpack.c.l.b16 %v2778
      %v3067 = vunpack.c.l.b16 %v2779
      %v3068 = vunpack.c.l.b16 %v2780
      %v3069 = vunpack.c.l.b16 %v2781
      %v3070 = vunpack.c.l.b16 %v2782
      %v3071 = vunpack.c.l.b16 %v2783
      %v3072 = vunpack.c.l.b16 %v2784
      %v3073 = vunpack.c.l.b16 %v2785
      %v3074 = vunpack.c.l.b16 %v2786
      %v3075 = vunpack.c.l.b16 %v2787
      %v3076 = vunpack.c.l.b16 %v2788
      %v3077 = vunpack.c.l.b16 %v2789
      %v3078 = vunpack.c.l.b16 %v2790
      %v3079 = vunpack.c.l.b16 %v2791
      %v3080 = vunpack.c.l.b16 %v2792
      %v3081 = vunpack.c.l.b16 %v2793
      %v3082 = vunpack.c.l.b16 %v2794
      %v3083 = vunpack.c.l.b16 %v2795
      %v3084 = vunpack.c.l.b16 %v2796
      %v3085 = vunpack.c.l.b16 %v2797
      %v3086 = vunpack.c.l.b16 %v2798
      %v3087 = vpack.c.b16 %v2944, %v2943
      %v3088 = vpack.c.b16 %v2946, %v2945
      %v3089 = vpack.c.b16 %v2948, %v2947
      %v3090 = vpack.c.b16 %v2950, %v2949
      %v3091 = vpack.c.b16 %v2952, %v2951
      %v3092 = vpack.c.b16 %v2954, %v2953
      %v3093 = vpack.c.b16 %v2956, %v2955
      %v3094 = vpack.c.b16 %v2958, %v2957
      %v3095 = vpack.c.b16 %v2960, %v2959
      %v3096 = vpack.c.b16 %v2962, %v2961
      %v3097 = vpack.c.b16 %v2964, %v2963
      %v3098 = vpack.c.b16 %v2966, %v2965
      %v3099 = vpack.c.b16 %v2968, %v2967
      %v3100 = vpack.c.b16 %v2970, %v2969
      %v3101 = vpack.c.b16 %v2972, %v2971
      %v3102 = vpack.c.b16 %v2974, %v2973
      %v3103 = vpack.c.b16 %v2976, %v2975
      %v3104 = vpack.c.b16 %v2978, %v2977
      %v3105 = vpack.c.b16 %v2980, %v2979
      %v3106 = vpack.c.b16 %v2982, %v2981
      %v3107 = vpack.c.b16 %v2984, %v2983
      %v3108 = vpack.c.b16 %v2986, %v2985
      %v3109 = vpack.c.b16 %v2988, %v2987
      %v3110 = vpack.c.b16 %v2990, %v2989
      %v3111 = vpack.c.b16 %v2992, %v2991
      %v3112 = vpack.c.b16 %v2994, %v2993
      %v3113 = vpack.c.b16 %v2996, %v2995
      %v3114 = vpack.c.b16 %v2998, %v2997
      %v3115 = vpack.c.b16 %v3000, %v2999
      %v3116 = vpack.c.b16 %v3002, %v3001
      %v3117 = vpack.c.b16 %v3004, %v3003
      %v3118 = vpack.c.b16 %v3006, %v3005
      %v3119 = vpack.c.b16 %v3008, %v3007
      %v3120 = vpack.c.b16 %v3010, %v3009
      %v3121 = vpack.c.b16 %v3012, %v3011
      %v3122 = vpack.c.b16 %v3014, %v3013
      %v3123 = vpack.c.b16 %v3016, %v3015
      %v3124 = vpack.c.b16 %v3018, %v3017
      %v3125 = vpack.c.b16 %v3020, %v3019
      %v3126 = vpack.c.b16 %v3022, %v3021
      %v3127 = vpack.c.b16 %v3024, %v3023
      %v3128 = vpack.c.b16 %v3026, %v3025
      %v3129 = vpack.c.b16 %v3028, %v3027
      %v3130 = vpack.c.b16 %v3030, %v3029
      %v3131 = vpack.c.b16 %v3032, %v3031
      %v3132 = vpack.c.b16 %v3034, %v3033
      %v3133 = vpack.c.b16 %v3036, %v3035
      %v3134 = vpack.c.b16 %v3038, %v3037
      %v3135 = vpack.c.b16 %v3040, %v3039
      %v3136 = vpack.c.b16 %v3042, %v3041
      %v3137 = vpack.c.b16 %v3044, %v3043
      %v3138 = vpack.c.b16 %v3046, %v3045
      %v3139 = vpack.c.b16 %v3048, %v3047
      %v3140 = vpack.c.b16 %v3050, %v3049
      %v3141 = vpack.c.b16 %v3052, %v3051
      %v3142 = vpack.c.b16 %v3054, %v3053
      %v3143 = vpack.c.b16 %v3056, %v3055
      %v3144 = vpack.c.b16 %v3058, %v3057
      %v3145 = vpack.c.b16 %v3060, %v3059
      %v3146 = vpack.c.b16 %v3062, %v3061
      %v3147 = vpack.c.b16 %v3064, %v3063
      %v3148 = vpack.c.b16 %v3066, %v3065
      %v3149 = vpack.c.b16 %v3068, %v3067
      %v3150 = vpack.c.b16 %v3070, %v3069
      %v3151 = vpack.c.b16 %v3072, %v3071
      %v3152 = vpack.c.b16 %v3074, %v3073
      %v3153 = vpack.c.b16 %v3076, %v3075
      %v3154 = vpack.c.b16 %v3078, %v3077
      %v3155 = vpack.c.b16 %v3080, %v3079
      %v3156 = vpack.c.b16 %v3082, %v3081
      %v3157 = vpack.c.b16 %v3084, %v3083
      %v3158 = vpack.c.b16 %v3086, %v3085
      %3231 = vmatprep.subr.bf16.mxu0 0
      %3232 = vmatpush1.bf16.msra.mxu0 %v3087
      %3233 = vmatprep.subr.bf16.mxu0 0
      %3234 = vmatpush1.bf16.msra.mxu0 %v3088
      %3235 = vmatprep.subr.bf16.mxu0 0
      %3236 = vmatpush1.bf16.msra.mxu0 %v3089
      %3237 = vmatprep.subr.bf16.mxu0 0
      %3238 = vmatpush1.bf16.msra.mxu0 %v3090
      %3239 = vmatprep.subr.bf16.mxu0 0
      %3240 = vmatpush1.bf16.msra.mxu0 %v3091
      %3241 = vmatprep.subr.bf16.mxu0 0
      %3242 = vmatpush1.bf16.msra.mxu0 %v3092
      %3243 = vmatprep.subr.bf16.mxu0 0
      %3244 = vmatpush1.bf16.msra.mxu0 %v3093
      %3245 = vmatprep.subr.bf16.mxu0 0
      %3246 = vmatpush1.bf16.msra.mxu0 %v3094
      %3247 = vmatprep.subr.bf16.mxu0 0
      %3248 = vmatpush1.bf16.msra.mxu0 %v3095
      %3249 = vmatprep.subr.bf16.mxu0 0
      %3250 = vmatpush1.bf16.msra.mxu0 %v3096
      %3251 = vmatprep.subr.bf16.mxu0 0
      %3252 = vmatpush1.bf16.msra.mxu0 %v3097
      %3253 = vmatprep.subr.bf16.mxu0 0
      %3254 = vmatpush1.bf16.msra.mxu0 %v3098
      %3255 = vmatprep.subr.bf16.mxu0 0
      %3256 = vmatpush1.bf16.msra.mxu0 %v3099
      %3257 = vmatprep.subr.bf16.mxu0 0
      %3258 = vmatpush1.bf16.msra.mxu0 %v3100
      %3259 = vmatprep.subr.bf16.mxu0 0
      %3260 = vmatpush1.bf16.msra.mxu0 %v3101
      %3261 = vmatprep.subr.bf16.mxu0 0
      %3262 = vmatpush1.bf16.msra.mxu0 %v3102
      %3263 = vmatprep.mubr.bf16.mxu0 %v2478
      %3264 = vmatmul.mubr.bf16.gmra.mrb[0].mxu0 %v2427
      %v3265 = vpop.f32.mrb[0].mxu0
      %v3266 = vadd.f32 0.0, %v3265
      %v3267 = vpop.f32.mrb[0].mxu0
      %v3268 = vpop.f32.mrb[0].mxu0
      %v3269 = vadd.f32 0.0, %v3268
      %v3270 = vpop.f32.mrb[0].mxu0
      %3271 = vmatprep.mubr.bf16.mxu0 %v2490
      %3272 = vmatmul.mubr.bf16.gmra.mrb[0].mxu0 %v2428
      %v3273 = vpop.f32.mrb[0].mxu0
      %v3274 = vadd.f32 0.0, %v3273
      %v3275 = vpop.f32.mrb[0].mxu0
      %v3276 = vpop.f32.mrb[0].mxu0
      %v3277 = vadd.f32 0.0, %v3276
      %v3278 = vpop.f32.mrb[0].mxu0
      %3279 = vmatprep.mubr.bf16.mxu0 %v2502
      %3280 = vmatmul.mubr.bf16.gmra.mrb[0].mxu0 %v2429
      %v3281 = vpop.f32.mrb[0].mxu0
      %v3282 = vadd.f32 0.0, %v3281
      %v3283 = vpop.f32.mrb[0].mxu0
      %v3284 = vpop.f32.mrb[0].mxu0
      %v3285 = vadd.f32 0.0, %v3284
      %v3286 = vpop.f32.mrb[0].mxu0
      %3287 = vmatprep.mubr.bf16.mxu0 %v2514
      %3288 = vmatmul.mubr.bf16.gmra.mrb[0].mxu0 %v2430
      %v3289 = vpop.f32.mrb[0].mxu0
      %v3290 = vadd.f32 0.0, %v3289
      %v3291 = vpop.f32.mrb[0].mxu0
      %v3292 = vpop.f32.mrb[0].mxu0
      %v3293 = vadd.f32 0.0, %v3292
      %v3294 = vpop.f32.mrb[0].mxu0
      %3295 = vmatprep.mubr.bf16.mxu0 %v2526
      %3296 = vmatmul.mubr.bf16.gmra.mrb[0].mxu0 %v2431
      %v3297 = vpop.f32.mrb[0].mxu0
      %v3298 = vadd.f32 0.0, %v3297
      %v3299 = vpop.f32.mrb[0].mxu0
      %v3300 = vpop.f32.mrb[0].mxu0
      %v3301 = vadd.f32 0.0, %v3300
      %v3302 = vpop.f32.mrb[0].mxu0
      %3303 = vmatprep.mubr.bf16.mxu0 %v2538
      %3304 = vmatmul.mubr.bf16.gmra.mrb[0].mxu0 %v2432
      %v3305 = vpop.f32.mrb[0].mxu0
      %v3306 = vadd.f32 0.0, %v3305
      %v3307 = vpop.f32.mrb[0].mxu0
      %v3308 = vpop.f32.mrb[0].mxu0
      %v3309 = vadd.f32 0.0, %v3308
      %v3310 = vpop.f32.mrb[0].mxu0
      %3311 = vmatprep.mubr.bf16.mxu0 %v2550
      %3312 = vmatmul.mubr.bf16.gmra.mrb[0].mxu0 %v2433
      %v3313 = vpop.f32.mrb[0].mxu0
      %v3314 = vadd.f32 0.0, %v3313
      %v3315 = vpop.f32.mrb[0].mxu0
      %v3316 = vpop.f32.mrb[0].mxu0
      %v3317 = vadd.f32 0.0, %v3316
      %v3318 = vpop.f32.mrb[0].mxu0
      %3319 = vmatprep.mubr.bf16.mxu0 %v2562
      %3320 = vmatmul.mubr.bf16.gmra.mrb[0].mxu0 %v2434
      %v3321 = vpop.f32.mrb[0].mxu0
      %v3322 = vadd.f32 0.0, %v3321
      %v3323 = vpop.f32.mrb[0].mxu0
      %v3324 = vpop.f32.mrb[0].mxu0
      %v3325 = vadd.f32 0.0, %v3324
      %v3326 = vpop.f32.mrb[0].mxu0
      %3327 = vdwg.mxu0
      %3328 = vmatprep.subr.bf16.mxu0 0
      %3329 = vmatpush1.bf16.msra.mxu0 %v3103
      %3330 = vmatprep.subr.bf16.mxu0 0
      %3331 = vmatpush1.bf16.msra.mxu0 %v3104
      %3332 = vmatprep.subr.bf16.mxu0 0
      %3333 = vmatpush1.bf16.msra.mxu0 %v3105
      %3334 = vmatprep.subr.bf16.mxu0 0
      %3335 = vmatpush1.bf16.msra.mxu0 %v3106
      %3336 = vmatprep.subr.bf16.mxu0 0
      %3337 = vmatpush1.bf16.msra.mxu0 %v3107
      %3338 = vmatprep.subr.bf16.mxu0 0
      %3339 = vmatpush1.bf16.msra.mxu0 %v3108
      %3340 = vmatprep.subr.bf16.mxu0 0
      %3341 = vmatpush1.bf16.msra.mxu0 %v3109
      %3342 = vmatprep.subr.bf16.mxu0 0
      %3343 = vmatpush1.bf16.msra.mxu0 %v3110
      %3344 = vmatprep.subr.bf16.mxu0 0
      %3345 = vmatpush1.bf16.msra.mxu0 %v3111
      %3346 = vmatprep.subr.bf16.mxu0 0
      %3347 = vmatpush1.bf16.msra.mxu0 %v3112
      %3348 = vmatprep.subr.bf16.mxu0 0
      %3349 = vmatpush1.bf16.msra.mxu0 %v3113
      %3350 = vmatprep.subr.bf16.mxu0 0
      %3351 = vmatpush1.bf16.msra.mxu0 %v3114
      %3352 = vmatprep.subr.bf16.mxu0 0
      %3353 = vmatpush1.bf16.msra.mxu0 %v3115
      %3354 = vmatprep.subr.bf16.mxu0 0
      %3355 = vmatpush1.bf16.msra.mxu0 %v3116
      %3356 = vmatprep.subr.bf16.mxu0 0
      %3357 = vmatpush1.bf16.msra.mxu0 %v3117
      %3358 = vmatprep.subr.bf16.mxu0 0
      %3359 = vmatpush1.bf16.msra.mxu0 %v3118
      %3360 = vmatprep.mubr.bf16.mxu0 %v2428
      %3361 = vmatmul.mubr.bf16.gmra.mrb[0].mxu0 %v2573
      %v3362 = vpop.f32.mrb[0].mxu0
      %v3363 = vadd.f32 %v3266, %v3362
      %v3364 = vpop.f32.mrb[0].mxu0
      %v3365 = vpop.f32.mrb[0].mxu0
      %v3366 = vadd.f32 %v3269, %v3365
      %v3367 = vpop.f32.mrb[0].mxu0
      %3368 = vmatprep.mubr.bf16.mxu0 %v2429
      %3369 = vmatmul.mubr.bf16.gmra.mrb[0].mxu0 %v2576
      %v3370 = vpop.f32.mrb[0].mxu0
      %v3371 = vadd.f32 %v3274, %v3370
      %v3372 = vpop.f32.mrb[0].mxu0
      %v3373 = vpop.f32.mrb[0].mxu0
      %v3374 = vadd.f32 %v3277, %v3373
      %v3375 = vpop.f32.mrb[0].mxu0
      %3376 = vmatprep.mubr.bf16.mxu0 %v2430
      %3377 = vmatmul.mubr.bf16.gmra.mrb[0].mxu0 %v2579
      %v3378 = vpop.f32.mrb[0].mxu0
      %v3379 = vadd.f32 %v3282, %v3378
      %v3380 = vpop.f32.mrb[0].mxu0
      %v3381 = vpop.f32.mrb[0].mxu0
      %v3382 = vadd.f32 %v3285, %v3381
      %v3383 = vpop.f32.mrb[0].mxu0
      %3384 = vmatprep.mubr.bf16.mxu0 %v2431
      %3385 = vmatmul.mubr.bf16.gmra.mrb[0].mxu0 %v2582
      %v3386 = vpop.f32.mrb[0].mxu0
      %v3387 = vadd.f32 %v3290, %v3386
      %v3388 = vpop.f32.mrb[0].mxu0
      %v3389 = vpop.f32.mrb[0].mxu0
      %v3390 = vadd.f32 %v3293, %v3389
      %v3391 = vpop.f32.mrb[0].mxu0
      %3392 = vmatprep.mubr.bf16.mxu0 %v2432
      %3393 = vmatmul.mubr.bf16.gmra.mrb[0].mxu0 %v2585
      %v3394 = vpop.f32.mrb[0].mxu0
      %v3395 = vadd.f32 %v3298, %v3394
      %v3396 = vpop.f32.mrb[0].mxu0
      %v3397 = vpop.f32.mrb[0].mxu0
      %v3398 = vadd.f32 %v3301, %v3397
      %v3399 = vpop.f32.mrb[0].mxu0
      %3400 = vmatprep.mubr.bf16.mxu0 %v2433
      %3401 = vmatmul.mubr.bf16.gmra.mrb[0].mxu0 %v2588
      %v3402 = vpop.f32.mrb[0].mxu0
      %v3403 = vadd.f32 %v3306, %v3402
      %v3404 = vpop.f32.mrb[0].mxu0
      %v3405 = vpop.f32.mrb[0].mxu0
      %v3406 = vadd.f32 %v3309, %v3405
      %v3407 = vpop.f32.mrb[0].mxu0
      %3408 = vmatprep.mubr.bf16.mxu0 %v2434
      %3409 = vmatmul.mubr.bf16.gmra.mrb[0].mxu0 %v2591
      %v3410 = vpop.f32.mrb[0].mxu0
      %v3411 = vadd.f32 %v3314, %v3410
      %v3412 = vpop.f32.mrb[0].mxu0
      %v3413 = vpop.f32.mrb[0].mxu0
      %v3414 = vadd.f32 %v3317, %v3413
      %v3415 = vpop.f32.mrb[0].mxu0
      %3416 = vmatprep.mubr.bf16.mxu0 %v2607
      %3417 = vmatmul.mubr.bf16.gmra.mrb[0].mxu0 %v2594
      %v3418 = vpop.f32.mrb[0].mxu0
      %v3419 = vadd.f32 %v3322, %v3418
      %v3420 = vpop.f32.mrb[0].mxu0
      %v3421 = vpop.f32.mrb[0].mxu0
      %v3422 = vadd.f32 %v3325, %v3421
      %v3423 = vpop.f32.mrb[0].mxu0
      %3424 = vdwg.mxu0
      %3425 = vmatprep.subr.bf16.mxu0 0
      %3426 = vmatpush1.bf16.msra.mxu0 %v3119
      %3427 = vmatprep.subr.bf16.mxu0 0
      %3428 = vmatpush1.bf16.msra.mxu0 %v3120
      %3429 = vmatprep.subr.bf16.mxu0 0
      %3430 = vmatpush1.bf16.msra.mxu0 %v3121
      %3431 = vmatprep.subr.bf16.mxu0 0
      %3432 = vmatpush1.bf16.msra.mxu0 %v3122
      %3433 = vmatprep.subr.bf16.mxu0 0
      %3434 = vmatpush1.bf16.msra.mxu0 %v3123
      %3435 = vmatprep.subr.bf16.mxu0 0
      %3436 = vmatpush1.bf16.msra.mxu0 %v3124
      %3437 = vmatprep.subr.bf16.mxu0 0
      %3438 = vmatpush1.bf16.msra.mxu0 %v3125
      %3439 = vmatprep.subr.bf16.mxu0 0
      %3440 = vmatpush1.bf16.msra.mxu0 %v3126
      %3441 = vmatprep.subr.bf16.mxu0 0
      %3442 = vmatpush1.bf16.msra.mxu0 %v3127
      %3443 = vmatprep.subr.bf16.mxu0 0
      %3444 = vmatpush1.bf16.msra.mxu0 %v3128
      %3445 = vmatprep.subr.bf16.mxu0 0
      %3446 = vmatpush1.bf16.msra.mxu0 %v3129
      %3447 = vmatprep.subr.bf16.mxu0 0
      %3448 = vmatpush1.bf16.msra.mxu0 %v3130
      %3449 = vmatprep.subr.bf16.mxu0 0
      %3450 = vmatpush1.bf16.msra.mxu0 %v3131
      %3451 = vmatprep.subr.bf16.mxu0 0
      %3452 = vmatpush1.bf16.msra.mxu0 %v3132
      %3453 = vmatprep.subr.bf16.mxu0 0
      %3454 = vmatpush1.bf16.msra.mxu0 %v3133
      %3455 = vmatprep.subr.bf16.mxu0 0
      %3456 = vmatpush1.bf16.msra.mxu0 %v3134
      %3457 = vmatprep.mubr.bf16.mxu0 %v2576
      %3458 = vmatmul.mubr.bf16.gmra.mrb[0].mxu0 %v2490
      %v3459 = vpop.f32.mrb[0].mxu0
      %v3460 = vadd.f32 %v3363, %v3459
      %v3461 = vpop.f32.mrb[0].mxu0
      %v3462 = vpop.f32.mrb[0].mxu0
      %v3463 = vadd.f32 %v3366, %v3462
      %v3464 = vpop.f32.mrb[0].mxu0
      %3465 = vmatprep.mubr.bf16.mxu0 %v2579
      %3466 = vmatmul.mubr.bf16.gmra.mrb[0].mxu0 %v2502
      %v3467 = vpop.f32.mrb[0].mxu0
      %v3468 = vadd.f32 %v3371, %v3467
      %v3469 = vpop.f32.mrb[0].mxu0
      %v3470 = vpop.f32.mrb[0].mxu0
      %v3471 = vadd.f32 %v3374, %v3470
      %v3472 = vpop.f32.mrb[0].mxu0
      %3473 = vmatprep.mubr.bf16.mxu0 %v2582
      %3474 = vmatmul.mubr.bf16.gmra.mrb[0].mxu0 %v2514
      %v3475 = vpop.f32.mrb[0].mxu0
      %v3476 = vadd.f32 %v3379, %v3475
      %v3477 = vpop.f32.mrb[0].mxu0
      %v3478 = vpop.f32.mrb[0].mxu0
      %v3479 = vadd.f32 %v3382, %v3478
      %v3480 = vpop.f32.mrb[0].mxu0
      %3481 = vmatprep.mubr.bf16.mxu0 %v2585
      %3482 = vmatmul.mubr.bf16.gmra.mrb[0].mxu0 %v2526
      %v3483 = vpop.f32.mrb[0].mxu0
      %v3484 = vadd.f32 %v3387, %v3483
      %v3485 = vpop.f32.mrb[0].mxu0
      %v3486 = vpop.f32.mrb[0].mxu0
      %v3487 = vadd.f32 %v3390, %v3486
      %v3488 = vpop.f32.mrb[0].mxu0
      %3489 = vmatprep.mubr.bf16.mxu0 %v2588
      %3490 = vmatmul.mubr.bf16.gmra.mrb[0].mxu0 %v2538
      %v3491 = vpop.f32.mrb[0].mxu0
      %v3492 = vadd.f32 %v3395, %v3491
      %v3493 = vpop.f32.mrb[0].mxu0
      %v3494 = vpop.f32.mrb[0].mxu0
      %v3495 = vadd.f32 %v3398, %v3494
      %v3496 = vpop.f32.mrb[0].mxu0
      %3497 = vmatprep.mubr.bf16.mxu0 %v2591
      %3498 = vmatmul.mubr.bf16.gmra.mrb[0].mxu0 %v2550
      %v3499 = vpop.f32.mrb[0].mxu0
      %v3500 = vadd.f32 %v3403, %v3499
      %v3501 = vpop.f32.mrb[0].mxu0
      %v3502 = vpop.f32.mrb[0].mxu0
      %v3503 = vadd.f32 %v3406, %v3502
      %v3504 = vpop.f32.mrb[0].mxu0
      %3505 = vmatprep.mubr.bf16.mxu0 %v2594
      %3506 = vmatmul.mubr.bf16.gmra.mrb[0].mxu0 %v2562
      %v3507 = vpop.f32.mrb[0].mxu0
      %v3508 = vadd.f32 %v3411, %v3507
      %v3509 = vpop.f32.mrb[0].mxu0
      %v3510 = vpop.f32.mrb[0].mxu0
      %v3511 = vadd.f32 %v3414, %v3510
      %v3512 = vpop.f32.mrb[0].mxu0
      %3513 = vmatprep.mubr.bf16.mxu0 %v2627
      %3514 = vmatmul.mubr.bf16.gmra.mrb[0].mxu0 %v2623
      %v3515 = vpop.f32.mrb[0].mxu0
      %v3516 = vadd.f32 %v3419, %v3515
      %v3517 = vpop.f32.mrb[0].mxu0
      %v3518 = vpop.f32.mrb[0].mxu0
      %v3519 = vadd.f32 %v3422, %v3518
      %v3520 = vpop.f32.mrb[0].mxu0
      %3521 = vdwg.mxu0
      %3522 = vmatprep.subr.bf16.mxu0 0
      %3523 = vmatpush1.bf16.msra.mxu0 %v3135
      %3524 = vmatprep.subr.bf16.mxu0 0
      %3525 = vmatpush1.bf16.msra.mxu0 %v3136
      %3526 = vmatprep.subr.bf16.mxu0 0
      %3527 = vmatpush1.bf16.msra.mxu0 %v3137
      %3528 = vmatprep.subr.bf16.mxu0 0
      %3529 = vmatpush1.bf16.msra.mxu0 %v3138
      %3530 = vmatprep.subr.bf16.mxu0 0
      %3531 = vmatpush1.bf16.msra.mxu0 %v3139
      %3532 = vmatprep.subr.bf16.mxu0 0
      %3533 = vmatpush1.bf16.msra.mxu0 %v3140
      %3534 = vmatprep.subr.bf16.mxu0 0
      %3535 = vmatpush1.bf16.msra.mxu0 %v3141
      %3536 = vmatprep.subr.bf16.mxu0 0
      %3537 = vmatpush1.bf16.msra.mxu0 %v3142
      %3538 = vmatprep.subr.bf16.mxu0 0
      %3539 = vmatpush1.bf16.msra.mxu0 %v3143
      %3540 = vmatprep.subr.bf16.mxu0 0
      %3541 = vmatpush1.bf16.msra.mxu0 %v3144
      %3542 = vmatprep.subr.bf16.mxu0 0
      %3543 = vmatpush1.bf16.msra.mxu0 %v3145
      %3544 = vmatprep.subr.bf16.mxu0 0
      %3545 = vmatpush1.bf16.msra.mxu0 %v3146
      %3546 = vmatprep.subr.bf16.mxu0 0
      %3547 = vmatpush1.bf16.msra.mxu0 %v3147
      %3548 = vmatprep.subr.bf16.mxu0 0
      %3549 = vmatpush1.bf16.msra.mxu0 %v3148
      %3550 = vmatprep.subr.bf16.mxu0 0
      %3551 = vmatpush1.bf16.msra.mxu0 %v3149
      %3552 = vmatprep.subr.bf16.mxu0 0
      %3553 = vmatpush1.bf16.msra.mxu0 %v3150
      %3554 = vmatprep.mubr.bf16.mxu0 %v2502
      %3555 = vmatmul.mubr.bf16.gmra.mrb[0].mxu0 %v2429
      %v3556 = vpop.f32.mrb[0].mxu0
      %v3557 = vadd.f32 %v3460, %v3556
      %v3558 = vpop.f32.mrb[0].mxu0
      %v3559 = vpop.f32.mrb[0].mxu0
      %v3560 = vadd.f32 %v3463, %v3559
      %v3561 = vpop.f32.mrb[0].mxu0
      %3562 = vmatprep.mubr.bf16.mxu0 %v2514
      %3563 = vmatmul.mubr.bf16.gmra.mrb[0].mxu0 %v2430
      %v3564 = vpop.f32.mrb[0].mxu0
      %v3565 = vadd.f32 %v3468, %v3564
      %v3566 = vpop.f32.mrb[0].mxu0
      %v3567 = vpop.f32.mrb[0].mxu0
      %v3568 = vadd.f32 %v3471, %v3567
      %v3569 = vpop.f32.mrb[0].mxu0
      %3570 = vmatprep.mubr.bf16.mxu0 %v2526
      %3571 = vmatmul.mubr.bf16.gmra.mrb[0].mxu0 %v2431
      %v3572 = vpop.f32.mrb[0].mxu0
      %v3573 = vadd.f32 %v3476, %v3572
      %v3574 = vpop.f32.mrb[0].mxu0
      %v3575 = vpop.f32.mrb[0].mxu0
      %v3576 = vadd.f32 %v3479, %v3575
      %v3577 = vpop.f32.mrb[0].mxu0
      %3578 = vmatprep.mubr.bf16.mxu0 %v2538
      %3579 = vmatmul.mubr.bf16.gmra.mrb[0].mxu0 %v2432
      %v3580 = vpop.f32.mrb[0].mxu0
      %v3581 = vadd.f32 %v3484, %v3580
      %v3582 = vpop.f32.mrb[0].mxu0
      %v3583 = vpop.f32.mrb[0].mxu0
      %v3584 = vadd.f32 %v3487, %v3583
      %v3585 = vpop.f32.mrb[0].mxu0
      %3586 = vmatprep.mubr.bf16.mxu0 %v2550
      %3587 = vmatmul.mubr.bf16.gmra.mrb[0].mxu0 %v2433
      %v3588 = vpop.f32.mrb[0].mxu0
      %v3589 = vadd.f32 %v3492, %v3588
      %v3590 = vpop.f32.mrb[0].mxu0
      %v3591 = vpop.f32.mrb[0].mxu0
      %v3592 = vadd.f32 %v3495, %v3591
      %v3593 = vpop.f32.mrb[0].mxu0
      %3594 = vmatprep.mubr.bf16.mxu0 %v2562
      %3595 = vmatmul.mubr.bf16.gmra.mrb[0].mxu0 %v2434
      %v3596 = vpop.f32.mrb[0].mxu0
      %v3597 = vadd.f32 %v3500, %v3596
      %v3598 = vpop.f32.mrb[0].mxu0
      %v3599 = vpop.f32.mrb[0].mxu0
      %v3600 = vadd.f32 %v3503, %v3599
      %v3601 = vpop.f32.mrb[0].mxu0
      %3602 = vmatprep.mubr.bf16.mxu0 %v2623
      %3603 = vmatmul.mubr.bf16.gmra.mrb[0].mxu0 %v2607
      %v3604 = vpop.f32.mrb[0].mxu0
      %v3605 = vadd.f32 %v3508, %v3604
      %v3606 = vpop.f32.mrb[0].mxu0
      %v3607 = vpop.f32.mrb[0].mxu0
      %v3608 = vadd.f32 %v3511, %v3607
      %v3609 = vpop.f32.mrb[0].mxu0
      %3610 = vmatprep.mubr.bf16.mxu0 %v2649
      %3611 = vmatmul.mubr.bf16.gmra.mrb[0].mxu0 %v2633
      %v3612 = vpop.f32.mrb[0].mxu0
      %v3613 = vadd.f32 %v3516, %v3612
      %v3614 = vpop.f32.mrb[0].mxu0
      %v3615 = vpop.f32.mrb[0].mxu0
      %v3616 = vadd.f32 %v3519, %v3615
      %v3617 = vpop.f32.mrb[0].mxu0
      %3618 = vdwg.mxu0
      %3619 = vmatprep.subr.bf16.mxu0 0
      %3620 = vmatpush1.bf16.msra.mxu0 %v3151
      %3621 = vmatprep.subr.bf16.mxu0 0
      %3622 = vmatpush1.bf16.msra.mxu0 %v3152
      %3623 = vmatprep.subr.bf16.mxu0 0
      %3624 = vmatpush1.bf16.msra.mxu0 %v3153
      %3625 = vmatprep.subr.bf16.mxu0 0
      %3626 = vmatpush1.bf16.msra.mxu0 %v3154
      %3627 = vmatprep.subr.bf16.mxu0 0
      %3628 = vmatpush1.bf16.msra.mxu0 %v3155
      %3629 = vmatprep.subr.bf16.mxu0 0
      %3630 = vmatpush1.bf16.msra.mxu0 %v3156
      %3631 = vmatprep.subr.bf16.mxu0 0
      %3632 = vmatpush1.bf16.msra.mxu0 %v3157
      %3633 = vmatprep.subr.bf16.mxu0 0
      %3634 = vmatpush1.bf16.msra.mxu0 %v3158
      %3635 = vmatprep.subr.bf16.mxu0 0
      %3636 = vmatpush1.bf16.msra.mxu0 0
      %3637 = vmatprep.subr.bf16.mxu0 0
      %3638 = vmatpush1.bf16.msra.mxu0 0
      %3639 = vmatprep.subr.bf16.mxu0 0
      %3640 = vmatpush1.bf16.msra.mxu0 0
      %3641 = vmatprep.subr.bf16.mxu0 0
      %3642 = vmatpush1.bf16.msra.mxu0 0
      %3643 = vmatprep.subr.bf16.mxu0 0
      %3644 = vmatpush1.bf16.msra.mxu0 0
      %3645 = vmatprep.subr.bf16.mxu0 0
      %3646 = vmatpush1.bf16.msra.mxu0 0
      %3647 = vmatprep.subr.bf16.mxu0 0
      %3648 = vmatpush1.bf16.msra.mxu0 0
      %3649 = vmatprep.subr.bf16.mxu0 0
      %3650 = vmatpush1.bf16.msra.mxu0 0
      %3651 = vmatprep.mubr.bf16.mxu0 0
      %3652 = vmatmul.mubr.bf16.gmra.mrb[0].mxu0 %v2579
      %v3653 = vpop.f32.mrb[0].mxu0
      %v3654 = vadd.f32 %v3557, %v3653
      %v3655 = vpop.f32.mrb[0].mxu0
      %v3656 = vpop.f32.mrb[0].mxu0
      %v3657 = vadd.f32 %v3560, %v3656
      %v3658 = vpop.f32.mrb[0].mxu0
      %3659 = vmatprep.mubr.bf16.mxu0 0
      %3660 = vmatmul.mubr.bf16.gmra.mrb[0].mxu0 %v2582
      %v3661 = vpop.f32.mrb[0].mxu0
      %v3662 = vadd.f32 %v3565, %v3661
      %v3663 = vpop.f32.mrb[0].mxu0
      %v3664 = vpop.f32.mrb[0].mxu0
      %v3665 = vadd.f32 %v3568, %v3664
      %v3666 = vpop.f32.mrb[0].mxu0
      %3667 = vmatprep.mubr.bf16.mxu0 0
      %3668 = vmatmul.mubr.bf16.gmra.mrb[0].mxu0 %v2585
      %v3669 = vpop.f32.mrb[0].mxu0
      %v3670 = vadd.f32 %v3573, %v3669
      %v3671 = vpop.f32.mrb[0].mxu0
      %v3672 = vpop.f32.mrb[0].mxu0
      %v3673 = vadd.f32 %v3576, %v3672
      %v3674 = vpop.f32.mrb[0].mxu0
      %3675 = vmatprep.mubr.bf16.mxu0 0
      %3676 = vmatmul.mubr.bf16.gmra.mrb[0].mxu0 %v2588
      %v3677 = vpop.f32.mrb[0].mxu0
      %v3678 = vadd.f32 %v3581, %v3677
      %v3679 = vpop.f32.mrb[0].mxu0
      %v3680 = vpop.f32.mrb[0].mxu0
      %v3681 = vadd.f32 %v3584, %v3680
      %v3682 = vpop.f32.mrb[0].mxu0
      %3683 = vmatprep.mubr.bf16.mxu0 0
      %3684 = vmatmul.mubr.bf16.gmra.mrb[0].mxu0 %v2591
      %v3685 = vpop.f32.mrb[0].mxu0
      %v3686 = vadd.f32 %v3589, %v3685
      %v3687 = vpop.f32.mrb[0].mxu0
      %v3688 = vpop.f32.mrb[0].mxu0
      %v3689 = vadd.f32 %v3592, %v3688
      %v3690 = vpop.f32.mrb[0].mxu0
      %3691 = vmatprep.mubr.bf16.mxu0 0
      %3692 = vmatmul.mubr.bf16.gmra.mrb[0].mxu0 %v2594
      %v3693 = vpop.f32.mrb[0].mxu0
      %v3694 = vadd.f32 %v3597, %v3693
      %v3695 = vpop.f32.mrb[0].mxu0
      %v3696 = vpop.f32.mrb[0].mxu0
      %v3697 = vadd.f32 %v3600, %v3696
      %v3698 = vpop.f32.mrb[0].mxu0
      %3699 = vmatprep.mubr.bf16.mxu0 0
      %3700 = vmatmul.mubr.bf16.gmra.mrb[0].mxu0 %v2627
      %v3701 = vpop.f32.mrb[0].mxu0
      %v3702 = vadd.f32 %v3605, %v3701
      %v3703 = vpop.f32.mrb[0].mxu0
      %v3704 = vpop.f32.mrb[0].mxu0
      %v3705 = vadd.f32 %v3608, %v3704
      %v3706 = vpop.f32.mrb[0].mxu0
      %3707 = vmatprep.mubr.bf16.mxu0 0
      %3708 = vmatmul.mubr.bf16.gmra.mrb[0].mxu0 %v2653
      %v3709 = vpop.f32.mrb[0].mxu0
      %v3710 = vadd.f32 %v3613, %v3709
      %v3711 = vpop.f32.mrb[0].mxu0
      %v3712 = vpop.f32.mrb[0].mxu0
      %v3713 = vadd.f32 %v3616, %v3712
      %v3714 = vpop.f32.mrb[0].mxu0
      %3715 = vdwg.mxu0
      %v3716 = vld [vmem:[%s5] sm:$0x1]
      %v3718 = vlaneseq
      %v3719 = vshrl.u32 %v3718, 7
      %v3720 = vsub.s32 0, %v3719
      %v3721 = vrot.slane %v3716, %v3720
      %v3723 = vmul.f32 %v3654, %v3721
      %v3724 = vmul.f32 %v3657, %v3721
      %v3725 = vmul.f32 %v3662, %v3721
      %v3726 = vmul.f32 %v3665, %v3721
      %v3727 = vmul.f32 %v3670, %v3721
      %v3728 = vmul.f32 %v3673, %v3721
      %v3729 = vmul.f32 %v3678, %v3721
      %v3730 = vmul.f32 %v3681, %v3721
      %v3731 = vmul.f32 %v3686, %v3721
      %v3732 = vmul.f32 %v3689, %v3721
      %v3733 = vmul.f32 %v3694, %v3721
      %v3734 = vmul.f32 %v3697, %v3721
      %v3735 = vmul.f32 %v3702, %v3721
      %v3736 = vmul.f32 %v3705, %v3721
      %v3737 = vmul.f32 %v3710, %v3721
      %v3738 = vmul.f32 %v3713, %v3721
      %v3739 = vld [vmem:[%s6] sm:$0x1]
      %v3741 = vlaneseq
      %v3742 = vshrl.u32 %v3741, 7
      %v3743 = vsub.s32 0, %v3742
      %v3744 = vrot.slane %v3739, %v3743
      %v3746 = vadd.f32 %v3723, %v3744
      %v3747 = vadd.f32 %v3724, %v3744
      %v3748 = vadd.f32 %v3725, %v3744
      %v3749 = vadd.f32 %v3726, %v3744
      %v3750 = vadd.f32 %v3727, %v3744
      %v3751 = vadd.f32 %v3728, %v3744
      %v3752 = vadd.f32 %v3729, %v3744
      %v3753 = vadd.f32 %v3730, %v3744
      %v3754 = vadd.f32 %v3731, %v3744
      %v3755 = vadd.f32 %v3732, %v3744
      %v3756 = vadd.f32 %v3733, %v3744
      %v3757 = vadd.f32 %v3734, %v3744
      %v3758 = vadd.f32 %v3735, %v3744
      %v3759 = vadd.f32 %v3736, %v3744
      %v3760 = vadd.f32 %v3737, %v3744
      %v3761 = vadd.f32 %v3738, %v3744
      %v3762 = vmax.f32 %v3746, 0.0
      %v3763 = vmax.f32 %v3747, 0.0
      %v3764 = vmax.f32 %v3748, 0.0
      %v3765 = vmax.f32 %v3749, 0.0
      %v3766 = vmax.f32 %v3750, 0.0
      %v3767 = vmax.f32 %v3751, 0.0
      %v3768 = vmax.f32 %v3752, 0.0
      %v3769 = vmax.f32 %v3753, 0.0
      %v3770 = vmax.f32 %v3754, 0.0
      %v3771 = vmax.f32 %v3755, 0.0
      %v3772 = vmax.f32 %v3756, 0.0
      %v3773 = vmax.f32 %v3757, 0.0
      %v3774 = vmax.f32 %v3758, 0.0
      %v3775 = vmax.f32 %v3759, 0.0
      %v3776 = vmax.f32 %v3760, 0.0
      %v3777 = vmax.f32 %v3761, 0.0
      %3778 = vst [vmem:[%s316] sm:$0xff] %v3762
      %3779 = vst [vmem:[%s316 + $0x8] sm:$0xff] %v3763
      %3780 = vst [vmem:[%s316 + $0x10] sm:$0xff] %v3764
      %3781 = vst [vmem:[%s316 + $0x18] sm:$0xff] %v3765
      %3782 = vst [vmem:[%s316 + $0x20] sm:$0xff] %v3766
      %3783 = vst [vmem:[%s316 + $0x28] sm:$0xff] %v3767
      %3784 = vst [vmem:[%s316 + $0x30] sm:$0xff] %v3768
      %3785 = vst [vmem:[%s316 + $0x38] sm:$0xff] %v3769
      %3786 = vst [vmem:[%s316 + $0x40] sm:$0xff] %v3770
      %3787 = vst [vmem:[%s316 + $0x48] sm:$0xff] %v3771
      %3788 = vst [vmem:[%s316 + $0x50] sm:$0xff] %v3772
      %3789 = vst [vmem:[%s316 + $0x58] sm:$0xff] %v3773
      %3790 = vst [vmem:[%s316 + $0x60] sm:$0xff] %v3774
      %3791 = vst [vmem:[%s316 + $0x68] sm:$0xff] %v3775
      %3792 = vst [vmem:[%s316 + $0x70] sm:$0xff] %v3776
      %3793 = vst [vmem:[%s316 + $0x78] sm:$0xff] %v3777
      %s3794 = smul.u32 8, %s23
      %p3795 = scmp.lt.s32.totalorder %s22, 1
      %s3796 = scalar_select %p3795, %s22, 1
      %p3797 = scmp.lt.s32.totalorder %s3794, 15
      %s3798 = scalar_select %p3797, %s3794, 15
      %s3799 = smul.addr %s3798, 2
      %s3800 = smul.addr %s3796, 32
      %s3801 = sadd.s32 %s3799, %s3800
      %s3802 = smul.addr %s3801, 8
      %s3803 = scalar_lea.vmem %s7, %s3802
      // Predicated region
      $region49: #{double_conv.1} parent=47 // pred_check
        %p3804 = pneg %p206
      $region50: #{double_conv.1} parent=47 // pred_check_branch
        %3806 = sbr.rel (%p3804) target = $region52
      $region51: #{double_conv.1} parent=47 // pred_region
        %s3807 = smul.u32 8, %s23
      $region52: #{double_conv.1} parent=47 // pred_fallthru
        _
    $region48: #{double_conv.1} parent=5 // pred_fallthru
      _
    %p3808 = scmp.le.s32.totalorder 2, %s13
    // Predicated region
    $region53: #{double_conv.1} parent=5 // pred_check
      %p3809 = pneg %p3808
    $region54: #{double_conv.1} parent=5 // pred_check_branch
      %3811 = sbr.rel (%p3809) target = $region56
    $region55: #{double_conv.1} parent=5 // pred_region
      %s3812 = ssub.s32 %s13, 2
      // Predicated region
      $region57: #{double_conv.1} parent=55 // pred_check
        %p3813 = pneg %p212
      $region58: #{double_conv.1} parent=55 // pred_check_branch
        %3815 = sbr.rel (%p3813) target = $region60
      $region59: #{double_conv.1} parent=55 // pred_region
        %s3816 = smul.u32 8, %s25
        %p3817 = scmp.lt.s32.totalorder %s24, 1
        %s3818 = scalar_select %p3817, %s24, 1
        %p3819 = scmp.lt.s32.totalorder %s3816, 15
        %s3820 = scalar_select %p3819, %s3816, 15
        %s3821 = smul.addr %s3820, 2
        %s3822 = smul.addr %s3818, 32
        %s3823 = sadd.s32 %s3821, %s3822
        %s3824 = smul.addr %s3823, 8
        %s3825 = scalar_lea.vmem %s7, %s3824
      $region60: #{double_conv.1} parent=55 // pred_fallthru
        _
    $region56: #{double_conv.1} parent=5 // pred_fallthru
      _
  $region6: #{double_conv.1} parent=0 // loop_footer
    %s17 = sadd.s32 1, %s13
  $region7: #{double_conv.1} parent=0 // loop_footer_branch
    %12 = sbr.rel target = $region3
  $region8: #{double_conv.1} parent=0 // loop_exit
    _

</llo_original>
